<compile_context>
chip_gen: v7x
topology: tpu7x:2x2x1
jax: 0.10.0
libtpu: 0.0.40
codegen_flags: <defaults>
</compile_context>

<pallas_src>
import functools

import jax
import jax.numpy as jnp
from jax import lax
from jax.experimental import pallas as pl
from jax.experimental.pallas import tpu as pltpu

B_TILE = 8      # f32 sublane count: batch tile fills all 8 sublanes of every vreg
LANES = 128


def _round_up(x, m):
    return (x + m - 1) // m * m


# --------------------------------------------------------------------------- kernel
def _kws_fused_kernel(*refs, num_cortex, t_out, n0, offsets, b_tile,
                      neg_slope, eps, threshold, mxu_dtype):
    """Whole KWSEncoder forward for one batch tile (grid axis = batch tiles)."""
    f32 = jnp.float32
    Bt = b_tile
    rows = t_out * Bt

    it = iter(refs)
    patches_ref = next(it)                       # (1, rows, Kp)         f32
    wconv_ref = next(it)                         # (Kp, n0)              f32
    bconv_ref = next(it)                         # (1, n0)
    ln_g_ref = next(it)                          # (1, n0)
    ln_b_ref = next(it)                          # (1, n0)
    aud_al_ref = next(it); aud_be_ref = next(it)
    aud_a_ref = next(it); aud_b_ref = next(it)
    cortex_refs = [tuple(next(it) for _ in range(7)) for _ in range(num_cortex)]
    wr_ref = next(it)                            # (n_last, Hp)          mxu_dtype
    shiftr_ref = next(it)                        # (1, Hp)
    coef_ref = next(it)                          # (t_out, Hp)
    out_ref = next(it)                           # (Bt, Hp)              f32
    spike_ref = next(it)                         # (1, rows, PACK)       f32

    # Zero the packed spike buffer once (covers unused pad lanes; every real lane is
    # overwritten below with a per-time-step (Bt, n) store).
    spike_ref[...] = jnp.zeros_like(spike_ref)

    # ---- conv front-end: one MXU pass over all rows (im2col done in wrapper) ------
    patches = patches_ref[0]                                          # (rows, Kp)
    y = jnp.dot(patches, wconv_ref[...], preferred_element_type=f32) + bconv_ref[...]
    # LayerNorm over merged (f_out*C) features == nn.LayerNorm([f_out, C]) per step.
    mean = jnp.mean(y, axis=1, keepdims=True)
    var = jnp.mean((y - mean) ** 2, axis=1, keepdims=True)
    y = (y - mean) * lax.rsqrt(var + eps)
    y = y * ln_g_ref[...] + ln_b_ref[...]
    y = jnp.where(y > 0, y, neg_slope * y)                            # LeakyReLU(0.01)

    def recurrence(cur_all, al, be, a_p, b_p, V, n, lane_off):
        """sparch-style AdLIF/LIF recurrence, state (Bt, n).  Spikes are written
        straight into the packed output ref, one (Bt, n) store per time step."""
        u = jnp.zeros((Bt, n), f32)
        w = jnp.zeros((Bt, n), f32)
        s = jnp.zeros((Bt, n), f32)
        for t in range(t_out):                       # static, fully unrolled (t_out small)
            cur = cur_all[t * Bt:(t + 1) * Bt, :]
            if V is not None:
                cur = cur + jnp.dot(s.astype(mxu_dtype), V, preferred_element_type=f32)
            w = be * w + a_p * u + b_p * s
            u = al * (u - threshold * s) + (1.0 - al) * (cur - w)
            s = (u > threshold).astype(f32)
            spike_ref[0, t * Bt:(t + 1) * Bt, lane_off:lane_off + n] = s

    # ---- auditory SNN (no feedforward projection, rnn_portion = 0) ----------------
    recurrence(y, aud_al_ref[...], aud_be_ref[...], aud_a_ref[...], aud_b_ref[...],
               None, n0, offsets[0])

    # ---- cortical layers: hoisted spikes@W (M = rows), serial s@V recurrence ------
    prev_off, prev_n = offsets[0], n0
    for li in range(num_cortex):
        W_ref, shift_ref, V_ref, al_ref, be_ref, a_ref, b_ref = cortex_refs[li]
        n = W_ref.shape[1]
        prev = spike_ref[0, :, prev_off:prev_off + prev_n].astype(mxu_dtype)   # (rows, prev_n)
        cur_all = jnp.dot(prev, W_ref[...], preferred_element_type=f32) + shift_ref[...]
        recurrence(cur_all, al_ref[...], be_ref[...], a_ref[...], b_ref[...],
                   V_ref[...], n, offsets[1 + li])
        prev_off, prev_n = offsets[1 + li], n

    # ---- readout: hoisted matmul + exact closed-form leaky integration + time mean
    # TODO(synk): exact ReadoutLayer temporal reduction unknown without its source;
    #             using the time-mean of the leaky-integrated membrane potential.
    prev = spike_ref[0, :, prev_off:prev_off + prev_n].astype(mxu_dtype)        # (rows, n_last)
    cur_r = jnp.dot(prev, wr_ref[...], preferred_element_type=f32) + shiftr_ref[...]
    coef = coef_ref[...]                           # (t_out, Hp): 1 - alpha^(t_out - t)
    acc = jnp.zeros((Bt, wr_ref.shape[1]), f32)
    for t in range(t_out):
        acc = acc + coef[t:t + 1, :] * cur_r[t * Bt:(t + 1) * Bt, :]
    out_ref[...] = acc * (1.0 / t_out)


# --------------------------------------------------------------------------- wrapper
def kws_encoder_forward(feats, params, cfg):
    B, T, F = feats.shape
    kt, kf = cfg['kernel']
    assert cfg['stride'] == 1, "demo uses default auditory_frequency_stride=1"
    C = cfg['channels']
    t_out = T + kt + 1                            # Conv2d(padding=(kt,0), stride 1) time length
    f_out = (F - kf) // cfg['stride'] + 1
    n0 = C * f_out
    K = kt * kf * f_out
    Kp = params['w_conv'].shape[0]
    assert Kp == _round_up(K, LANES)
    Hp = params['readout']['W'].shape[1]
    H = cfg['readout_features']
    cortex_sizes = [int(l['W'].shape[1]) for l in params['cortex']]
    sizes = [n0] + cortex_sizes
    offsets = [0]
    for n in sizes[:-1]:
        offsets.append(offsets[-1] + n)
    pack = _round_up(offsets[-1] + sizes[-1], LANES)

    # -- pad batch to a multiple of B_TILE (sublane-dense recurrence state) ---------
    Bp = _round_up(B, B_TILE)
    if Bp != B:
        feats = jnp.pad(feats, ((0, Bp - B), (0, 0), (0, 0)))
    num_tiles = Bp // B_TILE
    rows = t_out * B_TILE

    # -- im2col in the wrapper, lane-dense (K padded to 128), row = t*B_TILE + b ----
    xpad = jnp.pad(feats, ((0, 0), (kt, kt), (0, 0)))          # Conv2d time zero-pad
    cols = [xpad[:, i:i + t_out, j:j + f_out] for i in range(kt) for j in range(kf)]
    patches = jnp.concatenate(cols, axis=2)                    # (Bp, t_out, K)
    if Kp != K:
        patches = jnp.pad(patches, ((0, 0), (0, 0), (0, Kp - K)))
    patches = patches.reshape(num_tiles, B_TILE, t_out, Kp)
    patches = jnp.transpose(patches, (0, 2, 1, 3)).reshape(num_tiles, rows, Kp)

    # -- readout closed-form coefficients: acc = sum_t (1 - alpha^(t_out-t)) * cur_t
    alpha_r = params['readout']['alpha']                        # (1, Hp)
    powers = jnp.arange(t_out, 0, -1, dtype=jnp.float32).reshape(t_out, 1)
    coef = 1.0 - alpha_r ** powers                              # (t_out, Hp)

    def _rep(arr):   # weights stay resident: same block for every grid step
        nd = arr.ndim
        return pl.BlockSpec(arr.shape, lambda b, _nd=nd: (0,) * _nd)

    inputs = [patches, params['w_conv'], params['b_conv'], params['ln_g'],
              params['ln_b'], *params['aud']]
    in_specs = [pl.BlockSpec((1, rows, Kp), lambda i: (i, 0, 0))]
    in_specs += [_rep(a) for a in inputs[1:]]
    for layer in params['cortex']:
        layer_inputs = [layer['W'], layer['shift'], layer['V'],
                        layer['alpha'], layer['beta'], layer['a'], layer['b']]
        inputs += layer_inputs
        in_specs += [_rep(a) for a in layer_inputs]
    ro_inputs = [params['readout']['W'], params['readout']['shift'], coef]
    inputs += ro_inputs
    in_specs += [_rep(a) for a in ro_inputs]

    out_shape = (jax.ShapeDtypeStruct((Bp, Hp), jnp.float32),
                 jax.ShapeDtypeStruct((num_tiles, rows, pack), jnp.float32))
    out_specs = (pl.BlockSpec((B_TILE, Hp), lambda i: (i, 0)),
                 pl.BlockSpec((1, rows, pack), lambda i: (i, 0, 0)))

    kernel = functools.partial(
        _kws_fused_kernel, num_cortex=len(params['cortex']), t_out=t_out, n0=n0,
        offsets=tuple(offsets), b_tile=B_TILE, neg_slope=0.01, eps=1e-5,
        threshold=cfg['threshold'], mxu_dtype=cfg.get('matmul_dtype', jnp.bfloat16))

    out_p, spikes_p = pl.pallas_call(
        kernel,
        out_shape=out_shape,
        grid=(num_tiles,),
        in_specs=in_specs,
        out_specs=out_specs,
        compiler_params=pltpu.CompilerParams(dimension_semantics=("parallel",)),
    )(*inputs)

    out = out_p[:B, :H]
    spikes = spikes_p.reshape(num_tiles, t_out, B_TILE, pack)
    spikes = jnp.transpose(spikes, (0, 2, 1, 3)).reshape(Bp, t_out, pack)
    all_spikes = [spikes[:B, :, off:off + n] for off, n in zip(offsets, sizes)]
    return out, all_spikes


# --------------------------------------------------------------------------- params
def init_params(key, cfg):
    """Kernel-ready parameters: all constant folding / padding is done ONCE here."""
    ks = jax.random.split(key, 20)
    kt, kf = cfg['kernel']
    C = cfg['channels']
    F = cfg['num_mel_bins']
    f_out = (F - kf) // cfg['stride'] + 1
    n0 = C * f_out
    K = kt * kf * f_out
    Kp = _round_up(K, LANES)
    H = cfg['readout_features']
    Hp = _round_up(H, LANES)
    bn_eps = 1e-5
    mxu_dtype = cfg.get('matmul_dtype', jnp.bfloat16)

    def neuron_params(k, n, sfa_portion):
        k1, k2, k3, k4, k5 = jax.random.split(k, 5)
        tauu = jax.random.uniform(k1, (1, n), minval=cfg['tauu_lim'][0], maxval=cfg['tauu_lim'][1])
        tauw = jax.random.uniform(k2, (1, n), minval=cfg['tauw_lim'][0], maxval=cfg['tauw_lim'][1])
        a = jax.random.uniform(k3, (1, n), minval=cfg['a_lim'][0], maxval=cfg['a_lim'][1])
        b = jax.random.uniform(k4, (1, n), minval=cfg['b_lim'][0], maxval=cfg['b_lim'][1])
        sfa = (jax.random.uniform(k5, (1, n)) < sfa_portion).astype(jnp.float32)
        alpha = jnp.exp(-cfg['dt'] / tauu)
        beta = jnp.exp(-cfg['dt'] / tauw)
        return alpha, beta, a * sfa, b * sfa      # non-SFA neurons reduce to plain LIF

    p = {}
    # Conv2d weights folded into the merged (f_out*C) layout (idx f*C + c) and padded
    # with zero rows to a 128-lane-aligned contraction dim.
    conv_w = jax.random.normal(ks[0], (kt * kf, C), jnp.float32) / jnp.sqrt(kt * kf)
    conv_b = 0.01 * jax.random.normal(ks[1], (1, C), jnp.float32)
    eye = jnp.eye(f_out, dtype=jnp.float32)
    w_big = (conv_w[:, None, None, :] * eye[None, :, :, None]).reshape(K, n0)
    p['w_conv'] = jnp.pad(w_big, ((0, Kp - K), (0, 0)))          # (Kp, n0) f32
    p['b_conv'] = jnp.tile(conv_b, (1, f_out))                   # (1, n0), idx f*C+c -> b[c]
    p['ln_g'] = jnp.ones((1, n0), jnp.float32)
    p['ln_b'] = jnp.zeros((1, n0), jnp.float32)
    p['aud'] = neuron_params(ks[2], n0, cfg['auditory_sfa_portion'])

    layers = []
    n_in = n0
    for li, n in enumerate(cfg['cortex_layer_sizes']):
        kk = jax.random.split(ks[3 + li], 6)
        W = jax.random.normal(kk[0], (n_in, n), jnp.float32) / jnp.sqrt(n_in)
        ff_mask = (jax.random.uniform(kk[1], (n_in, n)) < cfg['ff_portions'][li]).astype(jnp.float32)
        W = W * ff_mask
        bias = 0.01 * jax.random.normal(kk[2], (1, n), jnp.float32)
        bn_scale = jnp.ones((1, n), jnp.float32) / jnp.sqrt(1.0 + bn_eps)   # eval-mode BN fold
        V = jax.random.normal(kk[3], (n, n), jnp.float32) / jnp.sqrt(n)
        rnn_mask = (jax.random.uniform(kk[4], (n, n)) < cfg['rnn_portions'][li]).astype(jnp.float32)
        V = V * rnn_mask
        alpha, beta, a, b = neuron_params(kk[5], n, cfg['sfa_portions'][li])
        layers.append(dict(W=(W * bn_scale).astype(mxu_dtype), shift=bias * bn_scale,
                           V=V.astype(mxu_dtype), alpha=alpha, beta=beta, a=a, b=b))
        n_in = n
    p['cortex'] = layers

    kr = jax.random.split(ks[10], 3)
    Wr = jax.random.normal(kr[0], (n_in, H), jnp.float32) / jnp.sqrt(n_in)
    br = 0.01 * jax.random.normal(kr[1], (1, H), jnp.float32)
    bn_scale = jnp.ones((1, H), jnp.float32) / jnp.sqrt(1.0 + bn_eps)
    taur = jax.random.uniform(kr[2], (1, H), minval=cfg['tauu_lim'][0], maxval=cfg['tauu_lim'][1])
    # Readout weights / shift / alpha zero- (resp. one-)padded to 128 lanes so the
    # kernel's readout store is a full unmasked (8, 128) store.
    p['readout'] = dict(
        W=jnp.pad(Wr * bn_scale, ((0, 0), (0, Hp - H))).astype(mxu_dtype),
        shift=jnp.pad(br * bn_scale, ((0, 0), (0, Hp - H))),
        alpha=jnp.pad(jnp.exp(-cfg['dt'] / taur), ((0, 0), (0, Hp - H)), constant_values=1.0))
    return p


# --------------------------------------------------------------------------- main
if __name__ == "__main__":
    cfg = dict(
        num_mel_bins=16,
        channels=4,
        kernel=(3, 3),
        stride=1,
        auditory_sfa_portion=0.0,
        cortex_layer_sizes=[32, 32],
        ff_portions=[1.0, 1.0],
        rnn_portions=[0.5, 0.5],
        sfa_portions=[0.5, 0.5],
        readout_features=32,
        threshold=1.0,
        dt=1.0,
        tauu_lim=[3.0, 25.0],
        tauw_lim=[30.0, 350.0],
        a_lim=[-0.5, 5.0],
        b_lim=[0.0, 2.0],
        # Spike-path MXU dtype (spikes are exactly 0/1 in bf16); use jnp.float32 for
        # bit-closer parity with the f32 PyTorch reference.
        matmul_dtype=jnp.bfloat16,
    )
    key = jax.random.PRNGKey(0)
    kx, kp = jax.random.split(key)
    # (B, T, num_mel_bins); B = 16 -> two parallel batch-tile grid steps (one per TC on v7x)
    feats = jax.random.normal(kx, (16, 8, cfg['num_mel_bins']), jnp.float32)
    params = init_params(kp, cfg)

    fwd = jax.jit(lambda f, p: kws_encoder_forward(f, p, cfg))
    out, all_spikes = fwd(feats, params)
    jax.block_until_ready(out)
    for s in all_spikes:
        jax.block_until_ready(s)
    print("KERNEL_OK")
</pallas_src>

<mosaic_0001>
module attributes {stable_mosaic.version = 11 : i64} {
  func.func @_kws_fused_kernel(%arg0: i32, %arg1: memref<1x96x128xf32, #tpu.memory_space<vmem>>, %arg2: memref<128x56xf32, #tpu.memory_space<vmem>>, %arg3: memref<1x56xf32, #tpu.memory_space<vmem>>, %arg4: memref<1x56xf32, #tpu.memory_space<vmem>>, %arg5: memref<1x56xf32, #tpu.memory_space<vmem>>, %arg6: memref<1x56xf32, #tpu.memory_space<vmem>>, %arg7: memref<1x56xf32, #tpu.memory_space<vmem>>, %arg8: memref<1x56xf32, #tpu.memory_space<vmem>>, %arg9: memref<1x56xf32, #tpu.memory_space<vmem>>, %arg10: memref<56x32xbf16, #tpu.memory_space<vmem>>, %arg11: memref<1x32xf32, #tpu.memory_space<vmem>>, %arg12: memref<32x32xbf16, #tpu.memory_space<vmem>>, %arg13: memref<1x32xf32, #tpu.memory_space<vmem>>, %arg14: memref<1x32xf32, #tpu.memory_space<vmem>>, %arg15: memref<1x32xf32, #tpu.memory_space<vmem>>, %arg16: memref<1x32xf32, #tpu.memory_space<vmem>>, %arg17: memref<32x32xbf16, #tpu.memory_space<vmem>>, %arg18: memref<1x32xf32, #tpu.memory_space<vmem>>, %arg19: memref<32x32xbf16, #tpu.memory_space<vmem>>, %arg20: memref<1x32xf32, #tpu.memory_space<vmem>>, %arg21: memref<1x32xf32, #tpu.memory_space<vmem>>, %arg22: memref<1x32xf32, #tpu.memory_space<vmem>>, %arg23: memref<1x32xf32, #tpu.memory_space<vmem>>, %arg24: memref<32x128xbf16, #tpu.memory_space<vmem>>, %arg25: memref<1x128xf32, #tpu.memory_space<vmem>>, %arg26: memref<12x128xf32, #tpu.memory_space<vmem>>, %arg27: memref<8x128xf32, #tpu.memory_space<vmem>>, %arg28: memref<1x96x128xf32, #tpu.memory_space<vmem>>) attributes {dimension_semantics = [#tpu.dimension_semantics<parallel>], iteration_bounds = array<i64: 2>, scalar_prefetch = 0 : i64, scratch_operands = 0 : i64, tpu.core_type = #tpu.core_type<tc>, window_params = [{transform_indices = @transform_0, window_bounds = array<i64: 1, 96, 128>}, {pipeline_mode = #tpu.pipeline_mode<synchronous>, transform_indices = @transform_1, window_bounds = array<i64: 128, 56>}, {pipeline_mode = #tpu.pipeline_mode<synchronous>, transform_indices = @transform_2, window_bounds = array<i64: 1, 56>}, {pipeline_mode = #tpu.pipeline_mode<synchronous>, transform_indices = @transform_3, window_bounds = array<i64: 1, 56>}, {pipeline_mode = #tpu.pipeline_mode<synchronous>, transform_indices = @transform_4, window_bounds = array<i64: 1, 56>}, {pipeline_mode = #tpu.pipeline_mode<synchronous>, transform_indices = @transform_5, window_bounds = array<i64: 1, 56>}, {pipeline_mode = #tpu.pipeline_mode<synchronous>, transform_indices = @transform_6, window_bounds = array<i64: 1, 56>}, {pipeline_mode = #tpu.pipeline_mode<synchronous>, transform_indices = @transform_7, window_bounds = array<i64: 1, 56>}, {pipeline_mode = #tpu.pipeline_mode<synchronous>, transform_indices = @transform_8, window_bounds = array<i64: 1, 56>}, {pipeline_mode = #tpu.pipeline_mode<synchronous>, transform_indices = @transform_9, window_bounds = array<i64: 56, 32>}, {pipeline_mode = #tpu.pipeline_mode<synchronous>, transform_indices = @transform_10, window_bounds = array<i64: 1, 32>}, {pipeline_mode = #tpu.pipeline_mode<synchronous>, transform_indices = @transform_11, window_bounds = array<i64: 32, 32>}, {pipeline_mode = #tpu.pipeline_mode<synchronous>, transform_indices = @transform_12, window_bounds = array<i64: 1, 32>}, {pipeline_mode = #tpu.pipeline_mode<synchronous>, transform_indices = @transform_13, window_bounds = array<i64: 1, 32>}, {pipeline_mode = #tpu.pipeline_mode<synchronous>, transform_indices = @transform_14, window_bounds = array<i64: 1, 32>}, {pipeline_mode = #tpu.pipeline_mode<synchronous>, transform_indices = @transform_15, window_bounds = array<i64: 1, 32>}, {pipeline_mode = #tpu.pipeline_mode<synchronous>, transform_indices = @transform_16, window_bounds = array<i64: 32, 32>}, {pipeline_mode = #tpu.pipeline_mode<synchronous>, transform_indices = @transform_17, window_bounds = array<i64: 1, 32>}, {pipeline_mode = #tpu.pipeline_mode<synchronous>, transform_indices = @transform_18, window_bounds = array<i64: 32, 32>}, {pipeline_mode = #tpu.pipeline_mode<synchronous>, transform_indices = @transform_19, window_bounds = array<i64: 1, 32>}, {pipeline_mode = #tpu.pipeline_mode<synchronous>, transform_indices = @transform_20, window_bounds = array<i64: 1, 32>}, {pipeline_mode = #tpu.pipeline_mode<synchronous>, transform_indices = @transform_21, window_bounds = array<i64: 1, 32>}, {pipeline_mode = #tpu.pipeline_mode<synchronous>, transform_indices = @transform_22, window_bounds = array<i64: 1, 32>}, {pipeline_mode = #tpu.pipeline_mode<synchronous>, transform_indices = @transform_23, window_bounds = array<i64: 32, 128>}, {pipeline_mode = #tpu.pipeline_mode<synchronous>, transform_indices = @transform_24, window_bounds = array<i64: 1, 128>}, {pipeline_mode = #tpu.pipeline_mode<synchronous>, transform_indices = @transform_25, window_bounds = array<i64: 12, 128>}, {transform_indices = @transform_26, window_bounds = array<i64: 8, 128>}, {transform_indices = @transform_27, window_bounds = array<i64: 1, 96, 128>}]} {
    %cst = arith.constant 0.000000e+00 : f32
    %0 = vector.broadcast %cst : f32 to vector<1x96x128xf32>
    %c0 = arith.constant 0 : index
    %c0_0 = arith.constant 0 : index
    %c0_1 = arith.constant 0 : index
    %1 = vector.load %arg28[%c0, %c0_0, %c0_1] : memref<1x96x128xf32, #tpu.memory_space<vmem>>, vector<1x96x128xf32>
    tpu.vector_store %arg28[%c0, %c0_0, %c0_1], %0 {strides = array<i32>} : memref<1x96x128xf32, #tpu.memory_space<vmem>>, vector<1x96x128xf32>,
    %c0_2 = arith.constant 0 : index
    %c0_3 = arith.constant 0 : index
    %c0_4 = arith.constant 0 : index
    %2 = vector.load %arg1[%c0_2, %c0_3, %c0_4] : memref<1x96x128xf32, #tpu.memory_space<vmem>>, vector<1x96x128xf32>
    %3 = vector.shape_cast %2 : vector<1x96x128xf32> to vector<96x128xf32>
    %c0_5 = arith.constant 0 : index
    %c0_6 = arith.constant 0 : index
    %4 = vector.load %arg2[%c0_5, %c0_6] : memref<128x56xf32, #tpu.memory_space<vmem>>, vector<128x56xf32>
    %cst_7 = arith.constant dense<0.000000e+00> : vector<96x56xf32>
    %5 = tpu.matmul %3, %4, %cst_7 {dimension_numbers = #tpu.dot_dimension_numbers<[1], [0], [0], [1], [0, 0, 1, 1], [], []>} : vector<96x128xf32>, vector<128x56xf32>, vector<96x56xf32> -> vector<96x56xf32>
    %c0_8 = arith.constant 0 : index
    %c0_9 = arith.constant 0 : index
    %6 = vector.load %arg3[%c0_8, %c0_9] : memref<1x56xf32, #tpu.memory_space<vmem>>, vector<1x56xf32>
    %7 = vector.broadcast %6 : vector<1x56xf32> to vector<96x56xf32>
    %8 = arith.addf %5, %7 : vector<96x56xf32>
    %cst_10 = arith.constant dense<0.000000e+00> : vector<96xf32>
    %9 = vector.multi_reduction <add>, %8, %cst_10 [1] : vector<96x56xf32> to vector<96xf32>
    %10 = vector.shape_cast %9 : vector<96xf32> to vector<96x1xf32>
    %cst_11 = arith.constant 5.600000e+01 : f32
    %11 = vector.broadcast %cst_11 : f32 to vector<96x1xf32>
    %12 = arith.divf %10, %11 : vector<96x1xf32>
    %13 = vector.broadcast %12 : vector<96x1xf32> to vector<96x56xf32>
    %14 = arith.subf %8, %13 : vector<96x56xf32>
    %15 = arith.mulf %14, %14 : vector<96x56xf32>
    %cst_12 = arith.constant dense<0.000000e+00> : vector<96xf32>
    %16 = vector.multi_reduction <add>, %15, %cst_12 [1] : vector<96x56xf32> to vector<96xf32>
    %17 = vector.shape_cast %16 : vector<96xf32> to vector<96x1xf32>
    %cst_13 = arith.constant 5.600000e+01 : f32
    %18 = vector.broadcast %cst_13 : f32 to vector<96x1xf32>
    %19 = arith.divf %17, %18 : vector<96x1xf32>
    %20 = vector.broadcast %12 : vector<96x1xf32> to vector<96x56xf32>
    %21 = arith.subf %8, %20 : vector<96x56xf32>
    %cst_14 = arith.constant 9.99999974E-6 : f32
    %22 = vector.broadcast %cst_14 : f32 to vector<96x1xf32>
    %23 = arith.addf %19, %22 : vector<96x1xf32>
    %24 = math.rsqrt %23 : vector<96x1xf32>
    %25 = vector.broadcast %24 : vector<96x1xf32> to vector<96x56xf32>
    %26 = arith.mulf %21, %25 : vector<96x56xf32>
    %c0_15 = arith.constant 0 : index
    %c0_16 = arith.constant 0 : index
    %27 = vector.load %arg4[%c0_15, %c0_16] : memref<1x56xf32, #tpu.memory_space<vmem>>, vector<1x56xf32>
    %28 = vector.broadcast %27 : vector<1x56xf32> to vector<96x56xf32>
    %29 = arith.mulf %26, %28 : vector<96x56xf32>
    %c0_17 = arith.constant 0 : index
    %c0_18 = arith.constant 0 : index
    %30 = vector.load %arg5[%c0_17, %c0_18] : memref<1x56xf32, #tpu.memory_space<vmem>>, vector<1x56xf32>
    %31 = vector.broadcast %30 : vector<1x56xf32> to vector<96x56xf32>
    %32 = arith.addf %29, %31 : vector<96x56xf32>
    %cst_19 = arith.constant 0.000000e+00 : f32
    %33 = vector.broadcast %cst_19 : f32 to vector<96x56xf32>
    %34 = arith.cmpf ogt, %32, %33 : vector<96x56xf32>
    %cst_20 = arith.constant 0.00999999977 : f32
    %35 = vector.broadcast %cst_20 : f32 to vector<96x56xf32>
    %36 = arith.mulf %35, %32 : vector<96x56xf32>
    %37 = arith.select %34, %32, %36 : vector<96x56xi1>, vector<96x56xf32>
    %c0_21 = arith.constant 0 : index
    %c0_22 = arith.constant 0 : index
    %38 = vector.load %arg6[%c0_21, %c0_22] : memref<1x56xf32, #tpu.memory_space<vmem>>, vector<1x56xf32>
    %c0_23 = arith.constant 0 : index
    %c0_24 = arith.constant 0 : index
    %39 = vector.load %arg7[%c0_23, %c0_24] : memref<1x56xf32, #tpu.memory_space<vmem>>, vector<1x56xf32>
    %c0_25 = arith.constant 0 : index
    %c0_26 = arith.constant 0 : index
    %40 = vector.load %arg8[%c0_25, %c0_26] : memref<1x56xf32, #tpu.memory_space<vmem>>, vector<1x56xf32>
    %c0_27 = arith.constant 0 : index
    %c0_28 = arith.constant 0 : index
    %41 = vector.load %arg9[%c0_27, %c0_28] : memref<1x56xf32, #tpu.memory_space<vmem>>, vector<1x56xf32>
    %cst_29 = arith.constant 0.000000e+00 : f32
    %42 = vector.broadcast %cst_29 : f32 to vector<8x56xf32>
    %cst_30 = arith.constant 0.000000e+00 : f32
    %43 = vector.broadcast %cst_30 : f32 to vector<8x56xf32>
    %cst_31 = arith.constant 0.000000e+00 : f32
    %44 = vector.broadcast %cst_31 : f32 to vector<8x56xf32>
    %45 = vector.extract_strided_slice %37 {offsets = [0, 0], sizes = [8, 56], strides = [1, 1]} : vector<96x56xf32> to vector<8x56xf32>
    %46 = vector.broadcast %39 : vector<1x56xf32> to vector<8x56xf32>
    %47 = arith.mulf %46, %43 : vector<8x56xf32>
    %48 = vector.broadcast %40 : vector<1x56xf32> to vector<8x56xf32>
    %49 = arith.mulf %48, %42 : vector<8x56xf32>
    %50 = arith.addf %47, %49 : vector<8x56xf32>
    %51 = vector.broadcast %41 : vector<1x56xf32> to vector<8x56xf32>
    %52 = arith.mulf %51, %44 : vector<8x56xf32>
    %53 = arith.addf %50, %52 : vector<8x56xf32>
    %cst_32 = arith.constant 1.000000e+00 : f32
    %54 = vector.broadcast %cst_32 : f32 to vector<8x56xf32>
    %55 = arith.mulf %54, %44 : vector<8x56xf32>
    %56 = arith.subf %42, %55 : vector<8x56xf32>
    %57 = vector.broadcast %38 : vector<1x56xf32> to vector<8x56xf32>
    %58 = arith.mulf %57, %56 : vector<8x56xf32>
    %cst_33 = arith.constant 1.000000e+00 : f32
    %59 = vector.broadcast %cst_33 : f32 to vector<1x56xf32>
    %60 = arith.subf %59, %38 : vector<1x56xf32>
    %61 = arith.subf %45, %53 : vector<8x56xf32>
    %62 = vector.broadcast %60 : vector<1x56xf32> to vector<8x56xf32>
    %63 = arith.mulf %62, %61 : vector<8x56xf32>
    %64 = arith.addf %58, %63 : vector<8x56xf32>
    %cst_34 = arith.constant 1.000000e+00 : f32
    %65 = vector.broadcast %cst_34 : f32 to vector<8x56xf32>
    %66 = arith.cmpf ogt, %64, %65 : vector<8x56xf32>
    %67 = arith.extui %66 : vector<8x56xi1> to vector<8x56xi32>
    %68 = arith.sitofp %67 : vector<8x56xi32> to vector<8x56xf32>
    %c0_35 = arith.constant 0 : index
    %c0_36 = arith.constant 0 : index
    %c0_37 = arith.constant 0 : index
    %69 = vector.load %arg28[%c0_35, %c0_36, %c0_37] : memref<1x96x128xf32, #tpu.memory_space<vmem>>, vector<1x8x56xf32>
    %70 = vector.shape_cast %69 : vector<1x8x56xf32> to vector<8x56xf32>
    %71 = vector.shape_cast %68 : vector<8x56xf32> to vector<1x8x56xf32>
    tpu.vector_store %arg28[%c0_35, %c0_36, %c0_37], %71 {strides = array<i32>} : memref<1x96x128xf32, #tpu.memory_space<vmem>>, vector<1x8x56xf32>,
    %72 = vector.extract_strided_slice %37 {offsets = [8, 0], sizes = [8, 56], strides = [1, 1]} : vector<96x56xf32> to vector<8x56xf32>
    %73 = vector.broadcast %39 : vector<1x56xf32> to vector<8x56xf32>
    %74 = arith.mulf %73, %53 : vector<8x56xf32>
    %75 = vector.broadcast %40 : vector<1x56xf32> to vector<8x56xf32>
    %76 = arith.mulf %75, %64 : vector<8x56xf32>
    %77 = arith.addf %74, %76 : vector<8x56xf32>
    %78 = vector.broadcast %41 : vector<1x56xf32> to vector<8x56xf32>
    %79 = arith.mulf %78, %68 : vector<8x56xf32>
    %80 = arith.addf %77, %79 : vector<8x56xf32>
    %cst_38 = arith.constant 1.000000e+00 : f32
    %81 = vector.broadcast %cst_38 : f32 to vector<8x56xf32>
    %82 = arith.mulf %81, %68 : vector<8x56xf32>
    %83 = arith.subf %64, %82 : vector<8x56xf32>
    %84 = vector.broadcast %38 : vector<1x56xf32> to vector<8x56xf32>
    %85 = arith.mulf %84, %83 : vector<8x56xf32>
    %cst_39 = arith.constant 1.000000e+00 : f32
    %86 = vector.broadcast %cst_39 : f32 to vector<1x56xf32>
    %87 = arith.subf %86, %38 : vector<1x56xf32>
    %88 = arith.subf %72, %80 : vector<8x56xf32>
    %89 = vector.broadcast %87 : vector<1x56xf32> to vector<8x56xf32>
    %90 = arith.mulf %89, %88 : vector<8x56xf32>
    %91 = arith.addf %85, %90 : vector<8x56xf32>
    %cst_40 = arith.constant 1.000000e+00 : f32
    %92 = vector.broadcast %cst_40 : f32 to vector<8x56xf32>
    %93 = arith.cmpf ogt, %91, %92 : vector<8x56xf32>
    %94 = arith.extui %93 : vector<8x56xi1> to vector<8x56xi32>
    %95 = arith.sitofp %94 : vector<8x56xi32> to vector<8x56xf32>
    %c0_41 = arith.constant 0 : index
    %c8 = arith.constant 8 : index
    %c0_42 = arith.constant 0 : index
    %96 = vector.load %arg28[%c0_41, %c8, %c0_42] : memref<1x96x128xf32, #tpu.memory_space<vmem>>, vector<1x8x56xf32>
    %97 = vector.shape_cast %96 : vector<1x8x56xf32> to vector<8x56xf32>
    %98 = vector.shape_cast %95 : vector<8x56xf32> to vector<1x8x56xf32>
    tpu.vector_store %arg28[%c0_41, %c8, %c0_42], %98 {strides = array<i32>} : memref<1x96x128xf32, #tpu.memory_space<vmem>>, vector<1x8x56xf32>,
    %99 = vector.extract_strided_slice %37 {offsets = [16, 0], sizes = [8, 56], strides = [1, 1]} : vector<96x56xf32> to vector<8x56xf32>
    %100 = vector.broadcast %39 : vector<1x56xf32> to vector<8x56xf32>
    %101 = arith.mulf %100, %80 : vector<8x56xf32>
    %102 = vector.broadcast %40 : vector<1x56xf32> to vector<8x56xf32>
    %103 = arith.mulf %102, %91 : vector<8x56xf32>
    %104 = arith.addf %101, %103 : vector<8x56xf32>
    %105 = vector.broadcast %41 : vector<1x56xf32> to vector<8x56xf32>
    %106 = arith.mulf %105, %95 : vector<8x56xf32>
    %107 = arith.addf %104, %106 : vector<8x56xf32>
    %cst_43 = arith.constant 1.000000e+00 : f32
    %108 = vector.broadcast %cst_43 : f32 to vector<8x56xf32>
    %109 = arith.mulf %108, %95 : vector<8x56xf32>
    %110 = arith.subf %91, %109 : vector<8x56xf32>
    %111 = vector.broadcast %38 : vector<1x56xf32> to vector<8x56xf32>
    %112 = arith.mulf %111, %110 : vector<8x56xf32>
    %cst_44 = arith.constant 1.000000e+00 : f32
    %113 = vector.broadcast %cst_44 : f32 to vector<1x56xf32>
    %114 = arith.subf %113, %38 : vector<1x56xf32>
    %115 = arith.subf %99, %107 : vector<8x56xf32>
    %116 = vector.broadcast %114 : vector<1x56xf32> to vector<8x56xf32>
    %117 = arith.mulf %116, %115 : vector<8x56xf32>
    %118 = arith.addf %112, %117 : vector<8x56xf32>
    %cst_45 = arith.constant 1.000000e+00 : f32
    %119 = vector.broadcast %cst_45 : f32 to vector<8x56xf32>
    %120 = arith.cmpf ogt, %118, %119 : vector<8x56xf32>
    %121 = arith.extui %120 : vector<8x56xi1> to vector<8x56xi32>
    %122 = arith.sitofp %121 : vector<8x56xi32> to vector<8x56xf32>
    %c0_46 = arith.constant 0 : index
    %c16 = arith.constant 16 : index
    %c0_47 = arith.constant 0 : index
    %123 = vector.load %arg28[%c0_46, %c16, %c0_47] : memref<1x96x128xf32, #tpu.memory_space<vmem>>, vector<1x8x56xf32>
    %124 = vector.shape_cast %123 : vector<1x8x56xf32> to vector<8x56xf32>
    %125 = vector.shape_cast %122 : vector<8x56xf32> to vector<1x8x56xf32>
    tpu.vector_store %arg28[%c0_46, %c16, %c0_47], %125 {strides = array<i32>} : memref<1x96x128xf32, #tpu.memory_space<vmem>>, vector<1x8x56xf32>,
    %126 = vector.extract_strided_slice %37 {offsets = [24, 0], sizes = [8, 56], strides = [1, 1]} : vector<96x56xf32> to vector<8x56xf32>
    %127 = vector.broadcast %39 : vector<1x56xf32> to vector<8x56xf32>
    %128 = arith.mulf %127, %107 : vector<8x56xf32>
    %129 = vector.broadcast %40 : vector<1x56xf32> to vector<8x56xf32>
    %130 = arith.mulf %129, %118 : vector<8x56xf32>
    %131 = arith.addf %128, %130 : vector<8x56xf32>
    %132 = vector.broadcast %41 : vector<1x56xf32> to vector<8x56xf32>
    %133 = arith.mulf %132, %122 : vector<8x56xf32>
    %134 = arith.addf %131, %133 : vector<8x56xf32>
    %cst_48 = arith.constant 1.000000e+00 : f32
    %135 = vector.broadcast %cst_48 : f32 to vector<8x56xf32>
    %136 = arith.mulf %135, %122 : vector<8x56xf32>
    %137 = arith.subf %118, %136 : vector<8x56xf32>
    %138 = vector.broadcast %38 : vector<1x56xf32> to vector<8x56xf32>
    %139 = arith.mulf %138, %137 : vector<8x56xf32>
    %cst_49 = arith.constant 1.000000e+00 : f32
    %140 = vector.broadcast %cst_49 : f32 to vector<1x56xf32>
    %141 = arith.subf %140, %38 : vector<1x56xf32>
    %142 = arith.subf %126, %134 : vector<8x56xf32>
    %143 = vector.broadcast %141 : vector<1x56xf32> to vector<8x56xf32>
    %144 = arith.mulf %143, %142 : vector<8x56xf32>
    %145 = arith.addf %139, %144 : vector<8x56xf32>
    %cst_50 = arith.constant 1.000000e+00 : f32
    %146 = vector.broadcast %cst_50 : f32 to vector<8x56xf32>
    %147 = arith.cmpf ogt, %145, %146 : vector<8x56xf32>
    %148 = arith.extui %147 : vector<8x56xi1> to vector<8x56xi32>
    %149 = arith.sitofp %148 : vector<8x56xi32> to vector<8x56xf32>
    %c0_51 = arith.constant 0 : index
    %c24 = arith.constant 24 : index
    %c0_52 = arith.constant 0 : index
    %150 = vector.load %arg28[%c0_51, %c24, %c0_52] : memref<1x96x128xf32, #tpu.memory_space<vmem>>, vector<1x8x56xf32>
    %151 = vector.shape_cast %150 : vector<1x8x56xf32> to vector<8x56xf32>
    %152 = vector.shape_cast %149 : vector<8x56xf32> to vector<1x8x56xf32>
    tpu.vector_store %arg28[%c0_51, %c24, %c0_52], %152 {strides = array<i32>} : memref<1x96x128xf32, #tpu.memory_space<vmem>>, vector<1x8x56xf32>,
    %153 = vector.extract_strided_slice %37 {offsets = [32, 0], sizes = [8, 56], strides = [1, 1]} : vector<96x56xf32> to vector<8x56xf32>
    %154 = vector.broadcast %39 : vector<1x56xf32> to vector<8x56xf32>
    %155 = arith.mulf %154, %134 : vector<8x56xf32>
    %156 = vector.broadcast %40 : vector<1x56xf32> to vector<8x56xf32>
    %157 = arith.mulf %156, %145 : vector<8x56xf32>
    %158 = arith.addf %155, %157 : vector<8x56xf32>
    %159 = vector.broadcast %41 : vector<1x56xf32> to vector<8x56xf32>
    %160 = arith.mulf %159, %149 : vector<8x56xf32>
    %161 = arith.addf %158, %160 : vector<8x56xf32>
    %cst_53 = arith.constant 1.000000e+00 : f32
    %162 = vector.broadcast %cst_53 : f32 to vector<8x56xf32>
    %163 = arith.mulf %162, %149 : vector<8x56xf32>
    %164 = arith.subf %145, %163 : vector<8x56xf32>
    %165 = vector.broadcast %38 : vector<1x56xf32> to vector<8x56xf32>
    %166 = arith.mulf %165, %164 : vector<8x56xf32>
    %cst_54 = arith.constant 1.000000e+00 : f32
    %167 = vector.broadcast %cst_54 : f32 to vector<1x56xf32>
    %168 = arith.subf %167, %38 : vector<1x56xf32>
    %169 = arith.subf %153, %161 : vector<8x56xf32>
    %170 = vector.broadcast %168 : vector<1x56xf32> to vector<8x56xf32>
    %171 = arith.mulf %170, %169 : vector<8x56xf32>
    %172 = arith.addf %166, %171 : vector<8x56xf32>
    %cst_55 = arith.constant 1.000000e+00 : f32
    %173 = vector.broadcast %cst_55 : f32 to vector<8x56xf32>
    %174 = arith.cmpf ogt, %172, %173 : vector<8x56xf32>
    %175 = arith.extui %174 : vector<8x56xi1> to vector<8x56xi32>
    %176 = arith.sitofp %175 : vector<8x56xi32> to vector<8x56xf32>
    %c0_56 = arith.constant 0 : index
    %c32 = arith.constant 32 : index
    %c0_57 = arith.constant 0 : index
    %177 = vector.load %arg28[%c0_56, %c32, %c0_57] : memref<1x96x128xf32, #tpu.memory_space<vmem>>, vector<1x8x56xf32>
    %178 = vector.shape_cast %177 : vector<1x8x56xf32> to vector<8x56xf32>
    %179 = vector.shape_cast %176 : vector<8x56xf32> to vector<1x8x56xf32>
    tpu.vector_store %arg28[%c0_56, %c32, %c0_57], %179 {strides = array<i32>} : memref<1x96x128xf32, #tpu.memory_space<vmem>>, vector<1x8x56xf32>,
    %180 = vector.extract_strided_slice %37 {offsets = [40, 0], sizes = [8, 56], strides = [1, 1]} : vector<96x56xf32> to vector<8x56xf32>
    %181 = vector.broadcast %39 : vector<1x56xf32> to vector<8x56xf32>
    %182 = arith.mulf %181, %161 : vector<8x56xf32>
    %183 = vector.broadcast %40 : vector<1x56xf32> to vector<8x56xf32>
    %184 = arith.mulf %183, %172 : vector<8x56xf32>
    %185 = arith.addf %182, %184 : vector<8x56xf32>
    %186 = vector.broadcast %41 : vector<1x56xf32> to vector<8x56xf32>
    %187 = arith.mulf %186, %176 : vector<8x56xf32>
    %188 = arith.addf %185, %187 : vector<8x56xf32>
    %cst_58 = arith.constant 1.000000e+00 : f32
    %189 = vector.broadcast %cst_58 : f32 to vector<8x56xf32>
    %190 = arith.mulf %189, %176 : vector<8x56xf32>
    %191 = arith.subf %172, %190 : vector<8x56xf32>
    %192 = vector.broadcast %38 : vector<1x56xf32> to vector<8x56xf32>
    %193 = arith.mulf %192, %191 : vector<8x56xf32>
    %cst_59 = arith.constant 1.000000e+00 : f32
    %194 = vector.broadcast %cst_59 : f32 to vector<1x56xf32>
    %195 = arith.subf %194, %38 : vector<1x56xf32>
    %196 = arith.subf %180, %188 : vector<8x56xf32>
    %197 = vector.broadcast %195 : vector<1x56xf32> to vector<8x56xf32>
    %198 = arith.mulf %197, %196 : vector<8x56xf32>
    %199 = arith.addf %193, %198 : vector<8x56xf32>
    %cst_60 = arith.constant 1.000000e+00 : f32
    %200 = vector.broadcast %cst_60 : f32 to vector<8x56xf32>
    %201 = arith.cmpf ogt, %199, %200 : vector<8x56xf32>
    %202 = arith.extui %201 : vector<8x56xi1> to vector<8x56xi32>
    %203 = arith.sitofp %202 : vector<8x56xi32> to vector<8x56xf32>
    %c0_61 = arith.constant 0 : index
    %c40 = arith.constant 40 : index
    %c0_62 = arith.constant 0 : index
    %204 = vector.load %arg28[%c0_61, %c40, %c0_62] : memref<1x96x128xf32, #tpu.memory_space<vmem>>, vector<1x8x56xf32>
    %205 = vector.shape_cast %204 : vector<1x8x56xf32> to vector<8x56xf32>
    %206 = vector.shape_cast %203 : vector<8x56xf32> to vector<1x8x56xf32>
    tpu.vector_store %arg28[%c0_61, %c40, %c0_62], %206 {strides = array<i32>} : memref<1x96x128xf32, #tpu.memory_space<vmem>>, vector<1x8x56xf32>,
    %207 = vector.extract_strided_slice %37 {offsets = [48, 0], sizes = [8, 56], strides = [1, 1]} : vector<96x56xf32> to vector<8x56xf32>
    %208 = vector.broadcast %39 : vector<1x56xf32> to vector<8x56xf32>
    %209 = arith.mulf %208, %188 : vector<8x56xf32>
    %210 = vector.broadcast %40 : vector<1x56xf32> to vector<8x56xf32>
    %211 = arith.mulf %210, %199 : vector<8x56xf32>
    %212 = arith.addf %209, %211 : vector<8x56xf32>
    %213 = vector.broadcast %41 : vector<1x56xf32> to vector<8x56xf32>
    %214 = arith.mulf %213, %203 : vector<8x56xf32>
    %215 = arith.addf %212, %214 : vector<8x56xf32>
    %cst_63 = arith.constant 1.000000e+00 : f32
    %216 = vector.broadcast %cst_63 : f32 to vector<8x56xf32>
    %217 = arith.mulf %216, %203 : vector<8x56xf32>
    %218 = arith.subf %199, %217 : vector<8x56xf32>
    %219 = vector.broadcast %38 : vector<1x56xf32> to vector<8x56xf32>
    %220 = arith.mulf %219, %218 : vector<8x56xf32>
    %cst_64 = arith.constant 1.000000e+00 : f32
    %221 = vector.broadcast %cst_64 : f32 to vector<1x56xf32>
    %222 = arith.subf %221, %38 : vector<1x56xf32>
    %223 = arith.subf %207, %215 : vector<8x56xf32>
    %224 = vector.broadcast %222 : vector<1x56xf32> to vector<8x56xf32>
    %225 = arith.mulf %224, %223 : vector<8x56xf32>
    %226 = arith.addf %220, %225 : vector<8x56xf32>
    %cst_65 = arith.constant 1.000000e+00 : f32
    %227 = vector.broadcast %cst_65 : f32 to vector<8x56xf32>
    %228 = arith.cmpf ogt, %226, %227 : vector<8x56xf32>
    %229 = arith.extui %228 : vector<8x56xi1> to vector<8x56xi32>
    %230 = arith.sitofp %229 : vector<8x56xi32> to vector<8x56xf32>
    %c0_66 = arith.constant 0 : index
    %c48 = arith.constant 48 : index
    %c0_67 = arith.constant 0 : index
    %231 = vector.load %arg28[%c0_66, %c48, %c0_67] : memref<1x96x128xf32, #tpu.memory_space<vmem>>, vector<1x8x56xf32>
    %232 = vector.shape_cast %231 : vector<1x8x56xf32> to vector<8x56xf32>
    %233 = vector.shape_cast %230 : vector<8x56xf32> to vector<1x8x56xf32>
    tpu.vector_store %arg28[%c0_66, %c48, %c0_67], %233 {strides = array<i32>} : memref<1x96x128xf32, #tpu.memory_space<vmem>>, vector<1x8x56xf32>,
    %234 = vector.extract_strided_slice %37 {offsets = [56, 0], sizes = [8, 56], strides = [1, 1]} : vector<96x56xf32> to vector<8x56xf32>
    %235 = vector.broadcast %39 : vector<1x56xf32> to vector<8x56xf32>
    %236 = arith.mulf %235, %215 : vector<8x56xf32>
    %237 = vector.broadcast %40 : vector<1x56xf32> to vector<8x56xf32>
    %238 = arith.mulf %237, %226 : vector<8x56xf32>
    %239 = arith.addf %236, %238 : vector<8x56xf32>
    %240 = vector.broadcast %41 : vector<1x56xf32> to vector<8x56xf32>
    %241 = arith.mulf %240, %230 : vector<8x56xf32>
    %242 = arith.addf %239, %241 : vector<8x56xf32>
    %cst_68 = arith.constant 1.000000e+00 : f32
    %243 = vector.broadcast %cst_68 : f32 to vector<8x56xf32>
    %244 = arith.mulf %243, %230 : vector<8x56xf32>
    %245 = arith.subf %226, %244 : vector<8x56xf32>
    %246 = vector.broadcast %38 : vector<1x56xf32> to vector<8x56xf32>
    %247 = arith.mulf %246, %245 : vector<8x56xf32>
    %cst_69 = arith.constant 1.000000e+00 : f32
    %248 = vector.broadcast %cst_69 : f32 to vector<1x56xf32>
    %249 = arith.subf %248, %38 : vector<1x56xf32>
    %250 = arith.subf %234, %242 : vector<8x56xf32>
    %251 = vector.broadcast %249 : vector<1x56xf32> to vector<8x56xf32>
    %252 = arith.mulf %251, %250 : vector<8x56xf32>
    %253 = arith.addf %247, %252 : vector<8x56xf32>
    %cst_70 = arith.constant 1.000000e+00 : f32
    %254 = vector.broadcast %cst_70 : f32 to vector<8x56xf32>
    %255 = arith.cmpf ogt, %253, %254 : vector<8x56xf32>
    %256 = arith.extui %255 : vector<8x56xi1> to vector<8x56xi32>
    %257 = arith.sitofp %256 : vector<8x56xi32> to vector<8x56xf32>
    %c0_71 = arith.constant 0 : index
    %c56 = arith.constant 56 : index
    %c0_72 = arith.constant 0 : index
    %258 = vector.load %arg28[%c0_71, %c56, %c0_72] : memref<1x96x128xf32, #tpu.memory_space<vmem>>, vector<1x8x56xf32>
    %259 = vector.shape_cast %258 : vector<1x8x56xf32> to vector<8x56xf32>
    %260 = vector.shape_cast %257 : vector<8x56xf32> to vector<1x8x56xf32>
    tpu.vector_store %arg28[%c0_71, %c56, %c0_72], %260 {strides = array<i32>} : memref<1x96x128xf32, #tpu.memory_space<vmem>>, vector<1x8x56xf32>,
    %261 = vector.extract_strided_slice %37 {offsets = [64, 0], sizes = [8, 56], strides = [1, 1]} : vector<96x56xf32> to vector<8x56xf32>
    %262 = vector.broadcast %39 : vector<1x56xf32> to vector<8x56xf32>
    %263 = arith.mulf %262, %242 : vector<8x56xf32>
    %264 = vector.broadcast %40 : vector<1x56xf32> to vector<8x56xf32>
    %265 = arith.mulf %264, %253 : vector<8x56xf32>
    %266 = arith.addf %263, %265 : vector<8x56xf32>
    %267 = vector.broadcast %41 : vector<1x56xf32> to vector<8x56xf32>
    %268 = arith.mulf %267, %257 : vector<8x56xf32>
    %269 = arith.addf %266, %268 : vector<8x56xf32>
    %cst_73 = arith.constant 1.000000e+00 : f32
    %270 = vector.broadcast %cst_73 : f32 to vector<8x56xf32>
    %271 = arith.mulf %270, %257 : vector<8x56xf32>
    %272 = arith.subf %253, %271 : vector<8x56xf32>
    %273 = vector.broadcast %38 : vector<1x56xf32> to vector<8x56xf32>
    %274 = arith.mulf %273, %272 : vector<8x56xf32>
    %cst_74 = arith.constant 1.000000e+00 : f32
    %275 = vector.broadcast %cst_74 : f32 to vector<1x56xf32>
    %276 = arith.subf %275, %38 : vector<1x56xf32>
    %277 = arith.subf %261, %269 : vector<8x56xf32>
    %278 = vector.broadcast %276 : vector<1x56xf32> to vector<8x56xf32>
    %279 = arith.mulf %278, %277 : vector<8x56xf32>
    %280 = arith.addf %274, %279 : vector<8x56xf32>
    %cst_75 = arith.constant 1.000000e+00 : f32
    %281 = vector.broadcast %cst_75 : f32 to vector<8x56xf32>
    %282 = arith.cmpf ogt, %280, %281 : vector<8x56xf32>
    %283 = arith.extui %282 : vector<8x56xi1> to vector<8x56xi32>
    %284 = arith.sitofp %283 : vector<8x56xi32> to vector<8x56xf32>
    %c0_76 = arith.constant 0 : index
    %c64 = arith.constant 64 : index
    %c0_77 = arith.constant 0 : index
    %285 = vector.load %arg28[%c0_76, %c64, %c0_77] : memref<1x96x128xf32, #tpu.memory_space<vmem>>, vector<1x8x56xf32>
    %286 = vector.shape_cast %285 : vector<1x8x56xf32> to vector<8x56xf32>
    %287 = vector.shape_cast %284 : vector<8x56xf32> to vector<1x8x56xf32>
    tpu.vector_store %arg28[%c0_76, %c64, %c0_77], %287 {strides = array<i32>} : memref<1x96x128xf32, #tpu.memory_space<vmem>>, vector<1x8x56xf32>,
    %288 = vector.extract_strided_slice %37 {offsets = [72, 0], sizes = [8, 56], strides = [1, 1]} : vector<96x56xf32> to vector<8x56xf32>
    %289 = vector.broadcast %39 : vector<1x56xf32> to vector<8x56xf32>
    %290 = arith.mulf %289, %269 : vector<8x56xf32>
    %291 = vector.broadcast %40 : vector<1x56xf32> to vector<8x56xf32>
    %292 = arith.mulf %291, %280 : vector<8x56xf32>
    %293 = arith.addf %290, %292 : vector<8x56xf32>
    %294 = vector.broadcast %41 : vector<1x56xf32> to vector<8x56xf32>
    %295 = arith.mulf %294, %284 : vector<8x56xf32>
    %296 = arith.addf %293, %295 : vector<8x56xf32>
    %cst_78 = arith.constant 1.000000e+00 : f32
    %297 = vector.broadcast %cst_78 : f32 to vector<8x56xf32>
    %298 = arith.mulf %297, %284 : vector<8x56xf32>
    %299 = arith.subf %280, %298 : vector<8x56xf32>
    %300 = vector.broadcast %38 : vector<1x56xf32> to vector<8x56xf32>
    %301 = arith.mulf %300, %299 : vector<8x56xf32>
    %cst_79 = arith.constant 1.000000e+00 : f32
    %302 = vector.broadcast %cst_79 : f32 to vector<1x56xf32>
    %303 = arith.subf %302, %38 : vector<1x56xf32>
    %304 = arith.subf %288, %296 : vector<8x56xf32>
    %305 = vector.broadcast %303 : vector<1x56xf32> to vector<8x56xf32>
    %306 = arith.mulf %305, %304 : vector<8x56xf32>
    %307 = arith.addf %301, %306 : vector<8x56xf32>
    %cst_80 = arith.constant 1.000000e+00 : f32
    %308 = vector.broadcast %cst_80 : f32 to vector<8x56xf32>
    %309 = arith.cmpf ogt, %307, %308 : vector<8x56xf32>
    %310 = arith.extui %309 : vector<8x56xi1> to vector<8x56xi32>
    %311 = arith.sitofp %310 : vector<8x56xi32> to vector<8x56xf32>
    %c0_81 = arith.constant 0 : index
    %c72 = arith.constant 72 : index
    %c0_82 = arith.constant 0 : index
    %312 = vector.load %arg28[%c0_81, %c72, %c0_82] : memref<1x96x128xf32, #tpu.memory_space<vmem>>, vector<1x8x56xf32>
    %313 = vector.shape_cast %312 : vector<1x8x56xf32> to vector<8x56xf32>
    %314 = vector.shape_cast %311 : vector<8x56xf32> to vector<1x8x56xf32>
    tpu.vector_store %arg28[%c0_81, %c72, %c0_82], %314 {strides = array<i32>} : memref<1x96x128xf32, #tpu.memory_space<vmem>>, vector<1x8x56xf32>,
    %315 = vector.extract_strided_slice %37 {offsets = [80, 0], sizes = [8, 56], strides = [1, 1]} : vector<96x56xf32> to vector<8x56xf32>
    %316 = vector.broadcast %39 : vector<1x56xf32> to vector<8x56xf32>
    %317 = arith.mulf %316, %296 : vector<8x56xf32>
    %318 = vector.broadcast %40 : vector<1x56xf32> to vector<8x56xf32>
    %319 = arith.mulf %318, %307 : vector<8x56xf32>
    %320 = arith.addf %317, %319 : vector<8x56xf32>
    %321 = vector.broadcast %41 : vector<1x56xf32> to vector<8x56xf32>
    %322 = arith.mulf %321, %311 : vector<8x56xf32>
    %323 = arith.addf %320, %322 : vector<8x56xf32>
    %cst_83 = arith.constant 1.000000e+00 : f32
    %324 = vector.broadcast %cst_83 : f32 to vector<8x56xf32>
    %325 = arith.mulf %324, %311 : vector<8x56xf32>
    %326 = arith.subf %307, %325 : vector<8x56xf32>
    %327 = vector.broadcast %38 : vector<1x56xf32> to vector<8x56xf32>
    %328 = arith.mulf %327, %326 : vector<8x56xf32>
    %cst_84 = arith.constant 1.000000e+00 : f32
    %329 = vector.broadcast %cst_84 : f32 to vector<1x56xf32>
    %330 = arith.subf %329, %38 : vector<1x56xf32>
    %331 = arith.subf %315, %323 : vector<8x56xf32>
    %332 = vector.broadcast %330 : vector<1x56xf32> to vector<8x56xf32>
    %333 = arith.mulf %332, %331 : vector<8x56xf32>
    %334 = arith.addf %328, %333 : vector<8x56xf32>
    %cst_85 = arith.constant 1.000000e+00 : f32
    %335 = vector.broadcast %cst_85 : f32 to vector<8x56xf32>
    %336 = arith.cmpf ogt, %334, %335 : vector<8x56xf32>
    %337 = arith.extui %336 : vector<8x56xi1> to vector<8x56xi32>
    %338 = arith.sitofp %337 : vector<8x56xi32> to vector<8x56xf32>
    %c0_86 = arith.constant 0 : index
    %c80 = arith.constant 80 : index
    %c0_87 = arith.constant 0 : index
    %339 = vector.load %arg28[%c0_86, %c80, %c0_87] : memref<1x96x128xf32, #tpu.memory_space<vmem>>, vector<1x8x56xf32>
    %340 = vector.shape_cast %339 : vector<1x8x56xf32> to vector<8x56xf32>
    %341 = vector.shape_cast %338 : vector<8x56xf32> to vector<1x8x56xf32>
    tpu.vector_store %arg28[%c0_86, %c80, %c0_87], %341 {strides = array<i32>} : memref<1x96x128xf32, #tpu.memory_space<vmem>>, vector<1x8x56xf32>,
    %342 = vector.extract_strided_slice %37 {offsets = [88, 0], sizes = [8, 56], strides = [1, 1]} : vector<96x56xf32> to vector<8x56xf32>
    %343 = vector.broadcast %39 : vector<1x56xf32> to vector<8x56xf32>
    %344 = arith.mulf %343, %323 : vector<8x56xf32>
    %345 = vector.broadcast %40 : vector<1x56xf32> to vector<8x56xf32>
    %346 = arith.mulf %345, %334 : vector<8x56xf32>
    %347 = arith.addf %344, %346 : vector<8x56xf32>
    %348 = vector.broadcast %41 : vector<1x56xf32> to vector<8x56xf32>
    %349 = arith.mulf %348, %338 : vector<8x56xf32>
    %350 = arith.addf %347, %349 : vector<8x56xf32>
    %cst_88 = arith.constant 1.000000e+00 : f32
    %351 = vector.broadcast %cst_88 : f32 to vector<8x56xf32>
    %352 = arith.mulf %351, %338 : vector<8x56xf32>
    %353 = arith.subf %334, %352 : vector<8x56xf32>
    %354 = vector.broadcast %38 : vector<1x56xf32> to vector<8x56xf32>
    %355 = arith.mulf %354, %353 : vector<8x56xf32>
    %cst_89 = arith.constant 1.000000e+00 : f32
    %356 = vector.broadcast %cst_89 : f32 to vector<1x56xf32>
    %357 = arith.subf %356, %38 : vector<1x56xf32>
    %358 = arith.subf %342, %350 : vector<8x56xf32>
    %359 = vector.broadcast %357 : vector<1x56xf32> to vector<8x56xf32>
    %360 = arith.mulf %359, %358 : vector<8x56xf32>
    %361 = arith.addf %355, %360 : vector<8x56xf32>
    %cst_90 = arith.constant 1.000000e+00 : f32
    %362 = vector.broadcast %cst_90 : f32 to vector<8x56xf32>
    %363 = arith.cmpf ogt, %361, %362 : vector<8x56xf32>
    %364 = arith.extui %363 : vector<8x56xi1> to vector<8x56xi32>
    %365 = arith.sitofp %364 : vector<8x56xi32> to vector<8x56xf32>
    %c0_91 = arith.constant 0 : index
    %c88 = arith.constant 88 : index
    %c0_92 = arith.constant 0 : index
    %366 = vector.load %arg28[%c0_91, %c88, %c0_92] : memref<1x96x128xf32, #tpu.memory_space<vmem>>, vector<1x8x56xf32>
    %367 = vector.shape_cast %366 : vector<1x8x56xf32> to vector<8x56xf32>
    %368 = vector.shape_cast %365 : vector<8x56xf32> to vector<1x8x56xf32>
    tpu.vector_store %arg28[%c0_91, %c88, %c0_92], %368 {strides = array<i32>} : memref<1x96x128xf32, #tpu.memory_space<vmem>>, vector<1x8x56xf32>,
    %c0_93 = arith.constant 0 : index
    %c0_94 = arith.constant 0 : index
    %c0_95 = arith.constant 0 : index
    %369 = vector.load %arg28[%c0_93, %c0_94, %c0_95] : memref<1x96x128xf32, #tpu.memory_space<vmem>>, vector<1x96x56xf32>
    %370 = vector.shape_cast %369 : vector<1x96x56xf32> to vector<96x56xf32>
    %371 = arith.truncf %370 : vector<96x56xf32> to vector<96x56xbf16>
    %c0_96 = arith.constant 0 : index
    %c0_97 = arith.constant 0 : index
    %372 = vector.load %arg10[%c0_96, %c0_97] : memref<56x32xbf16, #tpu.memory_space<vmem>>, vector<56x32xbf16>
    %cst_98 = arith.constant dense<0.000000e+00> : vector<96x32xf32>
    %373 = tpu.matmul %371, %372, %cst_98 {dimension_numbers = #tpu.dot_dimension_numbers<[1], [0], [0], [1], [0, 0, 1, 1], [], []>} : vector<96x56xbf16>, vector<56x32xbf16>, vector<96x32xf32> -> vector<96x32xf32>
    %c0_99 = arith.constant 0 : index
    %c0_100 = arith.constant 0 : index
    %374 = vector.load %arg11[%c0_99, %c0_100] : memref<1x32xf32, #tpu.memory_space<vmem>>, vector<1x32xf32>
    %375 = vector.broadcast %374 : vector<1x32xf32> to vector<96x32xf32>
    %376 = arith.addf %373, %375 : vector<96x32xf32>
    %c0_101 = arith.constant 0 : index
    %c0_102 = arith.constant 0 : index
    %377 = vector.load %arg13[%c0_101, %c0_102] : memref<1x32xf32, #tpu.memory_space<vmem>>, vector<1x32xf32>
    %c0_103 = arith.constant 0 : index
    %c0_104 = arith.constant 0 : index
    %378 = vector.load %arg14[%c0_103, %c0_104] : memref<1x32xf32, #tpu.memory_space<vmem>>, vector<1x32xf32>
    %c0_105 = arith.constant 0 : index
    %c0_106 = arith.constant 0 : index
    %379 = vector.load %arg15[%c0_105, %c0_106] : memref<1x32xf32, #tpu.memory_space<vmem>>, vector<1x32xf32>
    %c0_107 = arith.constant 0 : index
    %c0_108 = arith.constant 0 : index
    %380 = vector.load %arg16[%c0_107, %c0_108] : memref<1x32xf32, #tpu.memory_space<vmem>>, vector<1x32xf32>
    %c0_109 = arith.constant 0 : index
    %c0_110 = arith.constant 0 : index
    %381 = vector.load %arg12[%c0_109, %c0_110] : memref<32x32xbf16, #tpu.memory_space<vmem>>, vector<32x32xbf16>
    %cst_111 = arith.constant 0.000000e+00 : f32
    %382 = vector.broadcast %cst_111 : f32 to vector<8x32xf32>
    %cst_112 = arith.constant 0.000000e+00 : f32
    %383 = vector.broadcast %cst_112 : f32 to vector<8x32xf32>
    %cst_113 = arith.constant 0.000000e+00 : f32
    %384 = vector.broadcast %cst_113 : f32 to vector<8x32xf32>
    %385 = vector.extract_strided_slice %376 {offsets = [0, 0], sizes = [8, 32], strides = [1, 1]} : vector<96x32xf32> to vector<8x32xf32>
    %386 = arith.truncf %384 : vector<8x32xf32> to vector<8x32xbf16>
    %cst_114 = arith.constant dense<0.000000e+00> : vector<8x32xf32>
    %387 = tpu.matmul %386, %381, %cst_114 {dimension_numbers = #tpu.dot_dimension_numbers<[1], [0], [0], [1], [0, 0, 1, 1], [], []>} : vector<8x32xbf16>, vector<32x32xbf16>, vector<8x32xf32> -> vector<8x32xf32>
    %388 = arith.addf %385, %387 : vector<8x32xf32>
    %389 = vector.broadcast %378 : vector<1x32xf32> to vector<8x32xf32>
    %390 = arith.mulf %389, %383 : vector<8x32xf32>
    %391 = vector.broadcast %379 : vector<1x32xf32> to vector<8x32xf32>
    %392 = arith.mulf %391, %382 : vector<8x32xf32>
    %393 = arith.addf %390, %392 : vector<8x32xf32>
    %394 = vector.broadcast %380 : vector<1x32xf32> to vector<8x32xf32>
    %395 = arith.mulf %394, %384 : vector<8x32xf32>
    %396 = arith.addf %393, %395 : vector<8x32xf32>
    %cst_115 = arith.constant 1.000000e+00 : f32
    %397 = vector.broadcast %cst_115 : f32 to vector<8x32xf32>
    %398 = arith.mulf %397, %384 : vector<8x32xf32>
    %399 = arith.subf %382, %398 : vector<8x32xf32>
    %400 = vector.broadcast %377 : vector<1x32xf32> to vector<8x32xf32>
    %401 = arith.mulf %400, %399 : vector<8x32xf32>
    %cst_116 = arith.constant 1.000000e+00 : f32
    %402 = vector.broadcast %cst_116 : f32 to vector<1x32xf32>
    %403 = arith.subf %402, %377 : vector<1x32xf32>
    %404 = arith.subf %388, %396 : vector<8x32xf32>
    %405 = vector.broadcast %403 : vector<1x32xf32> to vector<8x32xf32>
    %406 = arith.mulf %405, %404 : vector<8x32xf32>
    %407 = arith.addf %401, %406 : vector<8x32xf32>
    %cst_117 = arith.constant 1.000000e+00 : f32
    %408 = vector.broadcast %cst_117 : f32 to vector<8x32xf32>
    %409 = arith.cmpf ogt, %407, %408 : vector<8x32xf32>
    %410 = arith.extui %409 : vector<8x32xi1> to vector<8x32xi32>
    %411 = arith.sitofp %410 : vector<8x32xi32> to vector<8x32xf32>
    %c0_118 = arith.constant 0 : index
    %c0_119 = arith.constant 0 : index
    %c56_120 = arith.constant 56 : index
    %412 = vector.load %arg28[%c0_118, %c0_119, %c56_120] : memref<1x96x128xf32, #tpu.memory_space<vmem>>, vector<1x8x32xf32>
    %413 = vector.shape_cast %412 : vector<1x8x32xf32> to vector<8x32xf32>
    %414 = vector.shape_cast %411 : vector<8x32xf32> to vector<1x8x32xf32>
    tpu.vector_store %arg28[%c0_118, %c0_119, %c56_120], %414 {strides = array<i32>} : memref<1x96x128xf32, #tpu.memory_space<vmem>>, vector<1x8x32xf32>,
    %415 = vector.extract_strided_slice %376 {offsets = [8, 0], sizes = [8, 32], strides = [1, 1]} : vector<96x32xf32> to vector<8x32xf32>
    %416 = arith.truncf %411 : vector<8x32xf32> to vector<8x32xbf16>
    %cst_121 = arith.constant dense<0.000000e+00> : vector<8x32xf32>
    %417 = tpu.matmul %416, %381, %cst_121 {dimension_numbers = #tpu.dot_dimension_numbers<[1], [0], [0], [1], [0, 0, 1, 1], [], []>} : vector<8x32xbf16>, vector<32x32xbf16>, vector<8x32xf32> -> vector<8x32xf32>
    %418 = arith.addf %415, %417 : vector<8x32xf32>
    %419 = vector.broadcast %378 : vector<1x32xf32> to vector<8x32xf32>
    %420 = arith.mulf %419, %396 : vector<8x32xf32>
    %421 = vector.broadcast %379 : vector<1x32xf32> to vector<8x32xf32>
    %422 = arith.mulf %421, %407 : vector<8x32xf32>
    %423 = arith.addf %420, %422 : vector<8x32xf32>
    %424 = vector.broadcast %380 : vector<1x32xf32> to vector<8x32xf32>
    %425 = arith.mulf %424, %411 : vector<8x32xf32>
    %426 = arith.addf %423, %425 : vector<8x32xf32>
    %cst_122 = arith.constant 1.000000e+00 : f32
    %427 = vector.broadcast %cst_122 : f32 to vector<8x32xf32>
    %428 = arith.mulf %427, %411 : vector<8x32xf32>
    %429 = arith.subf %407, %428 : vector<8x32xf32>
    %430 = vector.broadcast %377 : vector<1x32xf32> to vector<8x32xf32>
    %431 = arith.mulf %430, %429 : vector<8x32xf32>
    %cst_123 = arith.constant 1.000000e+00 : f32
    %432 = vector.broadcast %cst_123 : f32 to vector<1x32xf32>
    %433 = arith.subf %432, %377 : vector<1x32xf32>
    %434 = arith.subf %418, %426 : vector<8x32xf32>
    %435 = vector.broadcast %433 : vector<1x32xf32> to vector<8x32xf32>
    %436 = arith.mulf %435, %434 : vector<8x32xf32>
    %437 = arith.addf %431, %436 : vector<8x32xf32>
    %cst_124 = arith.constant 1.000000e+00 : f32
    %438 = vector.broadcast %cst_124 : f32 to vector<8x32xf32>
    %439 = arith.cmpf ogt, %437, %438 : vector<8x32xf32>
    %440 = arith.extui %439 : vector<8x32xi1> to vector<8x32xi32>
    %441 = arith.sitofp %440 : vector<8x32xi32> to vector<8x32xf32>
    %c0_125 = arith.constant 0 : index
    %c8_126 = arith.constant 8 : index
    %c56_127 = arith.constant 56 : index
    %442 = vector.load %arg28[%c0_125, %c8_126, %c56_127] : memref<1x96x128xf32, #tpu.memory_space<vmem>>, vector<1x8x32xf32>
    %443 = vector.shape_cast %442 : vector<1x8x32xf32> to vector<8x32xf32>
    %444 = vector.shape_cast %441 : vector<8x32xf32> to vector<1x8x32xf32>
    tpu.vector_store %arg28[%c0_125, %c8_126, %c56_127], %444 {strides = array<i32>} : memref<1x96x128xf32, #tpu.memory_space<vmem>>, vector<1x8x32xf32>,
    %445 = vector.extract_strided_slice %376 {offsets = [16, 0], sizes = [8, 32], strides = [1, 1]} : vector<96x32xf32> to vector<8x32xf32>
    %446 = arith.truncf %441 : vector<8x32xf32> to vector<8x32xbf16>
    %cst_128 = arith.constant dense<0.000000e+00> : vector<8x32xf32>
    %447 = tpu.matmul %446, %381, %cst_128 {dimension_numbers = #tpu.dot_dimension_numbers<[1], [0], [0], [1], [0, 0, 1, 1], [], []>} : vector<8x32xbf16>, vector<32x32xbf16>, vector<8x32xf32> -> vector<8x32xf32>
    %448 = arith.addf %445, %447 : vector<8x32xf32>
    %449 = vector.broadcast %378 : vector<1x32xf32> to vector<8x32xf32>
    %450 = arith.mulf %449, %426 : vector<8x32xf32>
    %451 = vector.broadcast %379 : vector<1x32xf32> to vector<8x32xf32>
    %452 = arith.mulf %451, %437 : vector<8x32xf32>
    %453 = arith.addf %450, %452 : vector<8x32xf32>
    %454 = vector.broadcast %380 : vector<1x32xf32> to vector<8x32xf32>
    %455 = arith.mulf %454, %441 : vector<8x32xf32>
    %456 = arith.addf %453, %455 : vector<8x32xf32>
    %cst_129 = arith.constant 1.000000e+00 : f32
    %457 = vector.broadcast %cst_129 : f32 to vector<8x32xf32>
    %458 = arith.mulf %457, %441 : vector<8x32xf32>
    %459 = arith.subf %437, %458 : vector<8x32xf32>
    %460 = vector.broadcast %377 : vector<1x32xf32> to vector<8x32xf32>
    %461 = arith.mulf %460, %459 : vector<8x32xf32>
    %cst_130 = arith.constant 1.000000e+00 : f32
    %462 = vector.broadcast %cst_130 : f32 to vector<1x32xf32>
    %463 = arith.subf %462, %377 : vector<1x32xf32>
    %464 = arith.subf %448, %456 : vector<8x32xf32>
    %465 = vector.broadcast %463 : vector<1x32xf32> to vector<8x32xf32>
    %466 = arith.mulf %465, %464 : vector<8x32xf32>
    %467 = arith.addf %461, %466 : vector<8x32xf32>
    %cst_131 = arith.constant 1.000000e+00 : f32
    %468 = vector.broadcast %cst_131 : f32 to vector<8x32xf32>
    %469 = arith.cmpf ogt, %467, %468 : vector<8x32xf32>
    %470 = arith.extui %469 : vector<8x32xi1> to vector<8x32xi32>
    %471 = arith.sitofp %470 : vector<8x32xi32> to vector<8x32xf32>
    %c0_132 = arith.constant 0 : index
    %c16_133 = arith.constant 16 : index
    %c56_134 = arith.constant 56 : index
    %472 = vector.load %arg28[%c0_132, %c16_133, %c56_134] : memref<1x96x128xf32, #tpu.memory_space<vmem>>, vector<1x8x32xf32>
    %473 = vector.shape_cast %472 : vector<1x8x32xf32> to vector<8x32xf32>
    %474 = vector.shape_cast %471 : vector<8x32xf32> to vector<1x8x32xf32>
    tpu.vector_store %arg28[%c0_132, %c16_133, %c56_134], %474 {strides = array<i32>} : memref<1x96x128xf32, #tpu.memory_space<vmem>>, vector<1x8x32xf32>,
    %475 = vector.extract_strided_slice %376 {offsets = [24, 0], sizes = [8, 32], strides = [1, 1]} : vector<96x32xf32> to vector<8x32xf32>
    %476 = arith.truncf %471 : vector<8x32xf32> to vector<8x32xbf16>
    %cst_135 = arith.constant dense<0.000000e+00> : vector<8x32xf32>
    %477 = tpu.matmul %476, %381, %cst_135 {dimension_numbers = #tpu.dot_dimension_numbers<[1], [0], [0], [1], [0, 0, 1, 1], [], []>} : vector<8x32xbf16>, vector<32x32xbf16>, vector<8x32xf32> -> vector<8x32xf32>
    %478 = arith.addf %475, %477 : vector<8x32xf32>
    %479 = vector.broadcast %378 : vector<1x32xf32> to vector<8x32xf32>
    %480 = arith.mulf %479, %456 : vector<8x32xf32>
    %481 = vector.broadcast %379 : vector<1x32xf32> to vector<8x32xf32>
    %482 = arith.mulf %481, %467 : vector<8x32xf32>
    %483 = arith.addf %480, %482 : vector<8x32xf32>
    %484 = vector.broadcast %380 : vector<1x32xf32> to vector<8x32xf32>
    %485 = arith.mulf %484, %471 : vector<8x32xf32>
    %486 = arith.addf %483, %485 : vector<8x32xf32>
    %cst_136 = arith.constant 1.000000e+00 : f32
    %487 = vector.broadcast %cst_136 : f32 to vector<8x32xf32>
    %488 = arith.mulf %487, %471 : vector<8x32xf32>
    %489 = arith.subf %467, %488 : vector<8x32xf32>
    %490 = vector.broadcast %377 : vector<1x32xf32> to vector<8x32xf32>
    %491 = arith.mulf %490, %489 : vector<8x32xf32>
    %cst_137 = arith.constant 1.000000e+00 : f32
    %492 = vector.broadcast %cst_137 : f32 to vector<1x32xf32>
    %493 = arith.subf %492, %377 : vector<1x32xf32>
    %494 = arith.subf %478, %486 : vector<8x32xf32>
    %495 = vector.broadcast %493 : vector<1x32xf32> to vector<8x32xf32>
    %496 = arith.mulf %495, %494 : vector<8x32xf32>
    %497 = arith.addf %491, %496 : vector<8x32xf32>
    %cst_138 = arith.constant 1.000000e+00 : f32
    %498 = vector.broadcast %cst_138 : f32 to vector<8x32xf32>
    %499 = arith.cmpf ogt, %497, %498 : vector<8x32xf32>
    %500 = arith.extui %499 : vector<8x32xi1> to vector<8x32xi32>
    %501 = arith.sitofp %500 : vector<8x32xi32> to vector<8x32xf32>
    %c0_139 = arith.constant 0 : index
    %c24_140 = arith.constant 24 : index
    %c56_141 = arith.constant 56 : index
    %502 = vector.load %arg28[%c0_139, %c24_140, %c56_141] : memref<1x96x128xf32, #tpu.memory_space<vmem>>, vector<1x8x32xf32>
    %503 = vector.shape_cast %502 : vector<1x8x32xf32> to vector<8x32xf32>
    %504 = vector.shape_cast %501 : vector<8x32xf32> to vector<1x8x32xf32>
    tpu.vector_store %arg28[%c0_139, %c24_140, %c56_141], %504 {strides = array<i32>} : memref<1x96x128xf32, #tpu.memory_space<vmem>>, vector<1x8x32xf32>,
    %505 = vector.extract_strided_slice %376 {offsets = [32, 0], sizes = [8, 32], strides = [1, 1]} : vector<96x32xf32> to vector<8x32xf32>
    %506 = arith.truncf %501 : vector<8x32xf32> to vector<8x32xbf16>
    %cst_142 = arith.constant dense<0.000000e+00> : vector<8x32xf32>
    %507 = tpu.matmul %506, %381, %cst_142 {dimension_numbers = #tpu.dot_dimension_numbers<[1], [0], [0], [1], [0, 0, 1, 1], [], []>} : vector<8x32xbf16>, vector<32x32xbf16>, vector<8x32xf32> -> vector<8x32xf32>
    %508 = arith.addf %505, %507 : vector<8x32xf32>
    %509 = vector.broadcast %378 : vector<1x32xf32> to vector<8x32xf32>
    %510 = arith.mulf %509, %486 : vector<8x32xf32>
    %511 = vector.broadcast %379 : vector<1x32xf32> to vector<8x32xf32>
    %512 = arith.mulf %511, %497 : vector<8x32xf32>
    %513 = arith.addf %510, %512 : vector<8x32xf32>
    %514 = vector.broadcast %380 : vector<1x32xf32> to vector<8x32xf32>
    %515 = arith.mulf %514, %501 : vector<8x32xf32>
    %516 = arith.addf %513, %515 : vector<8x32xf32>
    %cst_143 = arith.constant 1.000000e+00 : f32
    %517 = vector.broadcast %cst_143 : f32 to vector<8x32xf32>
    %518 = arith.mulf %517, %501 : vector<8x32xf32>
    %519 = arith.subf %497, %518 : vector<8x32xf32>
    %520 = vector.broadcast %377 : vector<1x32xf32> to vector<8x32xf32>
    %521 = arith.mulf %520, %519 : vector<8x32xf32>
    %cst_144 = arith.constant 1.000000e+00 : f32
    %522 = vector.broadcast %cst_144 : f32 to vector<1x32xf32>
    %523 = arith.subf %522, %377 : vector<1x32xf32>
    %524 = arith.subf %508, %516 : vector<8x32xf32>
    %525 = vector.broadcast %523 : vector<1x32xf32> to vector<8x32xf32>
    %526 = arith.mulf %525, %524 : vector<8x32xf32>
    %527 = arith.addf %521, %526 : vector<8x32xf32>
    %cst_145 = arith.constant 1.000000e+00 : f32
    %528 = vector.broadcast %cst_145 : f32 to vector<8x32xf32>
    %529 = arith.cmpf ogt, %527, %528 : vector<8x32xf32>
    %530 = arith.extui %529 : vector<8x32xi1> to vector<8x32xi32>
    %531 = arith.sitofp %530 : vector<8x32xi32> to vector<8x32xf32>
    %c0_146 = arith.constant 0 : index
    %c32_147 = arith.constant 32 : index
    %c56_148 = arith.constant 56 : index
    %532 = vector.load %arg28[%c0_146, %c32_147, %c56_148] : memref<1x96x128xf32, #tpu.memory_space<vmem>>, vector<1x8x32xf32>
    %533 = vector.shape_cast %532 : vector<1x8x32xf32> to vector<8x32xf32>
    %534 = vector.shape_cast %531 : vector<8x32xf32> to vector<1x8x32xf32>
    tpu.vector_store %arg28[%c0_146, %c32_147, %c56_148], %534 {strides = array<i32>} : memref<1x96x128xf32, #tpu.memory_space<vmem>>, vector<1x8x32xf32>,
    %535 = vector.extract_strided_slice %376 {offsets = [40, 0], sizes = [8, 32], strides = [1, 1]} : vector<96x32xf32> to vector<8x32xf32>
    %536 = arith.truncf %531 : vector<8x32xf32> to vector<8x32xbf16>
    %cst_149 = arith.constant dense<0.000000e+00> : vector<8x32xf32>
    %537 = tpu.matmul %536, %381, %cst_149 {dimension_numbers = #tpu.dot_dimension_numbers<[1], [0], [0], [1], [0, 0, 1, 1], [], []>} : vector<8x32xbf16>, vector<32x32xbf16>, vector<8x32xf32> -> vector<8x32xf32>
    %538 = arith.addf %535, %537 : vector<8x32xf32>
    %539 = vector.broadcast %378 : vector<1x32xf32> to vector<8x32xf32>
    %540 = arith.mulf %539, %516 : vector<8x32xf32>
    %541 = vector.broadcast %379 : vector<1x32xf32> to vector<8x32xf32>
    %542 = arith.mulf %541, %527 : vector<8x32xf32>
    %543 = arith.addf %540, %542 : vector<8x32xf32>
    %544 = vector.broadcast %380 : vector<1x32xf32> to vector<8x32xf32>
    %545 = arith.mulf %544, %531 : vector<8x32xf32>
    %546 = arith.addf %543, %545 : vector<8x32xf32>
    %cst_150 = arith.constant 1.000000e+00 : f32
    %547 = vector.broadcast %cst_150 : f32 to vector<8x32xf32>
    %548 = arith.mulf %547, %531 : vector<8x32xf32>
    %549 = arith.subf %527, %548 : vector<8x32xf32>
    %550 = vector.broadcast %377 : vector<1x32xf32> to vector<8x32xf32>
    %551 = arith.mulf %550, %549 : vector<8x32xf32>
    %cst_151 = arith.constant 1.000000e+00 : f32
    %552 = vector.broadcast %cst_151 : f32 to vector<1x32xf32>
    %553 = arith.subf %552, %377 : vector<1x32xf32>
    %554 = arith.subf %538, %546 : vector<8x32xf32>
    %555 = vector.broadcast %553 : vector<1x32xf32> to vector<8x32xf32>
    %556 = arith.mulf %555, %554 : vector<8x32xf32>
    %557 = arith.addf %551, %556 : vector<8x32xf32>
    %cst_152 = arith.constant 1.000000e+00 : f32
    %558 = vector.broadcast %cst_152 : f32 to vector<8x32xf32>
    %559 = arith.cmpf ogt, %557, %558 : vector<8x32xf32>
    %560 = arith.extui %559 : vector<8x32xi1> to vector<8x32xi32>
    %561 = arith.sitofp %560 : vector<8x32xi32> to vector<8x32xf32>
    %c0_153 = arith.constant 0 : index
    %c40_154 = arith.constant 40 : index
    %c56_155 = arith.constant 56 : index
    %562 = vector.load %arg28[%c0_153, %c40_154, %c56_155] : memref<1x96x128xf32, #tpu.memory_space<vmem>>, vector<1x8x32xf32>
    %563 = vector.shape_cast %562 : vector<1x8x32xf32> to vector<8x32xf32>
    %564 = vector.shape_cast %561 : vector<8x32xf32> to vector<1x8x32xf32>
    tpu.vector_store %arg28[%c0_153, %c40_154, %c56_155], %564 {strides = array<i32>} : memref<1x96x128xf32, #tpu.memory_space<vmem>>, vector<1x8x32xf32>,
    %565 = vector.extract_strided_slice %376 {offsets = [48, 0], sizes = [8, 32], strides = [1, 1]} : vector<96x32xf32> to vector<8x32xf32>
    %566 = arith.truncf %561 : vector<8x32xf32> to vector<8x32xbf16>
    %cst_156 = arith.constant dense<0.000000e+00> : vector<8x32xf32>
    %567 = tpu.matmul %566, %381, %cst_156 {dimension_numbers = #tpu.dot_dimension_numbers<[1], [0], [0], [1], [0, 0, 1, 1], [], []>} : vector<8x32xbf16>, vector<32x32xbf16>, vector<8x32xf32> -> vector<8x32xf32>
    %568 = arith.addf %565, %567 : vector<8x32xf32>
    %569 = vector.broadcast %378 : vector<1x32xf32> to vector<8x32xf32>
    %570 = arith.mulf %569, %546 : vector<8x32xf32>
    %571 = vector.broadcast %379 : vector<1x32xf32> to vector<8x32xf32>
    %572 = arith.mulf %571, %557 : vector<8x32xf32>
    %573 = arith.addf %570, %572 : vector<8x32xf32>
    %574 = vector.broadcast %380 : vector<1x32xf32> to vector<8x32xf32>
    %575 = arith.mulf %574, %561 : vector<8x32xf32>
    %576 = arith.addf %573, %575 : vector<8x32xf32>
    %cst_157 = arith.constant 1.000000e+00 : f32
    %577 = vector.broadcast %cst_157 : f32 to vector<8x32xf32>
    %578 = arith.mulf %577, %561 : vector<8x32xf32>
    %579 = arith.subf %557, %578 : vector<8x32xf32>
    %580 = vector.broadcast %377 : vector<1x32xf32> to vector<8x32xf32>
    %581 = arith.mulf %580, %579 : vector<8x32xf32>
    %cst_158 = arith.constant 1.000000e+00 : f32
    %582 = vector.broadcast %cst_158 : f32 to vector<1x32xf32>
    %583 = arith.subf %582, %377 : vector<1x32xf32>
    %584 = arith.subf %568, %576 : vector<8x32xf32>
    %585 = vector.broadcast %583 : vector<1x32xf32> to vector<8x32xf32>
    %586 = arith.mulf %585, %584 : vector<8x32xf32>
    %587 = arith.addf %581, %586 : vector<8x32xf32>
    %cst_159 = arith.constant 1.000000e+00 : f32
    %588 = vector.broadcast %cst_159 : f32 to vector<8x32xf32>
    %589 = arith.cmpf ogt, %587, %588 : vector<8x32xf32>
    %590 = arith.extui %589 : vector<8x32xi1> to vector<8x32xi32>
    %591 = arith.sitofp %590 : vector<8x32xi32> to vector<8x32xf32>
    %c0_160 = arith.constant 0 : index
    %c48_161 = arith.constant 48 : index
    %c56_162 = arith.constant 56 : index
    %592 = vector.load %arg28[%c0_160, %c48_161, %c56_162] : memref<1x96x128xf32, #tpu.memory_space<vmem>>, vector<1x8x32xf32>
    %593 = vector.shape_cast %592 : vector<1x8x32xf32> to vector<8x32xf32>
    %594 = vector.shape_cast %591 : vector<8x32xf32> to vector<1x8x32xf32>
    tpu.vector_store %arg28[%c0_160, %c48_161, %c56_162], %594 {strides = array<i32>} : memref<1x96x128xf32, #tpu.memory_space<vmem>>, vector<1x8x32xf32>,
    %595 = vector.extract_strided_slice %376 {offsets = [56, 0], sizes = [8, 32], strides = [1, 1]} : vector<96x32xf32> to vector<8x32xf32>
    %596 = arith.truncf %591 : vector<8x32xf32> to vector<8x32xbf16>
    %cst_163 = arith.constant dense<0.000000e+00> : vector<8x32xf32>
    %597 = tpu.matmul %596, %381, %cst_163 {dimension_numbers = #tpu.dot_dimension_numbers<[1], [0], [0], [1], [0, 0, 1, 1], [], []>} : vector<8x32xbf16>, vector<32x32xbf16>, vector<8x32xf32> -> vector<8x32xf32>
    %598 = arith.addf %595, %597 : vector<8x32xf32>
    %599 = vector.broadcast %378 : vector<1x32xf32> to vector<8x32xf32>
    %600 = arith.mulf %599, %576 : vector<8x32xf32>
    %601 = vector.broadcast %379 : vector<1x32xf32> to vector<8x32xf32>
    %602 = arith.mulf %601, %587 : vector<8x32xf32>
    %603 = arith.addf %600, %602 : vector<8x32xf32>
    %604 = vector.broadcast %380 : vector<1x32xf32> to vector<8x32xf32>
    %605 = arith.mulf %604, %591 : vector<8x32xf32>
    %606 = arith.addf %603, %605 : vector<8x32xf32>
    %cst_164 = arith.constant 1.000000e+00 : f32
    %607 = vector.broadcast %cst_164 : f32 to vector<8x32xf32>
    %608 = arith.mulf %607, %591 : vector<8x32xf32>
    %609 = arith.subf %587, %608 : vector<8x32xf32>
    %610 = vector.broadcast %377 : vector<1x32xf32> to vector<8x32xf32>
    %611 = arith.mulf %610, %609 : vector<8x32xf32>
    %cst_165 = arith.constant 1.000000e+00 : f32
    %612 = vector.broadcast %cst_165 : f32 to vector<1x32xf32>
    %613 = arith.subf %612, %377 : vector<1x32xf32>
    %614 = arith.subf %598, %606 : vector<8x32xf32>
    %615 = vector.broadcast %613 : vector<1x32xf32> to vector<8x32xf32>
    %616 = arith.mulf %615, %614 : vector<8x32xf32>
    %617 = arith.addf %611, %616 : vector<8x32xf32>
    %cst_166 = arith.constant 1.000000e+00 : f32
    %618 = vector.broadcast %cst_166 : f32 to vector<8x32xf32>
    %619 = arith.cmpf ogt, %617, %618 : vector<8x32xf32>
    %620 = arith.extui %619 : vector<8x32xi1> to vector<8x32xi32>
    %621 = arith.sitofp %620 : vector<8x32xi32> to vector<8x32xf32>
    %c0_167 = arith.constant 0 : index
    %c56_168 = arith.constant 56 : index
    %c56_169 = arith.constant 56 : index
    %622 = vector.load %arg28[%c0_167, %c56_168, %c56_169] : memref<1x96x128xf32, #tpu.memory_space<vmem>>, vector<1x8x32xf32>
    %623 = vector.shape_cast %622 : vector<1x8x32xf32> to vector<8x32xf32>
    %624 = vector.shape_cast %621 : vector<8x32xf32> to vector<1x8x32xf32>
    tpu.vector_store %arg28[%c0_167, %c56_168, %c56_169], %624 {strides = array<i32>} : memref<1x96x128xf32, #tpu.memory_space<vmem>>, vector<1x8x32xf32>,
    %625 = vector.extract_strided_slice %376 {offsets = [64, 0], sizes = [8, 32], strides = [1, 1]} : vector<96x32xf32> to vector<8x32xf32>
    %626 = arith.truncf %621 : vector<8x32xf32> to vector<8x32xbf16>
    %cst_170 = arith.constant dense<0.000000e+00> : vector<8x32xf32>
    %627 = tpu.matmul %626, %381, %cst_170 {dimension_numbers = #tpu.dot_dimension_numbers<[1], [0], [0], [1], [0, 0, 1, 1], [], []>} : vector<8x32xbf16>, vector<32x32xbf16>, vector<8x32xf32> -> vector<8x32xf32>
    %628 = arith.addf %625, %627 : vector<8x32xf32>
    %629 = vector.broadcast %378 : vector<1x32xf32> to vector<8x32xf32>
    %630 = arith.mulf %629, %606 : vector<8x32xf32>
    %631 = vector.broadcast %379 : vector<1x32xf32> to vector<8x32xf32>
    %632 = arith.mulf %631, %617 : vector<8x32xf32>
    %633 = arith.addf %630, %632 : vector<8x32xf32>
    %634 = vector.broadcast %380 : vector<1x32xf32> to vector<8x32xf32>
    %635 = arith.mulf %634, %621 : vector<8x32xf32>
    %636 = arith.addf %633, %635 : vector<8x32xf32>
    %cst_171 = arith.constant 1.000000e+00 : f32
    %637 = vector.broadcast %cst_171 : f32 to vector<8x32xf32>
    %638 = arith.mulf %637, %621 : vector<8x32xf32>
    %639 = arith.subf %617, %638 : vector<8x32xf32>
    %640 = vector.broadcast %377 : vector<1x32xf32> to vector<8x32xf32>
    %641 = arith.mulf %640, %639 : vector<8x32xf32>
    %cst_172 = arith.constant 1.000000e+00 : f32
    %642 = vector.broadcast %cst_172 : f32 to vector<1x32xf32>
    %643 = arith.subf %642, %377 : vector<1x32xf32>
    %644 = arith.subf %628, %636 : vector<8x32xf32>
    %645 = vector.broadcast %643 : vector<1x32xf32> to vector<8x32xf32>
    %646 = arith.mulf %645, %644 : vector<8x32xf32>
    %647 = arith.addf %641, %646 : vector<8x32xf32>
    %cst_173 = arith.constant 1.000000e+00 : f32
    %648 = vector.broadcast %cst_173 : f32 to vector<8x32xf32>
    %649 = arith.cmpf ogt, %647, %648 : vector<8x32xf32>
    %650 = arith.extui %649 : vector<8x32xi1> to vector<8x32xi32>
    %651 = arith.sitofp %650 : vector<8x32xi32> to vector<8x32xf32>
    %c0_174 = arith.constant 0 : index
    %c64_175 = arith.constant 64 : index
    %c56_176 = arith.constant 56 : index
    %652 = vector.load %arg28[%c0_174, %c64_175, %c56_176] : memref<1x96x128xf32, #tpu.memory_space<vmem>>, vector<1x8x32xf32>
    %653 = vector.shape_cast %652 : vector<1x8x32xf32> to vector<8x32xf32>
    %654 = vector.shape_cast %651 : vector<8x32xf32> to vector<1x8x32xf32>
    tpu.vector_store %arg28[%c0_174, %c64_175, %c56_176], %654 {strides = array<i32>} : memref<1x96x128xf32, #tpu.memory_space<vmem>>, vector<1x8x32xf32>,
    %655 = vector.extract_strided_slice %376 {offsets = [72, 0], sizes = [8, 32], strides = [1, 1]} : vector<96x32xf32> to vector<8x32xf32>
    %656 = arith.truncf %651 : vector<8x32xf32> to vector<8x32xbf16>
    %cst_177 = arith.constant dense<0.000000e+00> : vector<8x32xf32>
    %657 = tpu.matmul %656, %381, %cst_177 {dimension_numbers = #tpu.dot_dimension_numbers<[1], [0], [0], [1], [0, 0, 1, 1], [], []>} : vector<8x32xbf16>, vector<32x32xbf16>, vector<8x32xf32> -> vector<8x32xf32>
    %658 = arith.addf %655, %657 : vector<8x32xf32>
    %659 = vector.broadcast %378 : vector<1x32xf32> to vector<8x32xf32>
    %660 = arith.mulf %659, %636 : vector<8x32xf32>
    %661 = vector.broadcast %379 : vector<1x32xf32> to vector<8x32xf32>
    %662 = arith.mulf %661, %647 : vector<8x32xf32>
    %663 = arith.addf %660, %662 : vector<8x32xf32>
    %664 = vector.broadcast %380 : vector<1x32xf32> to vector<8x32xf32>
    %665 = arith.mulf %664, %651 : vector<8x32xf32>
    %666 = arith.addf %663, %665 : vector<8x32xf32>
    %cst_178 = arith.constant 1.000000e+00 : f32
    %667 = vector.broadcast %cst_178 : f32 to vector<8x32xf32>
    %668 = arith.mulf %667, %651 : vector<8x32xf32>
    %669 = arith.subf %647, %668 : vector<8x32xf32>
    %670 = vector.broadcast %377 : vector<1x32xf32> to vector<8x32xf32>
    %671 = arith.mulf %670, %669 : vector<8x32xf32>
    %cst_179 = arith.constant 1.000000e+00 : f32
    %672 = vector.broadcast %cst_179 : f32 to vector<1x32xf32>
    %673 = arith.subf %672, %377 : vector<1x32xf32>
    %674 = arith.subf %658, %666 : vector<8x32xf32>
    %675 = vector.broadcast %673 : vector<1x32xf32> to vector<8x32xf32>
    %676 = arith.mulf %675, %674 : vector<8x32xf32>
    %677 = arith.addf %671, %676 : vector<8x32xf32>
    %cst_180 = arith.constant 1.000000e+00 : f32
    %678 = vector.broadcast %cst_180 : f32 to vector<8x32xf32>
    %679 = arith.cmpf ogt, %677, %678 : vector<8x32xf32>
    %680 = arith.extui %679 : vector<8x32xi1> to vector<8x32xi32>
    %681 = arith.sitofp %680 : vector<8x32xi32> to vector<8x32xf32>
    %c0_181 = arith.constant 0 : index
    %c72_182 = arith.constant 72 : index
    %c56_183 = arith.constant 56 : index
    %682 = vector.load %arg28[%c0_181, %c72_182, %c56_183] : memref<1x96x128xf32, #tpu.memory_space<vmem>>, vector<1x8x32xf32>
    %683 = vector.shape_cast %682 : vector<1x8x32xf32> to vector<8x32xf32>
    %684 = vector.shape_cast %681 : vector<8x32xf32> to vector<1x8x32xf32>
    tpu.vector_store %arg28[%c0_181, %c72_182, %c56_183], %684 {strides = array<i32>} : memref<1x96x128xf32, #tpu.memory_space<vmem>>, vector<1x8x32xf32>,
    %685 = vector.extract_strided_slice %376 {offsets = [80, 0], sizes = [8, 32], strides = [1, 1]} : vector<96x32xf32> to vector<8x32xf32>
    %686 = arith.truncf %681 : vector<8x32xf32> to vector<8x32xbf16>
    %cst_184 = arith.constant dense<0.000000e+00> : vector<8x32xf32>
    %687 = tpu.matmul %686, %381, %cst_184 {dimension_numbers = #tpu.dot_dimension_numbers<[1], [0], [0], [1], [0, 0, 1, 1], [], []>} : vector<8x32xbf16>, vector<32x32xbf16>, vector<8x32xf32> -> vector<8x32xf32>
    %688 = arith.addf %685, %687 : vector<8x32xf32>
    %689 = vector.broadcast %378 : vector<1x32xf32> to vector<8x32xf32>
    %690 = arith.mulf %689, %666 : vector<8x32xf32>
    %691 = vector.broadcast %379 : vector<1x32xf32> to vector<8x32xf32>
    %692 = arith.mulf %691, %677 : vector<8x32xf32>
    %693 = arith.addf %690, %692 : vector<8x32xf32>
    %694 = vector.broadcast %380 : vector<1x32xf32> to vector<8x32xf32>
    %695 = arith.mulf %694, %681 : vector<8x32xf32>
    %696 = arith.addf %693, %695 : vector<8x32xf32>
    %cst_185 = arith.constant 1.000000e+00 : f32
    %697 = vector.broadcast %cst_185 : f32 to vector<8x32xf32>
    %698 = arith.mulf %697, %681 : vector<8x32xf32>
    %699 = arith.subf %677, %698 : vector<8x32xf32>
    %700 = vector.broadcast %377 : vector<1x32xf32> to vector<8x32xf32>
    %701 = arith.mulf %700, %699 : vector<8x32xf32>
    %cst_186 = arith.constant 1.000000e+00 : f32
    %702 = vector.broadcast %cst_186 : f32 to vector<1x32xf32>
    %703 = arith.subf %702, %377 : vector<1x32xf32>
    %704 = arith.subf %688, %696 : vector<8x32xf32>
    %705 = vector.broadcast %703 : vector<1x32xf32> to vector<8x32xf32>
    %706 = arith.mulf %705, %704 : vector<8x32xf32>
    %707 = arith.addf %701, %706 : vector<8x32xf32>
    %cst_187 = arith.constant 1.000000e+00 : f32
    %708 = vector.broadcast %cst_187 : f32 to vector<8x32xf32>
    %709 = arith.cmpf ogt, %707, %708 : vector<8x32xf32>
    %710 = arith.extui %709 : vector<8x32xi1> to vector<8x32xi32>
    %711 = arith.sitofp %710 : vector<8x32xi32> to vector<8x32xf32>
    %c0_188 = arith.constant 0 : index
    %c80_189 = arith.constant 80 : index
    %c56_190 = arith.constant 56 : index
    %712 = vector.load %arg28[%c0_188, %c80_189, %c56_190] : memref<1x96x128xf32, #tpu.memory_space<vmem>>, vector<1x8x32xf32>
    %713 = vector.shape_cast %712 : vector<1x8x32xf32> to vector<8x32xf32>
    %714 = vector.shape_cast %711 : vector<8x32xf32> to vector<1x8x32xf32>
    tpu.vector_store %arg28[%c0_188, %c80_189, %c56_190], %714 {strides = array<i32>} : memref<1x96x128xf32, #tpu.memory_space<vmem>>, vector<1x8x32xf32>,
    %715 = vector.extract_strided_slice %376 {offsets = [88, 0], sizes = [8, 32], strides = [1, 1]} : vector<96x32xf32> to vector<8x32xf32>
    %716 = arith.truncf %711 : vector<8x32xf32> to vector<8x32xbf16>
    %cst_191 = arith.constant dense<0.000000e+00> : vector<8x32xf32>
    %717 = tpu.matmul %716, %381, %cst_191 {dimension_numbers = #tpu.dot_dimension_numbers<[1], [0], [0], [1], [0, 0, 1, 1], [], []>} : vector<8x32xbf16>, vector<32x32xbf16>, vector<8x32xf32> -> vector<8x32xf32>
    %718 = arith.addf %715, %717 : vector<8x32xf32>
    %719 = vector.broadcast %378 : vector<1x32xf32> to vector<8x32xf32>
    %720 = arith.mulf %719, %696 : vector<8x32xf32>
    %721 = vector.broadcast %379 : vector<1x32xf32> to vector<8x32xf32>
    %722 = arith.mulf %721, %707 : vector<8x32xf32>
    %723 = arith.addf %720, %722 : vector<8x32xf32>
    %724 = vector.broadcast %380 : vector<1x32xf32> to vector<8x32xf32>
    %725 = arith.mulf %724, %711 : vector<8x32xf32>
    %726 = arith.addf %723, %725 : vector<8x32xf32>
    %cst_192 = arith.constant 1.000000e+00 : f32
    %727 = vector.broadcast %cst_192 : f32 to vector<8x32xf32>
    %728 = arith.mulf %727, %711 : vector<8x32xf32>
    %729 = arith.subf %707, %728 : vector<8x32xf32>
    %730 = vector.broadcast %377 : vector<1x32xf32> to vector<8x32xf32>
    %731 = arith.mulf %730, %729 : vector<8x32xf32>
    %cst_193 = arith.constant 1.000000e+00 : f32
    %732 = vector.broadcast %cst_193 : f32 to vector<1x32xf32>
    %733 = arith.subf %732, %377 : vector<1x32xf32>
    %734 = arith.subf %718, %726 : vector<8x32xf32>
    %735 = vector.broadcast %733 : vector<1x32xf32> to vector<8x32xf32>
    %736 = arith.mulf %735, %734 : vector<8x32xf32>
    %737 = arith.addf %731, %736 : vector<8x32xf32>
    %cst_194 = arith.constant 1.000000e+00 : f32
    %738 = vector.broadcast %cst_194 : f32 to vector<8x32xf32>
    %739 = arith.cmpf ogt, %737, %738 : vector<8x32xf32>
    %740 = arith.extui %739 : vector<8x32xi1> to vector<8x32xi32>
    %741 = arith.sitofp %740 : vector<8x32xi32> to vector<8x32xf32>
    %c0_195 = arith.constant 0 : index
    %c88_196 = arith.constant 88 : index
    %c56_197 = arith.constant 56 : index
    %742 = vector.load %arg28[%c0_195, %c88_196, %c56_197] : memref<1x96x128xf32, #tpu.memory_space<vmem>>, vector<1x8x32xf32>
    %743 = vector.shape_cast %742 : vector<1x8x32xf32> to vector<8x32xf32>
    %744 = vector.shape_cast %741 : vector<8x32xf32> to vector<1x8x32xf32>
    tpu.vector_store %arg28[%c0_195, %c88_196, %c56_197], %744 {strides = array<i32>} : memref<1x96x128xf32, #tpu.memory_space<vmem>>, vector<1x8x32xf32>,
    %c0_198 = arith.constant 0 : index
    %c0_199 = arith.constant 0 : index
    %c56_200 = arith.constant 56 : index
    %745 = vector.load %arg28[%c0_198, %c0_199, %c56_200] : memref<1x96x128xf32, #tpu.memory_space<vmem>>, vector<1x96x32xf32>
    %746 = vector.shape_cast %745 : vector<1x96x32xf32> to vector<96x32xf32>
    %747 = arith.truncf %746 : vector<96x32xf32> to vector<96x32xbf16>
    %c0_201 = arith.constant 0 : index
    %c0_202 = arith.constant 0 : index
    %748 = vector.load %arg17[%c0_201, %c0_202] : memref<32x32xbf16, #tpu.memory_space<vmem>>, vector<32x32xbf16>
    %cst_203 = arith.constant dense<0.000000e+00> : vector<96x32xf32>
    %749 = tpu.matmul %747, %748, %cst_203 {dimension_numbers = #tpu.dot_dimension_numbers<[1], [0], [0], [1], [0, 0, 1, 1], [], []>} : vector<96x32xbf16>, vector<32x32xbf16>, vector<96x32xf32> -> vector<96x32xf32>
    %c0_204 = arith.constant 0 : index
    %c0_205 = arith.constant 0 : index
    %750 = vector.load %arg18[%c0_204, %c0_205] : memref<1x32xf32, #tpu.memory_space<vmem>>, vector<1x32xf32>
    %751 = vector.broadcast %750 : vector<1x32xf32> to vector<96x32xf32>
    %752 = arith.addf %749, %751 : vector<96x32xf32>
    %c0_206 = arith.constant 0 : index
    %c0_207 = arith.constant 0 : index
    %753 = vector.load %arg20[%c0_206, %c0_207] : memref<1x32xf32, #tpu.memory_space<vmem>>, vector<1x32xf32>
    %c0_208 = arith.constant 0 : index
    %c0_209 = arith.constant 0 : index
    %754 = vector.load %arg21[%c0_208, %c0_209] : memref<1x32xf32, #tpu.memory_space<vmem>>, vector<1x32xf32>
    %c0_210 = arith.constant 0 : index
    %c0_211 = arith.constant 0 : index
    %755 = vector.load %arg22[%c0_210, %c0_211] : memref<1x32xf32, #tpu.memory_space<vmem>>, vector<1x32xf32>
    %c0_212 = arith.constant 0 : index
    %c0_213 = arith.constant 0 : index
    %756 = vector.load %arg23[%c0_212, %c0_213] : memref<1x32xf32, #tpu.memory_space<vmem>>, vector<1x32xf32>
    %c0_214 = arith.constant 0 : index
    %c0_215 = arith.constant 0 : index
    %757 = vector.load %arg19[%c0_214, %c0_215] : memref<32x32xbf16, #tpu.memory_space<vmem>>, vector<32x32xbf16>
    %cst_216 = arith.constant 0.000000e+00 : f32
    %758 = vector.broadcast %cst_216 : f32 to vector<8x32xf32>
    %cst_217 = arith.constant 0.000000e+00 : f32
    %759 = vector.broadcast %cst_217 : f32 to vector<8x32xf32>
    %cst_218 = arith.constant 0.000000e+00 : f32
    %760 = vector.broadcast %cst_218 : f32 to vector<8x32xf32>
    %761 = vector.extract_strided_slice %752 {offsets = [0, 0], sizes = [8, 32], strides = [1, 1]} : vector<96x32xf32> to vector<8x32xf32>
    %762 = arith.truncf %760 : vector<8x32xf32> to vector<8x32xbf16>
    %cst_219 = arith.constant dense<0.000000e+00> : vector<8x32xf32>
    %763 = tpu.matmul %762, %757, %cst_219 {dimension_numbers = #tpu.dot_dimension_numbers<[1], [0], [0], [1], [0, 0, 1, 1], [], []>} : vector<8x32xbf16>, vector<32x32xbf16>, vector<8x32xf32> -> vector<8x32xf32>
    %764 = arith.addf %761, %763 : vector<8x32xf32>
    %765 = vector.broadcast %754 : vector<1x32xf32> to vector<8x32xf32>
    %766 = arith.mulf %765, %759 : vector<8x32xf32>
    %767 = vector.broadcast %755 : vector<1x32xf32> to vector<8x32xf32>
    %768 = arith.mulf %767, %758 : vector<8x32xf32>
    %769 = arith.addf %766, %768 : vector<8x32xf32>
    %770 = vector.broadcast %756 : vector<1x32xf32> to vector<8x32xf32>
    %771 = arith.mulf %770, %760 : vector<8x32xf32>
    %772 = arith.addf %769, %771 : vector<8x32xf32>
    %cst_220 = arith.constant 1.000000e+00 : f32
    %773 = vector.broadcast %cst_220 : f32 to vector<8x32xf32>
    %774 = arith.mulf %773, %760 : vector<8x32xf32>
    %775 = arith.subf %758, %774 : vector<8x32xf32>
    %776 = vector.broadcast %753 : vector<1x32xf32> to vector<8x32xf32>
    %777 = arith.mulf %776, %775 : vector<8x32xf32>
    %cst_221 = arith.constant 1.000000e+00 : f32
    %778 = vector.broadcast %cst_221 : f32 to vector<1x32xf32>
    %779 = arith.subf %778, %753 : vector<1x32xf32>
    %780 = arith.subf %764, %772 : vector<8x32xf32>
    %781 = vector.broadcast %779 : vector<1x32xf32> to vector<8x32xf32>
    %782 = arith.mulf %781, %780 : vector<8x32xf32>
    %783 = arith.addf %777, %782 : vector<8x32xf32>
    %cst_222 = arith.constant 1.000000e+00 : f32
    %784 = vector.broadcast %cst_222 : f32 to vector<8x32xf32>
    %785 = arith.cmpf ogt, %783, %784 : vector<8x32xf32>
    %786 = arith.extui %785 : vector<8x32xi1> to vector<8x32xi32>
    %787 = arith.sitofp %786 : vector<8x32xi32> to vector<8x32xf32>
    %c0_223 = arith.constant 0 : index
    %c0_224 = arith.constant 0 : index
    %c88_225 = arith.constant 88 : index
    %788 = vector.load %arg28[%c0_223, %c0_224, %c88_225] : memref<1x96x128xf32, #tpu.memory_space<vmem>>, vector<1x8x32xf32>
    %789 = vector.shape_cast %788 : vector<1x8x32xf32> to vector<8x32xf32>
    %790 = vector.shape_cast %787 : vector<8x32xf32> to vector<1x8x32xf32>
    tpu.vector_store %arg28[%c0_223, %c0_224, %c88_225], %790 {strides = array<i32>} : memref<1x96x128xf32, #tpu.memory_space<vmem>>, vector<1x8x32xf32>,
    %791 = vector.extract_strided_slice %752 {offsets = [8, 0], sizes = [8, 32], strides = [1, 1]} : vector<96x32xf32> to vector<8x32xf32>
    %792 = arith.truncf %787 : vector<8x32xf32> to vector<8x32xbf16>
    %cst_226 = arith.constant dense<0.000000e+00> : vector<8x32xf32>
    %793 = tpu.matmul %792, %757, %cst_226 {dimension_numbers = #tpu.dot_dimension_numbers<[1], [0], [0], [1], [0, 0, 1, 1], [], []>} : vector<8x32xbf16>, vector<32x32xbf16>, vector<8x32xf32> -> vector<8x32xf32>
    %794 = arith.addf %791, %793 : vector<8x32xf32>
    %795 = vector.broadcast %754 : vector<1x32xf32> to vector<8x32xf32>
    %796 = arith.mulf %795, %772 : vector<8x32xf32>
    %797 = vector.broadcast %755 : vector<1x32xf32> to vector<8x32xf32>
    %798 = arith.mulf %797, %783 : vector<8x32xf32>
    %799 = arith.addf %796, %798 : vector<8x32xf32>
    %800 = vector.broadcast %756 : vector<1x32xf32> to vector<8x32xf32>
    %801 = arith.mulf %800, %787 : vector<8x32xf32>
    %802 = arith.addf %799, %801 : vector<8x32xf32>
    %cst_227 = arith.constant 1.000000e+00 : f32
    %803 = vector.broadcast %cst_227 : f32 to vector<8x32xf32>
    %804 = arith.mulf %803, %787 : vector<8x32xf32>
    %805 = arith.subf %783, %804 : vector<8x32xf32>
    %806 = vector.broadcast %753 : vector<1x32xf32> to vector<8x32xf32>
    %807 = arith.mulf %806, %805 : vector<8x32xf32>
    %cst_228 = arith.constant 1.000000e+00 : f32
    %808 = vector.broadcast %cst_228 : f32 to vector<1x32xf32>
    %809 = arith.subf %808, %753 : vector<1x32xf32>
    %810 = arith.subf %794, %802 : vector<8x32xf32>
    %811 = vector.broadcast %809 : vector<1x32xf32> to vector<8x32xf32>
    %812 = arith.mulf %811, %810 : vector<8x32xf32>
    %813 = arith.addf %807, %812 : vector<8x32xf32>
    %cst_229 = arith.constant 1.000000e+00 : f32
    %814 = vector.broadcast %cst_229 : f32 to vector<8x32xf32>
    %815 = arith.cmpf ogt, %813, %814 : vector<8x32xf32>
    %816 = arith.extui %815 : vector<8x32xi1> to vector<8x32xi32>
    %817 = arith.sitofp %816 : vector<8x32xi32> to vector<8x32xf32>
    %c0_230 = arith.constant 0 : index
    %c8_231 = arith.constant 8 : index
    %c88_232 = arith.constant 88 : index
    %818 = vector.load %arg28[%c0_230, %c8_231, %c88_232] : memref<1x96x128xf32, #tpu.memory_space<vmem>>, vector<1x8x32xf32>
    %819 = vector.shape_cast %818 : vector<1x8x32xf32> to vector<8x32xf32>
    %820 = vector.shape_cast %817 : vector<8x32xf32> to vector<1x8x32xf32>
    tpu.vector_store %arg28[%c0_230, %c8_231, %c88_232], %820 {strides = array<i32>} : memref<1x96x128xf32, #tpu.memory_space<vmem>>, vector<1x8x32xf32>,
    %821 = vector.extract_strided_slice %752 {offsets = [16, 0], sizes = [8, 32], strides = [1, 1]} : vector<96x32xf32> to vector<8x32xf32>
    %822 = arith.truncf %817 : vector<8x32xf32> to vector<8x32xbf16>
    %cst_233 = arith.constant dense<0.000000e+00> : vector<8x32xf32>
    %823 = tpu.matmul %822, %757, %cst_233 {dimension_numbers = #tpu.dot_dimension_numbers<[1], [0], [0], [1], [0, 0, 1, 1], [], []>} : vector<8x32xbf16>, vector<32x32xbf16>, vector<8x32xf32> -> vector<8x32xf32>
    %824 = arith.addf %821, %823 : vector<8x32xf32>
    %825 = vector.broadcast %754 : vector<1x32xf32> to vector<8x32xf32>
    %826 = arith.mulf %825, %802 : vector<8x32xf32>
    %827 = vector.broadcast %755 : vector<1x32xf32> to vector<8x32xf32>
    %828 = arith.mulf %827, %813 : vector<8x32xf32>
    %829 = arith.addf %826, %828 : vector<8x32xf32>
    %830 = vector.broadcast %756 : vector<1x32xf32> to vector<8x32xf32>
    %831 = arith.mulf %830, %817 : vector<8x32xf32>
    %832 = arith.addf %829, %831 : vector<8x32xf32>
    %cst_234 = arith.constant 1.000000e+00 : f32
    %833 = vector.broadcast %cst_234 : f32 to vector<8x32xf32>
    %834 = arith.mulf %833, %817 : vector<8x32xf32>
    %835 = arith.subf %813, %834 : vector<8x32xf32>
    %836 = vector.broadcast %753 : vector<1x32xf32> to vector<8x32xf32>
    %837 = arith.mulf %836, %835 : vector<8x32xf32>
    %cst_235 = arith.constant 1.000000e+00 : f32
    %838 = vector.broadcast %cst_235 : f32 to vector<1x32xf32>
    %839 = arith.subf %838, %753 : vector<1x32xf32>
    %840 = arith.subf %824, %832 : vector<8x32xf32>
    %841 = vector.broadcast %839 : vector<1x32xf32> to vector<8x32xf32>
    %842 = arith.mulf %841, %840 : vector<8x32xf32>
    %843 = arith.addf %837, %842 : vector<8x32xf32>
    %cst_236 = arith.constant 1.000000e+00 : f32
    %844 = vector.broadcast %cst_236 : f32 to vector<8x32xf32>
    %845 = arith.cmpf ogt, %843, %844 : vector<8x32xf32>
    %846 = arith.extui %845 : vector<8x32xi1> to vector<8x32xi32>
    %847 = arith.sitofp %846 : vector<8x32xi32> to vector<8x32xf32>
    %c0_237 = arith.constant 0 : index
    %c16_238 = arith.constant 16 : index
    %c88_239 = arith.constant 88 : index
    %848 = vector.load %arg28[%c0_237, %c16_238, %c88_239] : memref<1x96x128xf32, #tpu.memory_space<vmem>>, vector<1x8x32xf32>
    %849 = vector.shape_cast %848 : vector<1x8x32xf32> to vector<8x32xf32>
    %850 = vector.shape_cast %847 : vector<8x32xf32> to vector<1x8x32xf32>
    tpu.vector_store %arg28[%c0_237, %c16_238, %c88_239], %850 {strides = array<i32>} : memref<1x96x128xf32, #tpu.memory_space<vmem>>, vector<1x8x32xf32>,
    %851 = vector.extract_strided_slice %752 {offsets = [24, 0], sizes = [8, 32], strides = [1, 1]} : vector<96x32xf32> to vector<8x32xf32>
    %852 = arith.truncf %847 : vector<8x32xf32> to vector<8x32xbf16>
    %cst_240 = arith.constant dense<0.000000e+00> : vector<8x32xf32>
    %853 = tpu.matmul %852, %757, %cst_240 {dimension_numbers = #tpu.dot_dimension_numbers<[1], [0], [0], [1], [0, 0, 1, 1], [], []>} : vector<8x32xbf16>, vector<32x32xbf16>, vector<8x32xf32> -> vector<8x32xf32>
    %854 = arith.addf %851, %853 : vector<8x32xf32>
    %855 = vector.broadcast %754 : vector<1x32xf32> to vector<8x32xf32>
    %856 = arith.mulf %855, %832 : vector<8x32xf32>
    %857 = vector.broadcast %755 : vector<1x32xf32> to vector<8x32xf32>
    %858 = arith.mulf %857, %843 : vector<8x32xf32>
    %859 = arith.addf %856, %858 : vector<8x32xf32>
    %860 = vector.broadcast %756 : vector<1x32xf32> to vector<8x32xf32>
    %861 = arith.mulf %860, %847 : vector<8x32xf32>
    %862 = arith.addf %859, %861 : vector<8x32xf32>
    %cst_241 = arith.constant 1.000000e+00 : f32
    %863 = vector.broadcast %cst_241 : f32 to vector<8x32xf32>
    %864 = arith.mulf %863, %847 : vector<8x32xf32>
    %865 = arith.subf %843, %864 : vector<8x32xf32>
    %866 = vector.broadcast %753 : vector<1x32xf32> to vector<8x32xf32>
    %867 = arith.mulf %866, %865 : vector<8x32xf32>
    %cst_242 = arith.constant 1.000000e+00 : f32
    %868 = vector.broadcast %cst_242 : f32 to vector<1x32xf32>
    %869 = arith.subf %868, %753 : vector<1x32xf32>
    %870 = arith.subf %854, %862 : vector<8x32xf32>
    %871 = vector.broadcast %869 : vector<1x32xf32> to vector<8x32xf32>
    %872 = arith.mulf %871, %870 : vector<8x32xf32>
    %873 = arith.addf %867, %872 : vector<8x32xf32>
    %cst_243 = arith.constant 1.000000e+00 : f32
    %874 = vector.broadcast %cst_243 : f32 to vector<8x32xf32>
    %875 = arith.cmpf ogt, %873, %874 : vector<8x32xf32>
    %876 = arith.extui %875 : vector<8x32xi1> to vector<8x32xi32>
    %877 = arith.sitofp %876 : vector<8x32xi32> to vector<8x32xf32>
    %c0_244 = arith.constant 0 : index
    %c24_245 = arith.constant 24 : index
    %c88_246 = arith.constant 88 : index
    %878 = vector.load %arg28[%c0_244, %c24_245, %c88_246] : memref<1x96x128xf32, #tpu.memory_space<vmem>>, vector<1x8x32xf32>
    %879 = vector.shape_cast %878 : vector<1x8x32xf32> to vector<8x32xf32>
    %880 = vector.shape_cast %877 : vector<8x32xf32> to vector<1x8x32xf32>
    tpu.vector_store %arg28[%c0_244, %c24_245, %c88_246], %880 {strides = array<i32>} : memref<1x96x128xf32, #tpu.memory_space<vmem>>, vector<1x8x32xf32>,
    %881 = vector.extract_strided_slice %752 {offsets = [32, 0], sizes = [8, 32], strides = [1, 1]} : vector<96x32xf32> to vector<8x32xf32>
    %882 = arith.truncf %877 : vector<8x32xf32> to vector<8x32xbf16>
    %cst_247 = arith.constant dense<0.000000e+00> : vector<8x32xf32>
    %883 = tpu.matmul %882, %757, %cst_247 {dimension_numbers = #tpu.dot_dimension_numbers<[1], [0], [0], [1], [0, 0, 1, 1], [], []>} : vector<8x32xbf16>, vector<32x32xbf16>, vector<8x32xf32> -> vector<8x32xf32>
    %884 = arith.addf %881, %883 : vector<8x32xf32>
    %885 = vector.broadcast %754 : vector<1x32xf32> to vector<8x32xf32>
    %886 = arith.mulf %885, %862 : vector<8x32xf32>
    %887 = vector.broadcast %755 : vector<1x32xf32> to vector<8x32xf32>
    %888 = arith.mulf %887, %873 : vector<8x32xf32>
    %889 = arith.addf %886, %888 : vector<8x32xf32>
    %890 = vector.broadcast %756 : vector<1x32xf32> to vector<8x32xf32>
    %891 = arith.mulf %890, %877 : vector<8x32xf32>
    %892 = arith.addf %889, %891 : vector<8x32xf32>
    %cst_248 = arith.constant 1.000000e+00 : f32
    %893 = vector.broadcast %cst_248 : f32 to vector<8x32xf32>
    %894 = arith.mulf %893, %877 : vector<8x32xf32>
    %895 = arith.subf %873, %894 : vector<8x32xf32>
    %896 = vector.broadcast %753 : vector<1x32xf32> to vector<8x32xf32>
    %897 = arith.mulf %896, %895 : vector<8x32xf32>
    %cst_249 = arith.constant 1.000000e+00 : f32
    %898 = vector.broadcast %cst_249 : f32 to vector<1x32xf32>
    %899 = arith.subf %898, %753 : vector<1x32xf32>
    %900 = arith.subf %884, %892 : vector<8x32xf32>
    %901 = vector.broadcast %899 : vector<1x32xf32> to vector<8x32xf32>
    %902 = arith.mulf %901, %900 : vector<8x32xf32>
    %903 = arith.addf %897, %902 : vector<8x32xf32>
    %cst_250 = arith.constant 1.000000e+00 : f32
    %904 = vector.broadcast %cst_250 : f32 to vector<8x32xf32>
    %905 = arith.cmpf ogt, %903, %904 : vector<8x32xf32>
    %906 = arith.extui %905 : vector<8x32xi1> to vector<8x32xi32>
    %907 = arith.sitofp %906 : vector<8x32xi32> to vector<8x32xf32>
    %c0_251 = arith.constant 0 : index
    %c32_252 = arith.constant 32 : index
    %c88_253 = arith.constant 88 : index
    %908 = vector.load %arg28[%c0_251, %c32_252, %c88_253] : memref<1x96x128xf32, #tpu.memory_space<vmem>>, vector<1x8x32xf32>
    %909 = vector.shape_cast %908 : vector<1x8x32xf32> to vector<8x32xf32>
    %910 = vector.shape_cast %907 : vector<8x32xf32> to vector<1x8x32xf32>
    tpu.vector_store %arg28[%c0_251, %c32_252, %c88_253], %910 {strides = array<i32>} : memref<1x96x128xf32, #tpu.memory_space<vmem>>, vector<1x8x32xf32>,
    %911 = vector.extract_strided_slice %752 {offsets = [40, 0], sizes = [8, 32], strides = [1, 1]} : vector<96x32xf32> to vector<8x32xf32>
    %912 = arith.truncf %907 : vector<8x32xf32> to vector<8x32xbf16>
    %cst_254 = arith.constant dense<0.000000e+00> : vector<8x32xf32>
    %913 = tpu.matmul %912, %757, %cst_254 {dimension_numbers = #tpu.dot_dimension_numbers<[1], [0], [0], [1], [0, 0, 1, 1], [], []>} : vector<8x32xbf16>, vector<32x32xbf16>, vector<8x32xf32> -> vector<8x32xf32>
    %914 = arith.addf %911, %913 : vector<8x32xf32>
    %915 = vector.broadcast %754 : vector<1x32xf32> to vector<8x32xf32>
    %916 = arith.mulf %915, %892 : vector<8x32xf32>
    %917 = vector.broadcast %755 : vector<1x32xf32> to vector<8x32xf32>
    %918 = arith.mulf %917, %903 : vector<8x32xf32>
    %919 = arith.addf %916, %918 : vector<8x32xf32>
    %920 = vector.broadcast %756 : vector<1x32xf32> to vector<8x32xf32>
    %921 = arith.mulf %920, %907 : vector<8x32xf32>
    %922 = arith.addf %919, %921 : vector<8x32xf32>
    %cst_255 = arith.constant 1.000000e+00 : f32
    %923 = vector.broadcast %cst_255 : f32 to vector<8x32xf32>
    %924 = arith.mulf %923, %907 : vector<8x32xf32>
    %925 = arith.subf %903, %924 : vector<8x32xf32>
    %926 = vector.broadcast %753 : vector<1x32xf32> to vector<8x32xf32>
    %927 = arith.mulf %926, %925 : vector<8x32xf32>
    %cst_256 = arith.constant 1.000000e+00 : f32
    %928 = vector.broadcast %cst_256 : f32 to vector<1x32xf32>
    %929 = arith.subf %928, %753 : vector<1x32xf32>
    %930 = arith.subf %914, %922 : vector<8x32xf32>
    %931 = vector.broadcast %929 : vector<1x32xf32> to vector<8x32xf32>
    %932 = arith.mulf %931, %930 : vector<8x32xf32>
    %933 = arith.addf %927, %932 : vector<8x32xf32>
    %cst_257 = arith.constant 1.000000e+00 : f32
    %934 = vector.broadcast %cst_257 : f32 to vector<8x32xf32>
    %935 = arith.cmpf ogt, %933, %934 : vector<8x32xf32>
    %936 = arith.extui %935 : vector<8x32xi1> to vector<8x32xi32>
    %937 = arith.sitofp %936 : vector<8x32xi32> to vector<8x32xf32>
    %c0_258 = arith.constant 0 : index
    %c40_259 = arith.constant 40 : index
    %c88_260 = arith.constant 88 : index
    %938 = vector.load %arg28[%c0_258, %c40_259, %c88_260] : memref<1x96x128xf32, #tpu.memory_space<vmem>>, vector<1x8x32xf32>
    %939 = vector.shape_cast %938 : vector<1x8x32xf32> to vector<8x32xf32>
    %940 = vector.shape_cast %937 : vector<8x32xf32> to vector<1x8x32xf32>
    tpu.vector_store %arg28[%c0_258, %c40_259, %c88_260], %940 {strides = array<i32>} : memref<1x96x128xf32, #tpu.memory_space<vmem>>, vector<1x8x32xf32>,
    %941 = vector.extract_strided_slice %752 {offsets = [48, 0], sizes = [8, 32], strides = [1, 1]} : vector<96x32xf32> to vector<8x32xf32>
    %942 = arith.truncf %937 : vector<8x32xf32> to vector<8x32xbf16>
    %cst_261 = arith.constant dense<0.000000e+00> : vector<8x32xf32>
    %943 = tpu.matmul %942, %757, %cst_261 {dimension_numbers = #tpu.dot_dimension_numbers<[1], [0], [0], [1], [0, 0, 1, 1], [], []>} : vector<8x32xbf16>, vector<32x32xbf16>, vector<8x32xf32> -> vector<8x32xf32>
    %944 = arith.addf %941, %943 : vector<8x32xf32>
    %945 = vector.broadcast %754 : vector<1x32xf32> to vector<8x32xf32>
    %946 = arith.mulf %945, %922 : vector<8x32xf32>
    %947 = vector.broadcast %755 : vector<1x32xf32> to vector<8x32xf32>
    %948 = arith.mulf %947, %933 : vector<8x32xf32>
    %949 = arith.addf %946, %948 : vector<8x32xf32>
    %950 = vector.broadcast %756 : vector<1x32xf32> to vector<8x32xf32>
    %951 = arith.mulf %950, %937 : vector<8x32xf32>
    %952 = arith.addf %949, %951 : vector<8x32xf32>
    %cst_262 = arith.constant 1.000000e+00 : f32
    %953 = vector.broadcast %cst_262 : f32 to vector<8x32xf32>
    %954 = arith.mulf %953, %937 : vector<8x32xf32>
    %955 = arith.subf %933, %954 : vector<8x32xf32>
    %956 = vector.broadcast %753 : vector<1x32xf32> to vector<8x32xf32>
    %957 = arith.mulf %956, %955 : vector<8x32xf32>
    %cst_263 = arith.constant 1.000000e+00 : f32
    %958 = vector.broadcast %cst_263 : f32 to vector<1x32xf32>
    %959 = arith.subf %958, %753 : vector<1x32xf32>
    %960 = arith.subf %944, %952 : vector<8x32xf32>
    %961 = vector.broadcast %959 : vector<1x32xf32> to vector<8x32xf32>
    %962 = arith.mulf %961, %960 : vector<8x32xf32>
    %963 = arith.addf %957, %962 : vector<8x32xf32>
    %cst_264 = arith.constant 1.000000e+00 : f32
    %964 = vector.broadcast %cst_264 : f32 to vector<8x32xf32>
    %965 = arith.cmpf ogt, %963, %964 : vector<8x32xf32>
    %966 = arith.extui %965 : vector<8x32xi1> to vector<8x32xi32>
    %967 = arith.sitofp %966 : vector<8x32xi32> to vector<8x32xf32>
    %c0_265 = arith.constant 0 : index
    %c48_266 = arith.constant 48 : index
    %c88_267 = arith.constant 88 : index
    %968 = vector.load %arg28[%c0_265, %c48_266, %c88_267] : memref<1x96x128xf32, #tpu.memory_space<vmem>>, vector<1x8x32xf32>
    %969 = vector.shape_cast %968 : vector<1x8x32xf32> to vector<8x32xf32>
    %970 = vector.shape_cast %967 : vector<8x32xf32> to vector<1x8x32xf32>
    tpu.vector_store %arg28[%c0_265, %c48_266, %c88_267], %970 {strides = array<i32>} : memref<1x96x128xf32, #tpu.memory_space<vmem>>, vector<1x8x32xf32>,
    %971 = vector.extract_strided_slice %752 {offsets = [56, 0], sizes = [8, 32], strides = [1, 1]} : vector<96x32xf32> to vector<8x32xf32>
    %972 = arith.truncf %967 : vector<8x32xf32> to vector<8x32xbf16>
    %cst_268 = arith.constant dense<0.000000e+00> : vector<8x32xf32>
    %973 = tpu.matmul %972, %757, %cst_268 {dimension_numbers = #tpu.dot_dimension_numbers<[1], [0], [0], [1], [0, 0, 1, 1], [], []>} : vector<8x32xbf16>, vector<32x32xbf16>, vector<8x32xf32> -> vector<8x32xf32>
    %974 = arith.addf %971, %973 : vector<8x32xf32>
    %975 = vector.broadcast %754 : vector<1x32xf32> to vector<8x32xf32>
    %976 = arith.mulf %975, %952 : vector<8x32xf32>
    %977 = vector.broadcast %755 : vector<1x32xf32> to vector<8x32xf32>
    %978 = arith.mulf %977, %963 : vector<8x32xf32>
    %979 = arith.addf %976, %978 : vector<8x32xf32>
    %980 = vector.broadcast %756 : vector<1x32xf32> to vector<8x32xf32>
    %981 = arith.mulf %980, %967 : vector<8x32xf32>
    %982 = arith.addf %979, %981 : vector<8x32xf32>
    %cst_269 = arith.constant 1.000000e+00 : f32
    %983 = vector.broadcast %cst_269 : f32 to vector<8x32xf32>
    %984 = arith.mulf %983, %967 : vector<8x32xf32>
    %985 = arith.subf %963, %984 : vector<8x32xf32>
    %986 = vector.broadcast %753 : vector<1x32xf32> to vector<8x32xf32>
    %987 = arith.mulf %986, %985 : vector<8x32xf32>
    %cst_270 = arith.constant 1.000000e+00 : f32
    %988 = vector.broadcast %cst_270 : f32 to vector<1x32xf32>
    %989 = arith.subf %988, %753 : vector<1x32xf32>
    %990 = arith.subf %974, %982 : vector<8x32xf32>
    %991 = vector.broadcast %989 : vector<1x32xf32> to vector<8x32xf32>
    %992 = arith.mulf %991, %990 : vector<8x32xf32>
    %993 = arith.addf %987, %992 : vector<8x32xf32>
    %cst_271 = arith.constant 1.000000e+00 : f32
    %994 = vector.broadcast %cst_271 : f32 to vector<8x32xf32>
    %995 = arith.cmpf ogt, %993, %994 : vector<8x32xf32>
    %996 = arith.extui %995 : vector<8x32xi1> to vector<8x32xi32>
    %997 = arith.sitofp %996 : vector<8x32xi32> to vector<8x32xf32>
    %c0_272 = arith.constant 0 : index
    %c56_273 = arith.constant 56 : index
    %c88_274 = arith.constant 88 : index
    %998 = vector.load %arg28[%c0_272, %c56_273, %c88_274] : memref<1x96x128xf32, #tpu.memory_space<vmem>>, vector<1x8x32xf32>
    %999 = vector.shape_cast %998 : vector<1x8x32xf32> to vector<8x32xf32>
    %1000 = vector.shape_cast %997 : vector<8x32xf32> to vector<1x8x32xf32>
    tpu.vector_store %arg28[%c0_272, %c56_273, %c88_274], %1000 {strides = array<i32>} : memref<1x96x128xf32, #tpu.memory_space<vmem>>, vector<1x8x32xf32>,
    %1001 = vector.extract_strided_slice %752 {offsets = [64, 0], sizes = [8, 32], strides = [1, 1]} : vector<96x32xf32> to vector<8x32xf32>
    %1002 = arith.truncf %997 : vector<8x32xf32> to vector<8x32xbf16>
    %cst_275 = arith.constant dense<0.000000e+00> : vector<8x32xf32>
    %1003 = tpu.matmul %1002, %757, %cst_275 {dimension_numbers = #tpu.dot_dimension_numbers<[1], [0], [0], [1], [0, 0, 1, 1], [], []>} : vector<8x32xbf16>, vector<32x32xbf16>, vector<8x32xf32> -> vector<8x32xf32>
    %1004 = arith.addf %1001, %1003 : vector<8x32xf32>
    %1005 = vector.broadcast %754 : vector<1x32xf32> to vector<8x32xf32>
    %1006 = arith.mulf %1005, %982 : vector<8x32xf32>
    %1007 = vector.broadcast %755 : vector<1x32xf32> to vector<8x32xf32>
    %1008 = arith.mulf %1007, %993 : vector<8x32xf32>
    %1009 = arith.addf %1006, %1008 : vector<8x32xf32>
    %1010 = vector.broadcast %756 : vector<1x32xf32> to vector<8x32xf32>
    %1011 = arith.mulf %1010, %997 : vector<8x32xf32>
    %1012 = arith.addf %1009, %1011 : vector<8x32xf32>
    %cst_276 = arith.constant 1.000000e+00 : f32
    %1013 = vector.broadcast %cst_276 : f32 to vector<8x32xf32>
    %1014 = arith.mulf %1013, %997 : vector<8x32xf32>
    %1015 = arith.subf %993, %1014 : vector<8x32xf32>
    %1016 = vector.broadcast %753 : vector<1x32xf32> to vector<8x32xf32>
    %1017 = arith.mulf %1016, %1015 : vector<8x32xf32>
    %cst_277 = arith.constant 1.000000e+00 : f32
    %1018 = vector.broadcast %cst_277 : f32 to vector<1x32xf32>
    %1019 = arith.subf %1018, %753 : vector<1x32xf32>
    %1020 = arith.subf %1004, %1012 : vector<8x32xf32>
    %1021 = vector.broadcast %1019 : vector<1x32xf32> to vector<8x32xf32>
    %1022 = arith.mulf %1021, %1020 : vector<8x32xf32>
    %1023 = arith.addf %1017, %1022 : vector<8x32xf32>
    %cst_278 = arith.constant 1.000000e+00 : f32
    %1024 = vector.broadcast %cst_278 : f32 to vector<8x32xf32>
    %1025 = arith.cmpf ogt, %1023, %1024 : vector<8x32xf32>
    %1026 = arith.extui %1025 : vector<8x32xi1> to vector<8x32xi32>
    %1027 = arith.sitofp %1026 : vector<8x32xi32> to vector<8x32xf32>
    %c0_279 = arith.constant 0 : index
    %c64_280 = arith.constant 64 : index
    %c88_281 = arith.constant 88 : index
    %1028 = vector.load %arg28[%c0_279, %c64_280, %c88_281] : memref<1x96x128xf32, #tpu.memory_space<vmem>>, vector<1x8x32xf32>
    %1029 = vector.shape_cast %1028 : vector<1x8x32xf32> to vector<8x32xf32>
    %1030 = vector.shape_cast %1027 : vector<8x32xf32> to vector<1x8x32xf32>
    tpu.vector_store %arg28[%c0_279, %c64_280, %c88_281], %1030 {strides = array<i32>} : memref<1x96x128xf32, #tpu.memory_space<vmem>>, vector<1x8x32xf32>,
    %1031 = vector.extract_strided_slice %752 {offsets = [72, 0], sizes = [8, 32], strides = [1, 1]} : vector<96x32xf32> to vector<8x32xf32>
    %1032 = arith.truncf %1027 : vector<8x32xf32> to vector<8x32xbf16>
    %cst_282 = arith.constant dense<0.000000e+00> : vector<8x32xf32>
    %1033 = tpu.matmul %1032, %757, %cst_282 {dimension_numbers = #tpu.dot_dimension_numbers<[1], [0], [0], [1], [0, 0, 1, 1], [], []>} : vector<8x32xbf16>, vector<32x32xbf16>, vector<8x32xf32> -> vector<8x32xf32>
    %1034 = arith.addf %1031, %1033 : vector<8x32xf32>
    %1035 = vector.broadcast %754 : vector<1x32xf32> to vector<8x32xf32>
    %1036 = arith.mulf %1035, %1012 : vector<8x32xf32>
    %1037 = vector.broadcast %755 : vector<1x32xf32> to vector<8x32xf32>
    %1038 = arith.mulf %1037, %1023 : vector<8x32xf32>
    %1039 = arith.addf %1036, %1038 : vector<8x32xf32>
    %1040 = vector.broadcast %756 : vector<1x32xf32> to vector<8x32xf32>
    %1041 = arith.mulf %1040, %1027 : vector<8x32xf32>
    %1042 = arith.addf %1039, %1041 : vector<8x32xf32>
    %cst_283 = arith.constant 1.000000e+00 : f32
    %1043 = vector.broadcast %cst_283 : f32 to vector<8x32xf32>
    %1044 = arith.mulf %1043, %1027 : vector<8x32xf32>
    %1045 = arith.subf %1023, %1044 : vector<8x32xf32>
    %1046 = vector.broadcast %753 : vector<1x32xf32> to vector<8x32xf32>
    %1047 = arith.mulf %1046, %1045 : vector<8x32xf32>
    %cst_284 = arith.constant 1.000000e+00 : f32
    %1048 = vector.broadcast %cst_284 : f32 to vector<1x32xf32>
    %1049 = arith.subf %1048, %753 : vector<1x32xf32>
    %1050 = arith.subf %1034, %1042 : vector<8x32xf32>
    %1051 = vector.broadcast %1049 : vector<1x32xf32> to vector<8x32xf32>
    %1052 = arith.mulf %1051, %1050 : vector<8x32xf32>
    %1053 = arith.addf %1047, %1052 : vector<8x32xf32>
    %cst_285 = arith.constant 1.000000e+00 : f32
    %1054 = vector.broadcast %cst_285 : f32 to vector<8x32xf32>
    %1055 = arith.cmpf ogt, %1053, %1054 : vector<8x32xf32>
    %1056 = arith.extui %1055 : vector<8x32xi1> to vector<8x32xi32>
    %1057 = arith.sitofp %1056 : vector<8x32xi32> to vector<8x32xf32>
    %c0_286 = arith.constant 0 : index
    %c72_287 = arith.constant 72 : index
    %c88_288 = arith.constant 88 : index
    %1058 = vector.load %arg28[%c0_286, %c72_287, %c88_288] : memref<1x96x128xf32, #tpu.memory_space<vmem>>, vector<1x8x32xf32>
    %1059 = vector.shape_cast %1058 : vector<1x8x32xf32> to vector<8x32xf32>
    %1060 = vector.shape_cast %1057 : vector<8x32xf32> to vector<1x8x32xf32>
    tpu.vector_store %arg28[%c0_286, %c72_287, %c88_288], %1060 {strides = array<i32>} : memref<1x96x128xf32, #tpu.memory_space<vmem>>, vector<1x8x32xf32>,
    %1061 = vector.extract_strided_slice %752 {offsets = [80, 0], sizes = [8, 32], strides = [1, 1]} : vector<96x32xf32> to vector<8x32xf32>
    %1062 = arith.truncf %1057 : vector<8x32xf32> to vector<8x32xbf16>
    %cst_289 = arith.constant dense<0.000000e+00> : vector<8x32xf32>
    %1063 = tpu.matmul %1062, %757, %cst_289 {dimension_numbers = #tpu.dot_dimension_numbers<[1], [0], [0], [1], [0, 0, 1, 1], [], []>} : vector<8x32xbf16>, vector<32x32xbf16>, vector<8x32xf32> -> vector<8x32xf32>
    %1064 = arith.addf %1061, %1063 : vector<8x32xf32>
    %1065 = vector.broadcast %754 : vector<1x32xf32> to vector<8x32xf32>
    %1066 = arith.mulf %1065, %1042 : vector<8x32xf32>
    %1067 = vector.broadcast %755 : vector<1x32xf32> to vector<8x32xf32>
    %1068 = arith.mulf %1067, %1053 : vector<8x32xf32>
    %1069 = arith.addf %1066, %1068 : vector<8x32xf32>
    %1070 = vector.broadcast %756 : vector<1x32xf32> to vector<8x32xf32>
    %1071 = arith.mulf %1070, %1057 : vector<8x32xf32>
    %1072 = arith.addf %1069, %1071 : vector<8x32xf32>
    %cst_290 = arith.constant 1.000000e+00 : f32
    %1073 = vector.broadcast %cst_290 : f32 to vector<8x32xf32>
    %1074 = arith.mulf %1073, %1057 : vector<8x32xf32>
    %1075 = arith.subf %1053, %1074 : vector<8x32xf32>
    %1076 = vector.broadcast %753 : vector<1x32xf32> to vector<8x32xf32>
    %1077 = arith.mulf %1076, %1075 : vector<8x32xf32>
    %cst_291 = arith.constant 1.000000e+00 : f32
    %1078 = vector.broadcast %cst_291 : f32 to vector<1x32xf32>
    %1079 = arith.subf %1078, %753 : vector<1x32xf32>
    %1080 = arith.subf %1064, %1072 : vector<8x32xf32>
    %1081 = vector.broadcast %1079 : vector<1x32xf32> to vector<8x32xf32>
    %1082 = arith.mulf %1081, %1080 : vector<8x32xf32>
    %1083 = arith.addf %1077, %1082 : vector<8x32xf32>
    %cst_292 = arith.constant 1.000000e+00 : f32
    %1084 = vector.broadcast %cst_292 : f32 to vector<8x32xf32>
    %1085 = arith.cmpf ogt, %1083, %1084 : vector<8x32xf32>
    %1086 = arith.extui %1085 : vector<8x32xi1> to vector<8x32xi32>
    %1087 = arith.sitofp %1086 : vector<8x32xi32> to vector<8x32xf32>
    %c0_293 = arith.constant 0 : index
    %c80_294 = arith.constant 80 : index
    %c88_295 = arith.constant 88 : index
    %1088 = vector.load %arg28[%c0_293, %c80_294, %c88_295] : memref<1x96x128xf32, #tpu.memory_space<vmem>>, vector<1x8x32xf32>
    %1089 = vector.shape_cast %1088 : vector<1x8x32xf32> to vector<8x32xf32>
    %1090 = vector.shape_cast %1087 : vector<8x32xf32> to vector<1x8x32xf32>
    tpu.vector_store %arg28[%c0_293, %c80_294, %c88_295], %1090 {strides = array<i32>} : memref<1x96x128xf32, #tpu.memory_space<vmem>>, vector<1x8x32xf32>,
    %1091 = vector.extract_strided_slice %752 {offsets = [88, 0], sizes = [8, 32], strides = [1, 1]} : vector<96x32xf32> to vector<8x32xf32>
    %1092 = arith.truncf %1087 : vector<8x32xf32> to vector<8x32xbf16>
    %cst_296 = arith.constant dense<0.000000e+00> : vector<8x32xf32>
    %1093 = tpu.matmul %1092, %757, %cst_296 {dimension_numbers = #tpu.dot_dimension_numbers<[1], [0], [0], [1], [0, 0, 1, 1], [], []>} : vector<8x32xbf16>, vector<32x32xbf16>, vector<8x32xf32> -> vector<8x32xf32>
    %1094 = arith.addf %1091, %1093 : vector<8x32xf32>
    %1095 = vector.broadcast %754 : vector<1x32xf32> to vector<8x32xf32>
    %1096 = arith.mulf %1095, %1072 : vector<8x32xf32>
    %1097 = vector.broadcast %755 : vector<1x32xf32> to vector<8x32xf32>
    %1098 = arith.mulf %1097, %1083 : vector<8x32xf32>
    %1099 = arith.addf %1096, %1098 : vector<8x32xf32>
    %1100 = vector.broadcast %756 : vector<1x32xf32> to vector<8x32xf32>
    %1101 = arith.mulf %1100, %1087 : vector<8x32xf32>
    %1102 = arith.addf %1099, %1101 : vector<8x32xf32>
    %cst_297 = arith.constant 1.000000e+00 : f32
    %1103 = vector.broadcast %cst_297 : f32 to vector<8x32xf32>
    %1104 = arith.mulf %1103, %1087 : vector<8x32xf32>
    %1105 = arith.subf %1083, %1104 : vector<8x32xf32>
    %1106 = vector.broadcast %753 : vector<1x32xf32> to vector<8x32xf32>
    %1107 = arith.mulf %1106, %1105 : vector<8x32xf32>
    %cst_298 = arith.constant 1.000000e+00 : f32
    %1108 = vector.broadcast %cst_298 : f32 to vector<1x32xf32>
    %1109 = arith.subf %1108, %753 : vector<1x32xf32>
    %1110 = arith.subf %1094, %1102 : vector<8x32xf32>
    %1111 = vector.broadcast %1109 : vector<1x32xf32> to vector<8x32xf32>
    %1112 = arith.mulf %1111, %1110 : vector<8x32xf32>
    %1113 = arith.addf %1107, %1112 : vector<8x32xf32>
    %cst_299 = arith.constant 1.000000e+00 : f32
    %1114 = vector.broadcast %cst_299 : f32 to vector<8x32xf32>
    %1115 = arith.cmpf ogt, %1113, %1114 : vector<8x32xf32>
    %1116 = arith.extui %1115 : vector<8x32xi1> to vector<8x32xi32>
    %1117 = arith.sitofp %1116 : vector<8x32xi32> to vector<8x32xf32>
    %c0_300 = arith.constant 0 : index
    %c88_301 = arith.constant 88 : index
    %c88_302 = arith.constant 88 : index
    %1118 = vector.load %arg28[%c0_300, %c88_301, %c88_302] : memref<1x96x128xf32, #tpu.memory_space<vmem>>, vector<1x8x32xf32>
    %1119 = vector.shape_cast %1118 : vector<1x8x32xf32> to vector<8x32xf32>
    %1120 = vector.shape_cast %1117 : vector<8x32xf32> to vector<1x8x32xf32>
    tpu.vector_store %arg28[%c0_300, %c88_301, %c88_302], %1120 {strides = array<i32>} : memref<1x96x128xf32, #tpu.memory_space<vmem>>, vector<1x8x32xf32>,
    %c0_303 = arith.constant 0 : index
    %c0_304 = arith.constant 0 : index
    %c88_305 = arith.constant 88 : index
    %1121 = vector.load %arg28[%c0_303, %c0_304, %c88_305] : memref<1x96x128xf32, #tpu.memory_space<vmem>>, vector<1x96x32xf32>
    %1122 = vector.shape_cast %1121 : vector<1x96x32xf32> to vector<96x32xf32>
    %1123 = arith.truncf %1122 : vector<96x32xf32> to vector<96x32xbf16>
    %c0_306 = arith.constant 0 : index
    %c0_307 = arith.constant 0 : index
    %1124 = vector.load %arg24[%c0_306, %c0_307] : memref<32x128xbf16, #tpu.memory_space<vmem>>, vector<32x128xbf16>
    %cst_308 = arith.constant dense<0.000000e+00> : vector<96x128xf32>
    %1125 = tpu.matmul %1123, %1124, %cst_308 {dimension_numbers = #tpu.dot_dimension_numbers<[1], [0], [0], [1], [0, 0, 1, 1], [], []>} : vector<96x32xbf16>, vector<32x128xbf16>, vector<96x128xf32> -> vector<96x128xf32>
    %c0_309 = arith.constant 0 : index
    %c0_310 = arith.constant 0 : index
    %1126 = vector.load %arg25[%c0_309, %c0_310] : memref<1x128xf32, #tpu.memory_space<vmem>>, vector<1x128xf32>
    %1127 = vector.broadcast %1126 : vector<1x128xf32> to vector<96x128xf32>
    %1128 = arith.addf %1125, %1127 : vector<96x128xf32>
    %c0_311 = arith.constant 0 : index
    %c0_312 = arith.constant 0 : index
    %1129 = vector.load %arg26[%c0_311, %c0_312] : memref<12x128xf32, #tpu.memory_space<vmem>>, vector<12x128xf32>
    %cst_313 = arith.constant 0.000000e+00 : f32
    %1130 = vector.broadcast %cst_313 : f32 to vector<8x128xf32>
    %1131 = vector.extract_strided_slice %1129 {offsets = [0, 0], sizes = [1, 128], strides = [1, 1]} : vector<12x128xf32> to vector<1x128xf32>
    %1132 = vector.extract_strided_slice %1128 {offsets = [0, 0], sizes = [8, 128], strides = [1, 1]} : vector<96x128xf32> to vector<8x128xf32>
    %1133 = vector.broadcast %1131 : vector<1x128xf32> to vector<8x128xf32>
    %1134 = arith.mulf %1133, %1132 : vector<8x128xf32>
    %1135 = arith.addf %1130, %1134 : vector<8x128xf32>
    %1136 = vector.extract_strided_slice %1129 {offsets = [1, 0], sizes = [1, 128], strides = [1, 1]} : vector<12x128xf32> to vector<1x128xf32>
    %1137 = vector.extract_strided_slice %1128 {offsets = [8, 0], sizes = [8, 128], strides = [1, 1]} : vector<96x128xf32> to vector<8x128xf32>
    %1138 = vector.broadcast %1136 : vector<1x128xf32> to vector<8x128xf32>
    %1139 = arith.mulf %1138, %1137 : vector<8x128xf32>
    %1140 = arith.addf %1135, %1139 : vector<8x128xf32>
    %1141 = vector.extract_strided_slice %1129 {offsets = [2, 0], sizes = [1, 128], strides = [1, 1]} : vector<12x128xf32> to vector<1x128xf32>
    %1142 = vector.extract_strided_slice %1128 {offsets = [16, 0], sizes = [8, 128], strides = [1, 1]} : vector<96x128xf32> to vector<8x128xf32>
    %1143 = vector.broadcast %1141 : vector<1x128xf32> to vector<8x128xf32>
    %1144 = arith.mulf %1143, %1142 : vector<8x128xf32>
    %1145 = arith.addf %1140, %1144 : vector<8x128xf32>
    %1146 = vector.extract_strided_slice %1129 {offsets = [3, 0], sizes = [1, 128], strides = [1, 1]} : vector<12x128xf32> to vector<1x128xf32>
    %1147 = vector.extract_strided_slice %1128 {offsets = [24, 0], sizes = [8, 128], strides = [1, 1]} : vector<96x128xf32> to vector<8x128xf32>
    %1148 = vector.broadcast %1146 : vector<1x128xf32> to vector<8x128xf32>
    %1149 = arith.mulf %1148, %1147 : vector<8x128xf32>
    %1150 = arith.addf %1145, %1149 : vector<8x128xf32>
    %1151 = vector.extract_strided_slice %1129 {offsets = [4, 0], sizes = [1, 128], strides = [1, 1]} : vector<12x128xf32> to vector<1x128xf32>
    %1152 = vector.extract_strided_slice %1128 {offsets = [32, 0], sizes = [8, 128], strides = [1, 1]} : vector<96x128xf32> to vector<8x128xf32>
    %1153 = vector.broadcast %1151 : vector<1x128xf32> to vector<8x128xf32>
    %1154 = arith.mulf %1153, %1152 : vector<8x128xf32>
    %1155 = arith.addf %1150, %1154 : vector<8x128xf32>
    %1156 = vector.extract_strided_slice %1129 {offsets = [5, 0], sizes = [1, 128], strides = [1, 1]} : vector<12x128xf32> to vector<1x128xf32>
    %1157 = vector.extract_strided_slice %1128 {offsets = [40, 0], sizes = [8, 128], strides = [1, 1]} : vector<96x128xf32> to vector<8x128xf32>
    %1158 = vector.broadcast %1156 : vector<1x128xf32> to vector<8x128xf32>
    %1159 = arith.mulf %1158, %1157 : vector<8x128xf32>
    %1160 = arith.addf %1155, %1159 : vector<8x128xf32>
    %1161 = vector.extract_strided_slice %1129 {offsets = [6, 0], sizes = [1, 128], strides = [1, 1]} : vector<12x128xf32> to vector<1x128xf32>
    %1162 = vector.extract_strided_slice %1128 {offsets = [48, 0], sizes = [8, 128], strides = [1, 1]} : vector<96x128xf32> to vector<8x128xf32>
    %1163 = vector.broadcast %1161 : vector<1x128xf32> to vector<8x128xf32>
    %1164 = arith.mulf %1163, %1162 : vector<8x128xf32>
    %1165 = arith.addf %1160, %1164 : vector<8x128xf32>
    %1166 = vector.extract_strided_slice %1129 {offsets = [7, 0], sizes = [1, 128], strides = [1, 1]} : vector<12x128xf32> to vector<1x128xf32>
    %1167 = vector.extract_strided_slice %1128 {offsets = [56, 0], sizes = [8, 128], strides = [1, 1]} : vector<96x128xf32> to vector<8x128xf32>
    %1168 = vector.broadcast %1166 : vector<1x128xf32> to vector<8x128xf32>
    %1169 = arith.mulf %1168, %1167 : vector<8x128xf32>
    %1170 = arith.addf %1165, %1169 : vector<8x128xf32>
    %1171 = vector.extract_strided_slice %1129 {offsets = [8, 0], sizes = [1, 128], strides = [1, 1]} : vector<12x128xf32> to vector<1x128xf32>
    %1172 = vector.extract_strided_slice %1128 {offsets = [64, 0], sizes = [8, 128], strides = [1, 1]} : vector<96x128xf32> to vector<8x128xf32>
    %1173 = vector.broadcast %1171 : vector<1x128xf32> to vector<8x128xf32>
    %1174 = arith.mulf %1173, %1172 : vector<8x128xf32>
    %1175 = arith.addf %1170, %1174 : vector<8x128xf32>
    %1176 = vector.extract_strided_slice %1129 {offsets = [9, 0], sizes = [1, 128], strides = [1, 1]} : vector<12x128xf32> to vector<1x128xf32>
    %1177 = vector.extract_strided_slice %1128 {offsets = [72, 0], sizes = [8, 128], strides = [1, 1]} : vector<96x128xf32> to vector<8x128xf32>
    %1178 = vector.broadcast %1176 : vector<1x128xf32> to vector<8x128xf32>
    %1179 = arith.mulf %1178, %1177 : vector<8x128xf32>
    %1180 = arith.addf %1175, %1179 : vector<8x128xf32>
    %1181 = vector.extract_strided_slice %1129 {offsets = [10, 0], sizes = [1, 128], strides = [1, 1]} : vector<12x128xf32> to vector<1x128xf32>
    %1182 = vector.extract_strided_slice %1128 {offsets = [80, 0], sizes = [8, 128], strides = [1, 1]} : vector<96x128xf32> to vector<8x128xf32>
    %1183 = vector.broadcast %1181 : vector<1x128xf32> to vector<8x128xf32>
    %1184 = arith.mulf %1183, %1182 : vector<8x128xf32>
    %1185 = arith.addf %1180, %1184 : vector<8x128xf32>
    %1186 = vector.extract_strided_slice %1129 {offsets = [11, 0], sizes = [1, 128], strides = [1, 1]} : vector<12x128xf32> to vector<1x128xf32>
    %1187 = vector.extract_strided_slice %1128 {offsets = [88, 0], sizes = [8, 128], strides = [1, 1]} : vector<96x128xf32> to vector<8x128xf32>
    %1188 = vector.broadcast %1186 : vector<1x128xf32> to vector<8x128xf32>
    %1189 = arith.mulf %1188, %1187 : vector<8x128xf32>
    %1190 = arith.addf %1185, %1189 : vector<8x128xf32>
    %cst_314 = arith.constant 0.0833333358 : f32
    %1191 = vector.broadcast %cst_314 : f32 to vector<8x128xf32>
    %1192 = arith.mulf %1190, %1191 : vector<8x128xf32>
    %c0_315 = arith.constant 0 : index
    %c0_316 = arith.constant 0 : index
    %1193 = vector.load %arg27[%c0_315, %c0_316] : memref<8x128xf32, #tpu.memory_space<vmem>>, vector<8x128xf32>
    tpu.vector_store %arg27[%c0_315, %c0_316], %1192 {strides = array<i32>} : memref<8x128xf32, #tpu.memory_space<vmem>>, vector<8x128xf32>,
    return
  }
  func.func @transform_0(%arg0: i32) -> (i32, i32, i32) {
    %c0_i32 = arith.constant 0 : i32
    %c0_i32_0 = arith.constant 0 : i32
    %c0_i32_1 = arith.constant 0 : i32
    return %arg0, %c0_i32, %c0_i32_0 : i32, i32, i32
  }
  func.func @transform_1(%arg0: i32) -> (i32, i32) {
    %c0_i32 = arith.constant 0 : i32
    %c0_i32_0 = arith.constant 0 : i32
    %c0_i32_1 = arith.constant 0 : i32
    return %c0_i32, %c0_i32_0 : i32, i32
  }
  func.func @transform_2(%arg0: i32) -> (i32, i32) {
    %c0_i32 = arith.constant 0 : i32
    %c0_i32_0 = arith.constant 0 : i32
    %c0_i32_1 = arith.constant 0 : i32
    return %c0_i32, %c0_i32_0 : i32, i32
  }
  func.func @transform_3(%arg0: i32) -> (i32, i32) {
    %c0_i32 = arith.constant 0 : i32
    %c0_i32_0 = arith.constant 0 : i32
    %c0_i32_1 = arith.constant 0 : i32
    return %c0_i32, %c0_i32_0 : i32, i32
  }
  func.func @transform_4(%arg0: i32) -> (i32, i32) {
    %c0_i32 = arith.constant 0 : i32
    %c0_i32_0 = arith.constant 0 : i32
    %c0_i32_1 = arith.constant 0 : i32
    return %c0_i32, %c0_i32_0 : i32, i32
  }
  func.func @transform_5(%arg0: i32) -> (i32, i32) {
    %c0_i32 = arith.constant 0 : i32
    %c0_i32_0 = arith.constant 0 : i32
    %c0_i32_1 = arith.constant 0 : i32
    return %c0_i32, %c0_i32_0 : i32, i32
  }
  func.func @transform_6(%arg0: i32) -> (i32, i32) {
    %c0_i32 = arith.constant 0 : i32
    %c0_i32_0 = arith.constant 0 : i32
    %c0_i32_1 = arith.constant 0 : i32
    return %c0_i32, %c0_i32_0 : i32, i32
  }
  func.func @transform_7(%arg0: i32) -> (i32, i32) {
    %c0_i32 = arith.constant 0 : i32
    %c0_i32_0 = arith.constant 0 : i32
    %c0_i32_1 = arith.constant 0 : i32
    return %c0_i32, %c0_i32_0 : i32, i32
  }
  func.func @transform_8(%arg0: i32) -> (i32, i32) {
    %c0_i32 = arith.constant 0 : i32
    %c0_i32_0 = arith.constant 0 : i32
    %c0_i32_1 = arith.constant 0 : i32
    return %c0_i32, %c0_i32_0 : i32, i32
  }
  func.func @transform_9(%arg0: i32) -> (i32, i32) {
    %c0_i32 = arith.constant 0 : i32
    %c0_i32_0 = arith.constant 0 : i32
    %c0_i32_1 = arith.constant 0 : i32
    return %c0_i32, %c0_i32_0 : i32, i32
  }
  func.func @transform_10(%arg0: i32) -> (i32, i32) {
    %c0_i32 = arith.constant 0 : i32
    %c0_i32_0 = arith.constant 0 : i32
    %c0_i32_1 = arith.constant 0 : i32
    return %c0_i32, %c0_i32_0 : i32, i32
  }
  func.func @transform_11(%arg0: i32) -> (i32, i32) {
    %c0_i32 = arith.constant 0 : i32
    %c0_i32_0 = arith.constant 0 : i32
    %c0_i32_1 = arith.constant 0 : i32
    return %c0_i32, %c0_i32_0 : i32, i32
  }
  func.func @transform_12(%arg0: i32) -> (i32, i32) {
    %c0_i32 = arith.constant 0 : i32
    %c0_i32_0 = arith.constant 0 : i32
    %c0_i32_1 = arith.constant 0 : i32
    return %c0_i32, %c0_i32_0 : i32, i32
  }
  func.func @transform_13(%arg0: i32) -> (i32, i32) {
    %c0_i32 = arith.constant 0 : i32
    %c0_i32_0 = arith.constant 0 : i32
    %c0_i32_1 = arith.constant 0 : i32
    return %c0_i32, %c0_i32_0 : i32, i32
  }
  func.func @transform_14(%arg0: i32) -> (i32, i32) {
    %c0_i32 = arith.constant 0 : i32
    %c0_i32_0 = arith.constant 0 : i32
    %c0_i32_1 = arith.constant 0 : i32
    return %c0_i32, %c0_i32_0 : i32, i32
  }
  func.func @transform_15(%arg0: i32) -> (i32, i32) {
    %c0_i32 = arith.constant 0 : i32
    %c0_i32_0 = arith.constant 0 : i32
    %c0_i32_1 = arith.constant 0 : i32
    return %c0_i32, %c0_i32_0 : i32, i32
  }
  func.func @transform_16(%arg0: i32) -> (i32, i32) {
    %c0_i32 = arith.constant 0 : i32
    %c0_i32_0 = arith.constant 0 : i32
    %c0_i32_1 = arith.constant 0 : i32
    return %c0_i32, %c0_i32_0 : i32, i32
  }
  func.func @transform_17(%arg0: i32) -> (i32, i32) {
    %c0_i32 = arith.constant 0 : i32
    %c0_i32_0 = arith.constant 0 : i32
    %c0_i32_1 = arith.constant 0 : i32
    return %c0_i32, %c0_i32_0 : i32, i32
  }
  func.func @transform_18(%arg0: i32) -> (i32, i32) {
    %c0_i32 = arith.constant 0 : i32
    %c0_i32_0 = arith.constant 0 : i32
    %c0_i32_1 = arith.constant 0 : i32
    return %c0_i32, %c0_i32_0 : i32, i32
  }
  func.func @transform_19(%arg0: i32) -> (i32, i32) {
    %c0_i32 = arith.constant 0 : i32
    %c0_i32_0 = arith.constant 0 : i32
    %c0_i32_1 = arith.constant 0 : i32
    return %c0_i32, %c0_i32_0 : i32, i32
  }
  func.func @transform_20(%arg0: i32) -> (i32, i32) {
    %c0_i32 = arith.constant 0 : i32
    %c0_i32_0 = arith.constant 0 : i32
    %c0_i32_1 = arith.constant 0 : i32
    return %c0_i32, %c0_i32_0 : i32, i32
  }
  func.func @transform_21(%arg0: i32) -> (i32, i32) {
    %c0_i32 = arith.constant 0 : i32
    %c0_i32_0 = arith.constant 0 : i32
    %c0_i32_1 = arith.constant 0 : i32
    return %c0_i32, %c0_i32_0 : i32, i32
  }
  func.func @transform_22(%arg0: i32) -> (i32, i32) {
    %c0_i32 = arith.constant 0 : i32
    %c0_i32_0 = arith.constant 0 : i32
    %c0_i32_1 = arith.constant 0 : i32
    return %c0_i32, %c0_i32_0 : i32, i32
  }
  func.func @transform_23(%arg0: i32) -> (i32, i32) {
    %c0_i32 = arith.constant 0 : i32
    %c0_i32_0 = arith.constant 0 : i32
    %c0_i32_1 = arith.constant 0 : i32
    return %c0_i32, %c0_i32_0 : i32, i32
  }
  func.func @transform_24(%arg0: i32) -> (i32, i32) {
    %c0_i32 = arith.constant 0 : i32
    %c0_i32_0 = arith.constant 0 : i32
    %c0_i32_1 = arith.constant 0 : i32
    return %c0_i32, %c0_i32_0 : i32, i32
  }
  func.func @transform_25(%arg0: i32) -> (i32, i32) {
    %c0_i32 = arith.constant 0 : i32
    %c0_i32_0 = arith.constant 0 : i32
    %c0_i32_1 = arith.constant 0 : i32
    return %c0_i32, %c0_i32_0 : i32, i32
  }
  func.func @transform_26(%arg0: i32) -> (i32, i32) {
    %c0_i32 = arith.constant 0 : i32
    %c0_i32_0 = arith.constant 0 : i32
    return %arg0, %c0_i32 : i32, i32
  }
  func.func @transform_27(%arg0: i32) -> (i32, i32, i32) {
    %c0_i32 = arith.constant 0 : i32
    %c0_i32_0 = arith.constant 0 : i32
    %c0_i32_1 = arith.constant 0 : i32
    return %arg0, %c0_i32, %c0_i32_0 : i32, i32, i32
  }
}

</mosaic_0001>

<llo_original>
// kernel: _lambda_.1
$region0: #{_lambda_.1}
  #allocation0 [shape = 'u32[]', space=smem, size = 0x4, offset = 0x4, fixed_abs, tag = 'smem constant byte address 0x4 - core index']
  #allocation1 [shape = 'u32[144,128]{1,0:T(1,128)}', space=vmem, size = 0x12000, scoped, tag = 'internal scratch']
  %s0 = inlined_call_operand.vmem [shape: f32[2,96,128], index: 0, kind: input, shape index: {}]
  %s1 = inlined_call_operand.vmem [shape: f32[128,56], index: 1, kind: input, shape index: {}]
  %s2 = inlined_call_operand.vmem [shape: f32[1,56], index: 2, kind: input, shape index: {}]
  %s3 = inlined_call_operand.vmem [shape: f32[1,56], index: 3, kind: input, shape index: {}]
  %s4 = inlined_call_operand.vmem [shape: f32[1,56], index: 4, kind: input, shape index: {}]
  %s5 = inlined_call_operand.vmem [shape: f32[1,56], index: 5, kind: input, shape index: {}]
  %s6 = inlined_call_operand.vmem [shape: f32[1,56], index: 6, kind: input, shape index: {}]
  %s7 = inlined_call_operand.vmem [shape: f32[1,56], index: 7, kind: input, shape index: {}]
  %s8 = inlined_call_operand.vmem [shape: f32[1,56], index: 8, kind: input, shape index: {}]
  %s9 = inlined_call_operand.vmem [shape: bf16[56,32], index: 9, kind: input, shape index: {}]
  %s10 = inlined_call_operand.vmem [shape: f32[1,32], index: 10, kind: input, shape index: {}]
  %s11 = inlined_call_operand.vmem [shape: bf16[32,32], index: 11, kind: input, shape index: {}]
  %s12 = inlined_call_operand.vmem [shape: f32[1,32], index: 12, kind: input, shape index: {}]
  %s13 = inlined_call_operand.vmem [shape: f32[1,32], index: 13, kind: input, shape index: {}]
  %s14 = inlined_call_operand.vmem [shape: f32[1,32], index: 14, kind: input, shape index: {}]
  %s15 = inlined_call_operand.vmem [shape: f32[1,32], index: 15, kind: input, shape index: {}]
  %s16 = inlined_call_operand.vmem [shape: bf16[32,32], index: 16, kind: input, shape index: {}]
  %s17 = inlined_call_operand.vmem [shape: f32[1,32], index: 17, kind: input, shape index: {}]
  %s18 = inlined_call_operand.vmem [shape: bf16[32,32], index: 18, kind: input, shape index: {}]
  %s19 = inlined_call_operand.vmem [shape: f32[1,32], index: 19, kind: input, shape index: {}]
  %s20 = inlined_call_operand.vmem [shape: f32[1,32], index: 20, kind: input, shape index: {}]
  %s21 = inlined_call_operand.vmem [shape: f32[1,32], index: 21, kind: input, shape index: {}]
  %s22 = inlined_call_operand.vmem [shape: f32[1,32], index: 22, kind: input, shape index: {}]
  %s23 = inlined_call_operand.vmem [shape: bf16[32,128], index: 23, kind: input, shape index: {}]
  %s24 = inlined_call_operand.vmem [shape: f32[1,128], index: 24, kind: input, shape index: {}]
  %s25 = inlined_call_operand.vmem [shape: f32[12,128], index: 25, kind: input, shape index: {}]
  %s26 = inlined_call_operand.hbm [shape: f32[16,128], index: 26, kind: output, shape index: {0}]
  %s27 = inlined_call_operand.vmem [shape: f32[2,96,128], index: 27, kind: output, shape index: {1}]
  %28 = xla_tuple %s26, %s27
  %s29 = sld [smem:[#allocation0]]
  $region145: #{_lambda_.1} parent=0
    _
  %s31 = ssub.s32 1, %s29
  %s32 = scalar_select 0, %s31, %s29
  $region1: #{_lambda_.1} parent=0
    #allocation2 [shape = 'u8[8192]{0}', space=vmem, size = 0x2000, scoped, tag = 'output window, operand 0']
    #allocation3 [shape = 's32[2]{0}', space=sflag, size = 0x8, scoped, tag = 'scoped memory for _lambda_.1']
    %33 = vsyncpa [#allocation3], 0
    %s34 = scalar_lea.sflag [#allocation3], 1
    %35 = vsyncpa %s34, 0
    loop: start=0, step=1, limit=4
    $region2: #{_lambda_.1} parent=1 // loop_pre_header
      _
    $region3: #{_lambda_.1} parent=1 // loop_header
      %s37 = sphi 0, %s41
      %p38 = scmp.ge.s32.totalorder %s37, 4
      %s47 = sphi 0, %s49
      %s50 = sphi 0, %s47
      %s51 = sphi 0, %s50
      %s67 = sphi 0, %s51
      %s71 = sphi 0, %s71
      %s73 = sphi 0, %s71
      %s74 = sphi 0, %s73
      %s88 = sphi 0, %s74
      %s92 = sphi 0, %s92
      %s94 = sphi 0, %s92
      %s95 = sphi 0, %s94
      %s109 = sphi 0, %s95
      %s113 = sphi 0, %s113
      %s115 = sphi 0, %s113
      %s116 = sphi 0, %s115
      %s130 = sphi 0, %s116
      %s134 = sphi 0, %s134
      %s136 = sphi 0, %s134
      %s137 = sphi 0, %s136
      %s151 = sphi 0, %s137
      %s155 = sphi 0, %s155
      %s157 = sphi 0, %s155
      %s158 = sphi 0, %s157
      %s172 = sphi 0, %s158
      %s176 = sphi 0, %s176
      %s178 = sphi 0, %s176
      %s179 = sphi 0, %s178
      %s193 = sphi 0, %s179
      %s197 = sphi 0, %s197
      %s199 = sphi 0, %s197
      %s200 = sphi 0, %s199
      %s214 = sphi 0, %s200
      %s218 = sphi 0, %s218
      %s220 = sphi 0, %s218
      %s221 = sphi 0, %s220
      %s235 = sphi 0, %s221
      %s239 = sphi 0, %s239
      %s241 = sphi 0, %s239
      %s242 = sphi 0, %s241
      %s256 = sphi 0, %s242
      %s260 = sphi 0, %s260
      %s262 = sphi 0, %s260
      %s263 = sphi 0, %s262
      %s277 = sphi 0, %s263
      %s281 = sphi 0, %s281
      %s283 = sphi 0, %s281
      %s284 = sphi 0, %s283
      %s298 = sphi 0, %s284
      %s302 = sphi 0, %s302
      %s304 = sphi 0, %s302
      %s305 = sphi 0, %s304
      %s319 = sphi 0, %s305
      %s323 = sphi 0, %s323
      %s325 = sphi 0, %s323
      %s326 = sphi 0, %s325
      %s340 = sphi 0, %s326
      %s344 = sphi 0, %s344
      %s346 = sphi 0, %s344
      %s347 = sphi 0, %s346
      %s361 = sphi 0, %s347
      %s365 = sphi 0, %s365
      %s367 = sphi 0, %s365
      %s368 = sphi 0, %s367
      %s382 = sphi 0, %s368
      %s386 = sphi 0, %s386
      %s388 = sphi 0, %s386
      %s389 = sphi 0, %s388
      %s403 = sphi 0, %s389
      %s407 = sphi 0, %s407
      %s409 = sphi 0, %s407
      %s410 = sphi 0, %s409
      %s424 = sphi 0, %s410
      %s428 = sphi 0, %s428
      %s430 = sphi 0, %s428
      %s431 = sphi 0, %s430
      %s445 = sphi 0, %s431
      %s449 = sphi 0, %s449
      %s451 = sphi 0, %s449
      %s452 = sphi 0, %s451
      %s466 = sphi 0, %s452
      %s470 = sphi 0, %s470
      %s472 = sphi 0, %s470
      %s473 = sphi 0, %s472
      %s487 = sphi 0, %s473
      %s491 = sphi 0, %s491
      %s493 = sphi 0, %s491
      %s494 = sphi 0, %s493
      %s508 = sphi 0, %s494
      %s512 = sphi 0, %s512
      %s514 = sphi 0, %s512
      %s515 = sphi 0, %s514
      %s529 = sphi 0, %s515
      %s533 = sphi 0, %s533
      %s535 = sphi 0, %s533
      %s536 = sphi 0, %s535
      %s550 = sphi 0, %s536
      %s554 = sphi 0, %s554
      %s556 = sphi 0, %s554
      %s557 = sphi 0, %s556
      %s571 = sphi 0, %s557
      %s575 = sphi 0, %s575
      %s577 = sphi 0, %s575
      %s578 = sphi 0, %s577
      %s592 = sphi 0, %s578
      %s598 = sphi 0, %s600
      %s601 = sphi 0, %s598
      %s602 = sphi 0, %s601
      %s618 = sphi 0, %s602
      %s624 = sphi 0, %s626
      %s627 = sphi 0, %s624
      %s628 = sphi 0, %s627
      %s644 = sphi 0, %s628
    $region4: #{_lambda_.1} parent=1 // loop_header_branch
      %40 = sbr.rel (%p38) target = $region8
    $region5: #{_lambda_.1} parent=1 // loop_body
      %s42 = ssub.s32 %s37, 1
      %s43 = ssub.s32 %s37, 2
      %s44 = sadd.s32 %s37, 1
      %s45 = ssub.s32 %s37, %s44
      %p46 = scmp.eq.s32.totalorder %s45, 0
      %s48 = sadd.s32 %s47, 1
      %s49 = scalar_select %p46, %s47, %s48
      %p52 = pneg %p46
      %p53 = scmp.eq.s32.totalorder %s37, 1
      %p54 = por %p52, %p53
      %p55 = scmp.ne.s32.totalorder %s47, %s50
      %p56 = scmp.eq.s32.totalorder %s37, 0
      %p57 = por %p55, %p56
      %p58 = scmp.ne.s32.totalorder %s47, %s50
      %p59 = scmp.eq.s32.totalorder %s42, 1
      %p60 = por %p58, %p59
      %p61 = scmp.ne.s32.totalorder %s50, %s51
      %p62 = scmp.eq.s32.totalorder %s42, 0
      %p63 = por %p61, %p62
      %p64 = scmp.ne.s32.totalorder %s50, %s51
      %p65 = scmp.eq.s32.totalorder %s43, 1
      %p66 = por %p64, %p65
      %p68 = scmp.ne.s32.totalorder %s51, %s67
      %p69 = scmp.eq.s32.totalorder %s43, 0
      %p70 = por %p68, %p69
      %s72 = sadd.s32 %s71, 1
      %p75 = scmp.eq.s32.totalorder %s37, 1
      %p76 = scmp.ne.s32.totalorder %s71, %s73
      %p77 = scmp.eq.s32.totalorder %s37, 0
      %p78 = por %p76, %p77
      %p79 = scmp.ne.s32.totalorder %s71, %s73
      %p80 = scmp.eq.s32.totalorder %s42, 1
      %p81 = por %p79, %p80
      %p82 = scmp.ne.s32.totalorder %s73, %s74
      %p83 = scmp.eq.s32.totalorder %s42, 0
      %p84 = por %p82, %p83
      %p85 = scmp.ne.s32.totalorder %s73, %s74
      %p86 = scmp.eq.s32.totalorder %s43, 1
      %p87 = por %p85, %p86
      %p89 = scmp.ne.s32.totalorder %s74, %s88
      %p90 = scmp.eq.s32.totalorder %s43, 0
      %p91 = por %p89, %p90
      %s93 = sadd.s32 %s92, 1
      %p96 = scmp.eq.s32.totalorder %s37, 1
      %p97 = scmp.ne.s32.totalorder %s92, %s94
      %p98 = scmp.eq.s32.totalorder %s37, 0
      %p99 = por %p97, %p98
      %p100 = scmp.ne.s32.totalorder %s92, %s94
      %p101 = scmp.eq.s32.totalorder %s42, 1
      %p102 = por %p100, %p101
      %p103 = scmp.ne.s32.totalorder %s94, %s95
      %p104 = scmp.eq.s32.totalorder %s42, 0
      %p105 = por %p103, %p104
      %p106 = scmp.ne.s32.totalorder %s94, %s95
      %p107 = scmp.eq.s32.totalorder %s43, 1
      %p108 = por %p106, %p107
      %p110 = scmp.ne.s32.totalorder %s95, %s109
      %p111 = scmp.eq.s32.totalorder %s43, 0
      %p112 = por %p110, %p111
      %s114 = sadd.s32 %s113, 1
      %p117 = scmp.eq.s32.totalorder %s37, 1
      %p118 = scmp.ne.s32.totalorder %s113, %s115
      %p119 = scmp.eq.s32.totalorder %s37, 0
      %p120 = por %p118, %p119
      %p121 = scmp.ne.s32.totalorder %s113, %s115
      %p122 = scmp.eq.s32.totalorder %s42, 1
      %p123 = por %p121, %p122
      %p124 = scmp.ne.s32.totalorder %s115, %s116
      %p125 = scmp.eq.s32.totalorder %s42, 0
      %p126 = por %p124, %p125
      %p127 = scmp.ne.s32.totalorder %s115, %s116
      %p128 = scmp.eq.s32.totalorder %s43, 1
      %p129 = por %p127, %p128
      %p131 = scmp.ne.s32.totalorder %s116, %s130
      %p132 = scmp.eq.s32.totalorder %s43, 0
      %p133 = por %p131, %p132
      %s135 = sadd.s32 %s134, 1
      %p138 = scmp.eq.s32.totalorder %s37, 1
      %p139 = scmp.ne.s32.totalorder %s134, %s136
      %p140 = scmp.eq.s32.totalorder %s37, 0
      %p141 = por %p139, %p140
      %p142 = scmp.ne.s32.totalorder %s134, %s136
      %p143 = scmp.eq.s32.totalorder %s42, 1
      %p144 = por %p142, %p143
      %p145 = scmp.ne.s32.totalorder %s136, %s137
      %p146 = scmp.eq.s32.totalorder %s42, 0
      %p147 = por %p145, %p146
      %p148 = scmp.ne.s32.totalorder %s136, %s137
      %p149 = scmp.eq.s32.totalorder %s43, 1
      %p150 = por %p148, %p149
      %p152 = scmp.ne.s32.totalorder %s137, %s151
      %p153 = scmp.eq.s32.totalorder %s43, 0
      %p154 = por %p152, %p153
      %s156 = sadd.s32 %s155, 1
      %p159 = scmp.eq.s32.totalorder %s37, 1
      %p160 = scmp.ne.s32.totalorder %s155, %s157
      %p161 = scmp.eq.s32.totalorder %s37, 0
      %p162 = por %p160, %p161
      %p163 = scmp.ne.s32.totalorder %s155, %s157
      %p164 = scmp.eq.s32.totalorder %s42, 1
      %p165 = por %p163, %p164
      %p166 = scmp.ne.s32.totalorder %s157, %s158
      %p167 = scmp.eq.s32.totalorder %s42, 0
      %p168 = por %p166, %p167
      %p169 = scmp.ne.s32.totalorder %s157, %s158
      %p170 = scmp.eq.s32.totalorder %s43, 1
      %p171 = por %p169, %p170
      %p173 = scmp.ne.s32.totalorder %s158, %s172
      %p174 = scmp.eq.s32.totalorder %s43, 0
      %p175 = por %p173, %p174
      %s177 = sadd.s32 %s176, 1
      %p180 = scmp.eq.s32.totalorder %s37, 1
      %p181 = scmp.ne.s32.totalorder %s176, %s178
      %p182 = scmp.eq.s32.totalorder %s37, 0
      %p183 = por %p181, %p182
      %p184 = scmp.ne.s32.totalorder %s176, %s178
      %p185 = scmp.eq.s32.totalorder %s42, 1
      %p186 = por %p184, %p185
      %p187 = scmp.ne.s32.totalorder %s178, %s179
      %p188 = scmp.eq.s32.totalorder %s42, 0
      %p189 = por %p187, %p188
      %p190 = scmp.ne.s32.totalorder %s178, %s179
      %p191 = scmp.eq.s32.totalorder %s43, 1
      %p192 = por %p190, %p191
      %p194 = scmp.ne.s32.totalorder %s179, %s193
      %p195 = scmp.eq.s32.totalorder %s43, 0
      %p196 = por %p194, %p195
      %s198 = sadd.s32 %s197, 1
      %p201 = scmp.eq.s32.totalorder %s37, 1
      %p202 = scmp.ne.s32.totalorder %s197, %s199
      %p203 = scmp.eq.s32.totalorder %s37, 0
      %p204 = por %p202, %p203
      %p205 = scmp.ne.s32.totalorder %s197, %s199
      %p206 = scmp.eq.s32.totalorder %s42, 1
      %p207 = por %p205, %p206
      %p208 = scmp.ne.s32.totalorder %s199, %s200
      %p209 = scmp.eq.s32.totalorder %s42, 0
      %p210 = por %p208, %p209
      %p211 = scmp.ne.s32.totalorder %s199, %s200
      %p212 = scmp.eq.s32.totalorder %s43, 1
      %p213 = por %p211, %p212
      %p215 = scmp.ne.s32.totalorder %s200, %s214
      %p216 = scmp.eq.s32.totalorder %s43, 0
      %p217 = por %p215, %p216
      %s219 = sadd.s32 %s218, 1
      %p222 = scmp.eq.s32.totalorder %s37, 1
      %p223 = scmp.ne.s32.totalorder %s218, %s220
      %p224 = scmp.eq.s32.totalorder %s37, 0
      %p225 = por %p223, %p224
      %p226 = scmp.ne.s32.totalorder %s218, %s220
      %p227 = scmp.eq.s32.totalorder %s42, 1
      %p228 = por %p226, %p227
      %p229 = scmp.ne.s32.totalorder %s220, %s221
      %p230 = scmp.eq.s32.totalorder %s42, 0
      %p231 = por %p229, %p230
      %p232 = scmp.ne.s32.totalorder %s220, %s221
      %p233 = scmp.eq.s32.totalorder %s43, 1
      %p234 = por %p232, %p233
      %p236 = scmp.ne.s32.totalorder %s221, %s235
      %p237 = scmp.eq.s32.totalorder %s43, 0
      %p238 = por %p236, %p237
      %s240 = sadd.s32 %s239, 1
      %p243 = scmp.eq.s32.totalorder %s37, 1
      %p244 = scmp.ne.s32.totalorder %s239, %s241
      %p245 = scmp.eq.s32.totalorder %s37, 0
      %p246 = por %p244, %p245
      %p247 = scmp.ne.s32.totalorder %s239, %s241
      %p248 = scmp.eq.s32.totalorder %s42, 1
      %p249 = por %p247, %p248
      %p250 = scmp.ne.s32.totalorder %s241, %s242
      %p251 = scmp.eq.s32.totalorder %s42, 0
      %p252 = por %p250, %p251
      %p253 = scmp.ne.s32.totalorder %s241, %s242
      %p254 = scmp.eq.s32.totalorder %s43, 1
      %p255 = por %p253, %p254
      %p257 = scmp.ne.s32.totalorder %s242, %s256
      %p258 = scmp.eq.s32.totalorder %s43, 0
      %p259 = por %p257, %p258
      %s261 = sadd.s32 %s260, 1
      %p264 = scmp.eq.s32.totalorder %s37, 1
      %p265 = scmp.ne.s32.totalorder %s260, %s262
      %p266 = scmp.eq.s32.totalorder %s37, 0
      %p267 = por %p265, %p266
      %p268 = scmp.ne.s32.totalorder %s260, %s262
      %p269 = scmp.eq.s32.totalorder %s42, 1
      %p270 = por %p268, %p269
      %p271 = scmp.ne.s32.totalorder %s262, %s263
      %p272 = scmp.eq.s32.totalorder %s42, 0
      %p273 = por %p271, %p272
      %p274 = scmp.ne.s32.totalorder %s262, %s263
      %p275 = scmp.eq.s32.totalorder %s43, 1
      %p276 = por %p274, %p275
      %p278 = scmp.ne.s32.totalorder %s263, %s277
      %p279 = scmp.eq.s32.totalorder %s43, 0
      %p280 = por %p278, %p279
      %s282 = sadd.s32 %s281, 1
      %p285 = scmp.eq.s32.totalorder %s37, 1
      %p286 = scmp.ne.s32.totalorder %s281, %s283
      %p287 = scmp.eq.s32.totalorder %s37, 0
      %p288 = por %p286, %p287
      %p289 = scmp.ne.s32.totalorder %s281, %s283
      %p290 = scmp.eq.s32.totalorder %s42, 1
      %p291 = por %p289, %p290
      %p292 = scmp.ne.s32.totalorder %s283, %s284
      %p293 = scmp.eq.s32.totalorder %s42, 0
      %p294 = por %p292, %p293
      %p295 = scmp.ne.s32.totalorder %s283, %s284
      %p296 = scmp.eq.s32.totalorder %s43, 1
      %p297 = por %p295, %p296
      %p299 = scmp.ne.s32.totalorder %s284, %s298
      %p300 = scmp.eq.s32.totalorder %s43, 0
      %p301 = por %p299, %p300
      %s303 = sadd.s32 %s302, 1
      %p306 = scmp.eq.s32.totalorder %s37, 1
      %p307 = scmp.ne.s32.totalorder %s302, %s304
      %p308 = scmp.eq.s32.totalorder %s37, 0
      %p309 = por %p307, %p308
      %p310 = scmp.ne.s32.totalorder %s302, %s304
      %p311 = scmp.eq.s32.totalorder %s42, 1
      %p312 = por %p310, %p311
      %p313 = scmp.ne.s32.totalorder %s304, %s305
      %p314 = scmp.eq.s32.totalorder %s42, 0
      %p315 = por %p313, %p314
      %p316 = scmp.ne.s32.totalorder %s304, %s305
      %p317 = scmp.eq.s32.totalorder %s43, 1
      %p318 = por %p316, %p317
      %p320 = scmp.ne.s32.totalorder %s305, %s319
      %p321 = scmp.eq.s32.totalorder %s43, 0
      %p322 = por %p320, %p321
      %s324 = sadd.s32 %s323, 1
      %p327 = scmp.eq.s32.totalorder %s37, 1
      %p328 = scmp.ne.s32.totalorder %s323, %s325
      %p329 = scmp.eq.s32.totalorder %s37, 0
      %p330 = por %p328, %p329
      %p331 = scmp.ne.s32.totalorder %s323, %s325
      %p332 = scmp.eq.s32.totalorder %s42, 1
      %p333 = por %p331, %p332
      %p334 = scmp.ne.s32.totalorder %s325, %s326
      %p335 = scmp.eq.s32.totalorder %s42, 0
      %p336 = por %p334, %p335
      %p337 = scmp.ne.s32.totalorder %s325, %s326
      %p338 = scmp.eq.s32.totalorder %s43, 1
      %p339 = por %p337, %p338
      %p341 = scmp.ne.s32.totalorder %s326, %s340
      %p342 = scmp.eq.s32.totalorder %s43, 0
      %p343 = por %p341, %p342
      %s345 = sadd.s32 %s344, 1
      %p348 = scmp.eq.s32.totalorder %s37, 1
      %p349 = scmp.ne.s32.totalorder %s344, %s346
      %p350 = scmp.eq.s32.totalorder %s37, 0
      %p351 = por %p349, %p350
      %p352 = scmp.ne.s32.totalorder %s344, %s346
      %p353 = scmp.eq.s32.totalorder %s42, 1
      %p354 = por %p352, %p353
      %p355 = scmp.ne.s32.totalorder %s346, %s347
      %p356 = scmp.eq.s32.totalorder %s42, 0
      %p357 = por %p355, %p356
      %p358 = scmp.ne.s32.totalorder %s346, %s347
      %p359 = scmp.eq.s32.totalorder %s43, 1
      %p360 = por %p358, %p359
      %p362 = scmp.ne.s32.totalorder %s347, %s361
      %p363 = scmp.eq.s32.totalorder %s43, 0
      %p364 = por %p362, %p363
      %s366 = sadd.s32 %s365, 1
      %p369 = scmp.eq.s32.totalorder %s37, 1
      %p370 = scmp.ne.s32.totalorder %s365, %s367
      %p371 = scmp.eq.s32.totalorder %s37, 0
      %p372 = por %p370, %p371
      %p373 = scmp.ne.s32.totalorder %s365, %s367
      %p374 = scmp.eq.s32.totalorder %s42, 1
      %p375 = por %p373, %p374
      %p376 = scmp.ne.s32.totalorder %s367, %s368
      %p377 = scmp.eq.s32.totalorder %s42, 0
      %p378 = por %p376, %p377
      %p379 = scmp.ne.s32.totalorder %s367, %s368
      %p380 = scmp.eq.s32.totalorder %s43, 1
      %p381 = por %p379, %p380
      %p383 = scmp.ne.s32.totalorder %s368, %s382
      %p384 = scmp.eq.s32.totalorder %s43, 0
      %p385 = por %p383, %p384
      %s387 = sadd.s32 %s386, 1
      %p390 = scmp.eq.s32.totalorder %s37, 1
      %p391 = scmp.ne.s32.totalorder %s386, %s388
      %p392 = scmp.eq.s32.totalorder %s37, 0
      %p393 = por %p391, %p392
      %p394 = scmp.ne.s32.totalorder %s386, %s388
      %p395 = scmp.eq.s32.totalorder %s42, 1
      %p396 = por %p394, %p395
      %p397 = scmp.ne.s32.totalorder %s388, %s389
      %p398 = scmp.eq.s32.totalorder %s42, 0
      %p399 = por %p397, %p398
      %p400 = scmp.ne.s32.totalorder %s388, %s389
      %p401 = scmp.eq.s32.totalorder %s43, 1
      %p402 = por %p400, %p401
      %p404 = scmp.ne.s32.totalorder %s389, %s403
      %p405 = scmp.eq.s32.totalorder %s43, 0
      %p406 = por %p404, %p405
      %s408 = sadd.s32 %s407, 1
      %p411 = scmp.eq.s32.totalorder %s37, 1
      %p412 = scmp.ne.s32.totalorder %s407, %s409
      %p413 = scmp.eq.s32.totalorder %s37, 0
      %p414 = por %p412, %p413
      %p415 = scmp.ne.s32.totalorder %s407, %s409
      %p416 = scmp.eq.s32.totalorder %s42, 1
      %p417 = por %p415, %p416
      %p418 = scmp.ne.s32.totalorder %s409, %s410
      %p419 = scmp.eq.s32.totalorder %s42, 0
      %p420 = por %p418, %p419
      %p421 = scmp.ne.s32.totalorder %s409, %s410
      %p422 = scmp.eq.s32.totalorder %s43, 1
      %p423 = por %p421, %p422
      %p425 = scmp.ne.s32.totalorder %s410, %s424
      %p426 = scmp.eq.s32.totalorder %s43, 0
      %p427 = por %p425, %p426
      %s429 = sadd.s32 %s428, 1
      %p432 = scmp.eq.s32.totalorder %s37, 1
      %p433 = scmp.ne.s32.totalorder %s428, %s430
      %p434 = scmp.eq.s32.totalorder %s37, 0
      %p435 = por %p433, %p434
      %p436 = scmp.ne.s32.totalorder %s428, %s430
      %p437 = scmp.eq.s32.totalorder %s42, 1
      %p438 = por %p436, %p437
      %p439 = scmp.ne.s32.totalorder %s430, %s431
      %p440 = scmp.eq.s32.totalorder %s42, 0
      %p441 = por %p439, %p440
      %p442 = scmp.ne.s32.totalorder %s430, %s431
      %p443 = scmp.eq.s32.totalorder %s43, 1
      %p444 = por %p442, %p443
      %p446 = scmp.ne.s32.totalorder %s431, %s445
      %p447 = scmp.eq.s32.totalorder %s43, 0
      %p448 = por %p446, %p447
      %s450 = sadd.s32 %s449, 1
      %p453 = scmp.eq.s32.totalorder %s37, 1
      %p454 = scmp.ne.s32.totalorder %s449, %s451
      %p455 = scmp.eq.s32.totalorder %s37, 0
      %p456 = por %p454, %p455
      %p457 = scmp.ne.s32.totalorder %s449, %s451
      %p458 = scmp.eq.s32.totalorder %s42, 1
      %p459 = por %p457, %p458
      %p460 = scmp.ne.s32.totalorder %s451, %s452
      %p461 = scmp.eq.s32.totalorder %s42, 0
      %p462 = por %p460, %p461
      %p463 = scmp.ne.s32.totalorder %s451, %s452
      %p464 = scmp.eq.s32.totalorder %s43, 1
      %p465 = por %p463, %p464
      %p467 = scmp.ne.s32.totalorder %s452, %s466
      %p468 = scmp.eq.s32.totalorder %s43, 0
      %p469 = por %p467, %p468
      %s471 = sadd.s32 %s470, 1
      %p474 = scmp.eq.s32.totalorder %s37, 1
      %p475 = scmp.ne.s32.totalorder %s470, %s472
      %p476 = scmp.eq.s32.totalorder %s37, 0
      %p477 = por %p475, %p476
      %p478 = scmp.ne.s32.totalorder %s470, %s472
      %p479 = scmp.eq.s32.totalorder %s42, 1
      %p480 = por %p478, %p479
      %p481 = scmp.ne.s32.totalorder %s472, %s473
      %p482 = scmp.eq.s32.totalorder %s42, 0
      %p483 = por %p481, %p482
      %p484 = scmp.ne.s32.totalorder %s472, %s473
      %p485 = scmp.eq.s32.totalorder %s43, 1
      %p486 = por %p484, %p485
      %p488 = scmp.ne.s32.totalorder %s473, %s487
      %p489 = scmp.eq.s32.totalorder %s43, 0
      %p490 = por %p488, %p489
      %s492 = sadd.s32 %s491, 1
      %p495 = scmp.eq.s32.totalorder %s37, 1
      %p496 = scmp.ne.s32.totalorder %s491, %s493
      %p497 = scmp.eq.s32.totalorder %s37, 0
      %p498 = por %p496, %p497
      %p499 = scmp.ne.s32.totalorder %s491, %s493
      %p500 = scmp.eq.s32.totalorder %s42, 1
      %p501 = por %p499, %p500
      %p502 = scmp.ne.s32.totalorder %s493, %s494
      %p503 = scmp.eq.s32.totalorder %s42, 0
      %p504 = por %p502, %p503
      %p505 = scmp.ne.s32.totalorder %s493, %s494
      %p506 = scmp.eq.s32.totalorder %s43, 1
      %p507 = por %p505, %p506
      %p509 = scmp.ne.s32.totalorder %s494, %s508
      %p510 = scmp.eq.s32.totalorder %s43, 0
      %p511 = por %p509, %p510
      %s513 = sadd.s32 %s512, 1
      %p516 = scmp.eq.s32.totalorder %s37, 1
      %p517 = scmp.ne.s32.totalorder %s512, %s514
      %p518 = scmp.eq.s32.totalorder %s37, 0
      %p519 = por %p517, %p518
      %p520 = scmp.ne.s32.totalorder %s512, %s514
      %p521 = scmp.eq.s32.totalorder %s42, 1
      %p522 = por %p520, %p521
      %p523 = scmp.ne.s32.totalorder %s514, %s515
      %p524 = scmp.eq.s32.totalorder %s42, 0
      %p525 = por %p523, %p524
      %p526 = scmp.ne.s32.totalorder %s514, %s515
      %p527 = scmp.eq.s32.totalorder %s43, 1
      %p528 = por %p526, %p527
      %p530 = scmp.ne.s32.totalorder %s515, %s529
      %p531 = scmp.eq.s32.totalorder %s43, 0
      %p532 = por %p530, %p531
      %s534 = sadd.s32 %s533, 1
      %p537 = scmp.eq.s32.totalorder %s37, 1
      %p538 = scmp.ne.s32.totalorder %s533, %s535
      %p539 = scmp.eq.s32.totalorder %s37, 0
      %p540 = por %p538, %p539
      %p541 = scmp.ne.s32.totalorder %s533, %s535
      %p542 = scmp.eq.s32.totalorder %s42, 1
      %p543 = por %p541, %p542
      %p544 = scmp.ne.s32.totalorder %s535, %s536
      %p545 = scmp.eq.s32.totalorder %s42, 0
      %p546 = por %p544, %p545
      %p547 = scmp.ne.s32.totalorder %s535, %s536
      %p548 = scmp.eq.s32.totalorder %s43, 1
      %p549 = por %p547, %p548
      %p551 = scmp.ne.s32.totalorder %s536, %s550
      %p552 = scmp.eq.s32.totalorder %s43, 0
      %p553 = por %p551, %p552
      %s555 = sadd.s32 %s554, 1
      %p558 = scmp.eq.s32.totalorder %s37, 1
      %p559 = scmp.ne.s32.totalorder %s554, %s556
      %p560 = scmp.eq.s32.totalorder %s37, 0
      %p561 = por %p559, %p560
      %p562 = scmp.ne.s32.totalorder %s554, %s556
      %p563 = scmp.eq.s32.totalorder %s42, 1
      %p564 = por %p562, %p563
      %p565 = scmp.ne.s32.totalorder %s556, %s557
      %p566 = scmp.eq.s32.totalorder %s42, 0
      %p567 = por %p565, %p566
      %p568 = scmp.ne.s32.totalorder %s556, %s557
      %p569 = scmp.eq.s32.totalorder %s43, 1
      %p570 = por %p568, %p569
      %p572 = scmp.ne.s32.totalorder %s557, %s571
      %p573 = scmp.eq.s32.totalorder %s43, 0
      %p574 = por %p572, %p573
      %s576 = sadd.s32 %s575, 1
      %p579 = scmp.eq.s32.totalorder %s37, 1
      %p580 = scmp.ne.s32.totalorder %s575, %s577
      %p581 = scmp.eq.s32.totalorder %s37, 0
      %p582 = por %p580, %p581
      %p583 = scmp.ne.s32.totalorder %s575, %s577
      %p584 = scmp.eq.s32.totalorder %s42, 1
      %p585 = por %p583, %p584
      %p586 = scmp.ne.s32.totalorder %s577, %s578
      %p587 = scmp.eq.s32.totalorder %s42, 0
      %p588 = por %p586, %p587
      %p589 = scmp.ne.s32.totalorder %s577, %s578
      %p590 = scmp.eq.s32.totalorder %s43, 1
      %p591 = por %p589, %p590
      %p593 = scmp.ne.s32.totalorder %s578, %s592
      %p594 = scmp.eq.s32.totalorder %s43, 0
      %p595 = por %p593, %p594
      %s596 = ssub.s32 %s37, %s44
      %p597 = scmp.eq.s32.totalorder %s596, 0
      %s599 = sadd.s32 %s598, 1
      %s600 = scalar_select %p597, %s598, %s599
      %p603 = pneg %p597
      %p604 = scmp.eq.s32.totalorder %s37, 1
      %p605 = por %p603, %p604
      %p606 = scmp.ne.s32.totalorder %s598, %s601
      %p607 = scmp.eq.s32.totalorder %s37, 0
      %p608 = por %p606, %p607
      %p609 = scmp.ne.s32.totalorder %s598, %s601
      %p610 = scmp.eq.s32.totalorder %s42, 1
      %p611 = por %p609, %p610
      %p612 = scmp.ne.s32.totalorder %s601, %s602
      %p613 = scmp.eq.s32.totalorder %s42, 0
      %p614 = por %p612, %p613
      %p615 = scmp.ne.s32.totalorder %s601, %s602
      %p616 = scmp.eq.s32.totalorder %s43, 1
      %p617 = por %p615, %p616
      %p619 = scmp.ne.s32.totalorder %s602, %s618
      %p620 = scmp.eq.s32.totalorder %s43, 0
      %p621 = por %p619, %p620
      %s622 = ssub.s32 %s37, %s44
      %p623 = scmp.eq.s32.totalorder %s622, 0
      %s625 = sadd.s32 %s624, 1
      %s626 = scalar_select %p623, %s624, %s625
      %p629 = pneg %p623
      %p630 = scmp.eq.s32.totalorder %s37, 1
      %p631 = por %p629, %p630
      %p632 = scmp.ne.s32.totalorder %s624, %s627
      %p633 = scmp.eq.s32.totalorder %s37, 0
      %p634 = por %p632, %p633
      %p635 = scmp.ne.s32.totalorder %s624, %s627
      %p636 = scmp.eq.s32.totalorder %s42, 1
      %p637 = por %p635, %p636
      %p638 = scmp.ne.s32.totalorder %s627, %s628
      %p639 = scmp.eq.s32.totalorder %s42, 0
      %p640 = por %p638, %p639
      %p641 = scmp.ne.s32.totalorder %s627, %s628
      %p642 = scmp.eq.s32.totalorder %s43, 1
      %p643 = por %p641, %p642
      %p645 = scmp.ne.s32.totalorder %s628, %s644
      %p646 = scmp.eq.s32.totalorder %s43, 0
      %p647 = por %p645, %p646
      %p648 = scmp.le.s32.totalorder 1, %s37
      %p649 = scmp.lt.s32.totalorder %s37, 3
      %p650 = pnand %p648, %p649
      %p651 = pneg %p650
      // Predicated region
      $region9: #{_lambda_.1} parent=5 // pred_check
        _
      $region10: #{_lambda_.1} parent=5 // pred_check_branch
        %653 = sbr.rel (%p650) target = $region12
      $region11: #{_lambda_.1} parent=5 // pred_region
        %s654 = ssub.s32 %s37, 1
        // Predicated region
        $region13: #{_lambda_.1} parent=11 // pred_check
          %p655 = pneg %p84
        $region14: #{_lambda_.1} parent=11 // pred_check_branch
          %657 = sbr.rel (%p655) target = $region16
        $region15: #{_lambda_.1} parent=11 // pred_region
          _
        $region16: #{_lambda_.1} parent=11 // pred_fallthru
          _
        // Predicated region
        $region17: #{_lambda_.1} parent=11 // pred_check
          %p658 = pneg %p105
        $region18: #{_lambda_.1} parent=11 // pred_check_branch
          %660 = sbr.rel (%p658) target = $region20
        $region19: #{_lambda_.1} parent=11 // pred_region
          _
        $region20: #{_lambda_.1} parent=11 // pred_fallthru
          _
        // Predicated region
        $region21: #{_lambda_.1} parent=11 // pred_check
          %p661 = pneg %p126
        $region22: #{_lambda_.1} parent=11 // pred_check_branch
          %663 = sbr.rel (%p661) target = $region24
        $region23: #{_lambda_.1} parent=11 // pred_region
          _
        $region24: #{_lambda_.1} parent=11 // pred_fallthru
          _
        // Predicated region
        $region25: #{_lambda_.1} parent=11 // pred_check
          %p664 = pneg %p147
        $region26: #{_lambda_.1} parent=11 // pred_check_branch
          %666 = sbr.rel (%p664) target = $region28
        $region27: #{_lambda_.1} parent=11 // pred_region
          _
        $region28: #{_lambda_.1} parent=11 // pred_fallthru
          _
        // Predicated region
        $region29: #{_lambda_.1} parent=11 // pred_check
          %p667 = pneg %p168
        $region30: #{_lambda_.1} parent=11 // pred_check_branch
          %669 = sbr.rel (%p667) target = $region32
        $region31: #{_lambda_.1} parent=11 // pred_region
          _
        $region32: #{_lambda_.1} parent=11 // pred_fallthru
          _
        // Predicated region
        $region33: #{_lambda_.1} parent=11 // pred_check
          %p670 = pneg %p189
        $region34: #{_lambda_.1} parent=11 // pred_check_branch
          %672 = sbr.rel (%p670) target = $region36
        $region35: #{_lambda_.1} parent=11 // pred_region
          _
        $region36: #{_lambda_.1} parent=11 // pred_fallthru
          _
        // Predicated region
        $region37: #{_lambda_.1} parent=11 // pred_check
          %p673 = pneg %p210
        $region38: #{_lambda_.1} parent=11 // pred_check_branch
          %675 = sbr.rel (%p673) target = $region40
        $region39: #{_lambda_.1} parent=11 // pred_region
          _
        $region40: #{_lambda_.1} parent=11 // pred_fallthru
          _
        // Predicated region
        $region41: #{_lambda_.1} parent=11 // pred_check
          %p676 = pneg %p231
        $region42: #{_lambda_.1} parent=11 // pred_check_branch
          %678 = sbr.rel (%p676) target = $region44
        $region43: #{_lambda_.1} parent=11 // pred_region
          _
        $region44: #{_lambda_.1} parent=11 // pred_fallthru
          _
        // Predicated region
        $region45: #{_lambda_.1} parent=11 // pred_check
          %p679 = pneg %p252
        $region46: #{_lambda_.1} parent=11 // pred_check_branch
          %681 = sbr.rel (%p679) target = $region48
        $region47: #{_lambda_.1} parent=11 // pred_region
          _
        $region48: #{_lambda_.1} parent=11 // pred_fallthru
          _
        // Predicated region
        $region49: #{_lambda_.1} parent=11 // pred_check
          %p682 = pneg %p273
        $region50: #{_lambda_.1} parent=11 // pred_check_branch
          %684 = sbr.rel (%p682) target = $region52
        $region51: #{_lambda_.1} parent=11 // pred_region
          _
        $region52: #{_lambda_.1} parent=11 // pred_fallthru
          _
        // Predicated region
        $region53: #{_lambda_.1} parent=11 // pred_check
          %p685 = pneg %p294
        $region54: #{_lambda_.1} parent=11 // pred_check_branch
          %687 = sbr.rel (%p685) target = $region56
        $region55: #{_lambda_.1} parent=11 // pred_region
          _
        $region56: #{_lambda_.1} parent=11 // pred_fallthru
          _
        // Predicated region
        $region57: #{_lambda_.1} parent=11 // pred_check
          %p688 = pneg %p315
        $region58: #{_lambda_.1} parent=11 // pred_check_branch
          %690 = sbr.rel (%p688) target = $region60
        $region59: #{_lambda_.1} parent=11 // pred_region
          _
        $region60: #{_lambda_.1} parent=11 // pred_fallthru
          _
        // Predicated region
        $region61: #{_lambda_.1} parent=11 // pred_check
          %p691 = pneg %p336
        $region62: #{_lambda_.1} parent=11 // pred_check_branch
          %693 = sbr.rel (%p691) target = $region64
        $region63: #{_lambda_.1} parent=11 // pred_region
          _
        $region64: #{_lambda_.1} parent=11 // pred_fallthru
          _
        // Predicated region
        $region65: #{_lambda_.1} parent=11 // pred_check
          %p694 = pneg %p357
        $region66: #{_lambda_.1} parent=11 // pred_check_branch
          %696 = sbr.rel (%p694) target = $region68
        $region67: #{_lambda_.1} parent=11 // pred_region
          _
        $region68: #{_lambda_.1} parent=11 // pred_fallthru
          _
        // Predicated region
        $region69: #{_lambda_.1} parent=11 // pred_check
          %p697 = pneg %p378
        $region70: #{_lambda_.1} parent=11 // pred_check_branch
          %699 = sbr.rel (%p697) target = $region72
        $region71: #{_lambda_.1} parent=11 // pred_region
          _
        $region72: #{_lambda_.1} parent=11 // pred_fallthru
          _
        // Predicated region
        $region73: #{_lambda_.1} parent=11 // pred_check
          %p700 = pneg %p399
        $region74: #{_lambda_.1} parent=11 // pred_check_branch
          %702 = sbr.rel (%p700) target = $region76
        $region75: #{_lambda_.1} parent=11 // pred_region
          _
        $region76: #{_lambda_.1} parent=11 // pred_fallthru
          _
        // Predicated region
        $region77: #{_lambda_.1} parent=11 // pred_check
          %p703 = pneg %p420
        $region78: #{_lambda_.1} parent=11 // pred_check_branch
          %705 = sbr.rel (%p703) target = $region80
        $region79: #{_lambda_.1} parent=11 // pred_region
          _
        $region80: #{_lambda_.1} parent=11 // pred_fallthru
          _
        // Predicated region
        $region81: #{_lambda_.1} parent=11 // pred_check
          %p706 = pneg %p441
        $region82: #{_lambda_.1} parent=11 // pred_check_branch
          %708 = sbr.rel (%p706) target = $region84
        $region83: #{_lambda_.1} parent=11 // pred_region
          _
        $region84: #{_lambda_.1} parent=11 // pred_fallthru
          _
        // Predicated region
        $region85: #{_lambda_.1} parent=11 // pred_check
          %p709 = pneg %p462
        $region86: #{_lambda_.1} parent=11 // pred_check_branch
          %711 = sbr.rel (%p709) target = $region88
        $region87: #{_lambda_.1} parent=11 // pred_region
          _
        $region88: #{_lambda_.1} parent=11 // pred_fallthru
          _
        // Predicated region
        $region89: #{_lambda_.1} parent=11 // pred_check
          %p712 = pneg %p483
        $region90: #{_lambda_.1} parent=11 // pred_check_branch
          %714 = sbr.rel (%p712) target = $region92
        $region91: #{_lambda_.1} parent=11 // pred_region
          _
        $region92: #{_lambda_.1} parent=11 // pred_fallthru
          _
        // Predicated region
        $region93: #{_lambda_.1} parent=11 // pred_check
          %p715 = pneg %p504
        $region94: #{_lambda_.1} parent=11 // pred_check_branch
          %717 = sbr.rel (%p715) target = $region96
        $region95: #{_lambda_.1} parent=11 // pred_region
          _
        $region96: #{_lambda_.1} parent=11 // pred_fallthru
          _
        // Predicated region
        $region97: #{_lambda_.1} parent=11 // pred_check
          %p718 = pneg %p525
        $region98: #{_lambda_.1} parent=11 // pred_check_branch
          %720 = sbr.rel (%p718) target = $region100
        $region99: #{_lambda_.1} parent=11 // pred_region
          _
        $region100: #{_lambda_.1} parent=11 // pred_fallthru
          _
        // Predicated region
        $region101: #{_lambda_.1} parent=11 // pred_check
          %p721 = pneg %p546
        $region102: #{_lambda_.1} parent=11 // pred_check_branch
          %723 = sbr.rel (%p721) target = $region104
        $region103: #{_lambda_.1} parent=11 // pred_region
          _
        $region104: #{_lambda_.1} parent=11 // pred_fallthru
          _
        // Predicated region
        $region105: #{_lambda_.1} parent=11 // pred_check
          %p724 = pneg %p567
        $region106: #{_lambda_.1} parent=11 // pred_check_branch
          %726 = sbr.rel (%p724) target = $region108
        $region107: #{_lambda_.1} parent=11 // pred_region
          _
        $region108: #{_lambda_.1} parent=11 // pred_fallthru
          _
        // Predicated region
        $region109: #{_lambda_.1} parent=11 // pred_check
          %p727 = pneg %p588
        $region110: #{_lambda_.1} parent=11 // pred_check_branch
          %729 = sbr.rel (%p727) target = $region112
        $region111: #{_lambda_.1} parent=11 // pred_region
          _
        $region112: #{_lambda_.1} parent=11 // pred_fallthru
          _
      $region12: #{_lambda_.1} parent=5 // pred_fallthru
        _
      %p730 = scmp.lt.s32.totalorder %s37, 2
      // Predicated region
      $region113: #{_lambda_.1} parent=5 // pred_check
        %p731 = pneg %p730
      $region114: #{_lambda_.1} parent=5 // pred_check_branch
        %733 = sbr.rel (%p731) target = $region116
      $region115: #{_lambda_.1} parent=5 // pred_region
        // Predicated region
        $region117: #{_lambda_.1} parent=115 // pred_check
          %p734 = pneg %p57
        $region118: #{_lambda_.1} parent=115 // pred_check_branch
          %736 = sbr.rel (%p734) target = $region120
        $region119: #{_lambda_.1} parent=115 // pred_region
          %p737 = scmp.lt.s32.totalorder %s37, 1
          %s738 = scalar_select %p737, %s37, 1
          %s739 = smul.addr %s738, 12
          %s740 = smul.addr %s739, 8
          %s741 = scalar_lea.vmem %s0, %s740
        $region120: #{_lambda_.1} parent=115 // pred_fallthru
          _
      $region116: #{_lambda_.1} parent=5 // pred_fallthru
        _
      %p742 = scmp.le.s32.totalorder 1, %s37
      %p743 = scmp.lt.s32.totalorder %s37, 3
      %p744 = pnand %p742, %p743
      %p745 = pneg %p744
      // Predicated region
      $region121: #{_lambda_.1} parent=5 // pred_check
        _
      $region122: #{_lambda_.1} parent=5 // pred_check_branch
        %747 = sbr.rel (%p744) target = $region124
      $region123: #{_lambda_.1} parent=5 // pred_region
        %s748 = ssub.s32 %s37, 1
        %p749 = scmp.lt.s32.totalorder %s42, 1
        %s750 = scalar_select %p749, %s42, 1
        %s751 = smul.addr %s750, 12
        %s752 = smul.addr %s751, 8
        %s753 = scalar_lea.vmem %s0, %s752
        %p754 = pneg %p63
        %p755 = pneg %p60
        %p756 = pneg %p84
        %p757 = pneg %p81
        %p758 = pneg %p105
        %p759 = pneg %p102
        %p760 = pneg %p126
        %p761 = pneg %p123
        %p762 = pneg %p147
        %p763 = pneg %p144
        %p764 = pneg %p168
        %p765 = pneg %p165
        %p766 = pneg %p189
        %p767 = pneg %p186
        %p768 = pneg %p210
        %p769 = pneg %p207
        %p770 = pneg %p231
        %p771 = pneg %p228
        %p772 = pneg %p252
        %p773 = pneg %p249
        %p774 = pneg %p273
        %p775 = pneg %p270
        %p776 = pneg %p294
        %p777 = pneg %p291
        %p778 = pneg %p315
        %p779 = pneg %p312
        %p780 = pneg %p336
        %p781 = pneg %p333
        %p782 = pneg %p357
        %p783 = pneg %p354
        %p784 = pneg %p378
        %p785 = pneg %p375
        %p786 = pneg %p399
        %p787 = pneg %p396
        %p788 = pneg %p420
        %p789 = pneg %p417
        %p790 = pneg %p441
        %p791 = pneg %p438
        %p792 = pneg %p462
        %p793 = pneg %p459
        %p794 = pneg %p483
        %p795 = pneg %p480
        %p796 = pneg %p504
        %p797 = pneg %p501
        %p798 = pneg %p525
        %p799 = pneg %p522
        %p800 = pneg %p546
        %p801 = pneg %p543
        %p802 = pneg %p567
        %p803 = pneg %p564
        %p804 = pneg %p588
        %p805 = pneg %p585
        %p806 = pneg %p614
        %p807 = pneg %p611
        %s808 = sand.u32 %s601, 1
        %s809 = scalar_lea.sflag [#allocation3], %s808
        %s810 = sand.u32 %s601, 1
        %s811 = smul.addr %s810, 8
        %s812 = scalar_lea.vmem [#allocation2], %s811
        %p813 = pneg %p640
        %p814 = pneg %p637
        %p815 = scmp.lt.s32.totalorder %s42, 1
        %s816 = scalar_select %p815, %s42, 1
        %s817 = smul.addr %s816, 12
        %s818 = smul.addr %s817, 8
        %s819 = scalar_lea.vmem %s27, %s818
        %p820 = scmp.lt.s32.totalorder %s42, 1
        %s821 = scalar_select %p820, %s42, 1
        %s822 = smul.addr %s821, 12
        %s823 = smul.addr %s822, 8
        %s824 = scalar_lea.vmem %s0, %s823
        %p825 = scmp.lt.s32.totalorder %s42, 1
        %s826 = scalar_select %p825, %s42, 1
        %s827 = smul.addr %s826, 12
        %s828 = smul.addr %s827, 8
        %s829 = scalar_lea.vmem %s27, %s828
        %831 = vst [vmem:[%s829] sm:$0xff] 0.0
        %832 = vst [vmem:[%s829 + $0x8] sm:$0xff] 0.0
        %833 = vst [vmem:[%s829 + $0x10] sm:$0xff] 0.0
        %834 = vst [vmem:[%s829 + $0x18] sm:$0xff] 0.0
        %835 = vst [vmem:[%s829 + $0x20] sm:$0xff] 0.0
        %836 = vst [vmem:[%s829 + $0x28] sm:$0xff] 0.0
        %837 = vst [vmem:[%s829 + $0x30] sm:$0xff] 0.0
        %838 = vst [vmem:[%s829 + $0x38] sm:$0xff] 0.0
        %839 = vst [vmem:[%s829 + $0x40] sm:$0xff] 0.0
        %840 = vst [vmem:[%s829 + $0x48] sm:$0xff] 0.0
        %841 = vst [vmem:[%s829 + $0x50] sm:$0xff] 0.0
        %842 = vst [vmem:[%s829 + $0x58] sm:$0xff] 0.0
        %v843 = vld [vmem:[%s824] sm:$0xff]
        %v844 = vld [vmem:[%s824 + $0x8] sm:$0xff]
        %v845 = vld [vmem:[%s824 + $0x10] sm:$0xff]
        %v846 = vld [vmem:[%s824 + $0x18] sm:$0xff]
        %v847 = vld [vmem:[%s824 + $0x20] sm:$0xff]
        %v848 = vld [vmem:[%s824 + $0x28] sm:$0xff]
        %v849 = vld [vmem:[%s824 + $0x30] sm:$0xff]
        %v850 = vld [vmem:[%s824 + $0x38] sm:$0xff]
        %v851 = vld [vmem:[%s824 + $0x40] sm:$0xff]
        %v852 = vld [vmem:[%s824 + $0x48] sm:$0xff]
        %v853 = vld [vmem:[%s824 + $0x50] sm:$0xff]
        %v854 = vld [vmem:[%s824 + $0x58] sm:$0xff]
        %v855 = vld [vmem:[%s1] sm:$0xff]
        %v856 = vld [vmem:[%s1 + $0x8] sm:$0xff]
        %v857 = vld [vmem:[%s1 + $0x10] sm:$0xff]
        %v858 = vld [vmem:[%s1 + $0x18] sm:$0xff]
        %v859 = vld [vmem:[%s1 + $0x20] sm:$0xff]
        %v860 = vld [vmem:[%s1 + $0x28] sm:$0xff]
        %v861 = vld [vmem:[%s1 + $0x30] sm:$0xff]
        %v862 = vld [vmem:[%s1 + $0x38] sm:$0xff]
        %v863 = vld [vmem:[%s1 + $0x40] sm:$0xff]
        %v864 = vld [vmem:[%s1 + $0x48] sm:$0xff]
        %v865 = vld [vmem:[%s1 + $0x50] sm:$0xff]
        %v866 = vld [vmem:[%s1 + $0x58] sm:$0xff]
        %v867 = vld [vmem:[%s1 + $0x60] sm:$0xff]
        %v868 = vld [vmem:[%s1 + $0x68] sm:$0xff]
        %v869 = vld [vmem:[%s1 + $0x70] sm:$0xff]
        %v870 = vld [vmem:[%s1 + $0x78] sm:$0xff]
        %v871 = vld [vmem:[%s2] sm:$0x1]
        %v873 = vlaneseq
        %v874 = vshrl.u32 %v873, 7
        %v875 = vsub.s32 0, %v874
        %v876 = vrot.slane %v871, %v875
        %878 = vmatprep.subr.mxu0 0.0
        %879 = vmatpush1.msra.mxu0 %v855
        %880 = vmatprep.subr.mxu0 0.0
        %881 = vmatpush1.msra.mxu0 %v856
        %882 = vmatprep.subr.mxu0 0.0
        %883 = vmatpush1.msra.mxu0 %v857
        %884 = vmatprep.subr.mxu0 0.0
        %885 = vmatpush1.msra.mxu0 %v858
        %886 = vmatprep.subr.mxu0 0.0
        %887 = vmatpush1.msra.mxu0 %v859
        %888 = vmatprep.subr.mxu0 0.0
        %889 = vmatpush1.msra.mxu0 %v860
        %890 = vmatprep.subr.mxu0 0.0
        %891 = vmatpush1.msra.mxu0 %v861
        %892 = vmatprep.subr.mxu0 0.0
        %893 = vmatpush1.msra.mxu0 %v862
        %894 = vmatprep.subr.mxu0 0.0
        %895 = vmatpush1.msra.mxu0 %v863
        %896 = vmatprep.subr.mxu0 0.0
        %897 = vmatpush1.msra.mxu0 %v864
        %898 = vmatprep.subr.mxu0 0.0
        %899 = vmatpush1.msra.mxu0 %v865
        %900 = vmatprep.subr.mxu0 0.0
        %901 = vmatpush1.msra.mxu0 %v866
        %902 = vmatprep.subr.mxu0 0.0
        %903 = vmatpush1.msra.mxu0 %v867
        %904 = vmatprep.subr.mxu0 0.0
        %905 = vmatpush1.msra.mxu0 %v868
        %906 = vmatprep.subr.mxu0 0.0
        %907 = vmatpush1.msra.mxu0 %v869
        %908 = vmatprep.subr.mxu0 0.0
        %909 = vmatpush1.msra.mxu0 %v870
        %910 = vmatprep.subr.mxu0 0.0
        %911 = vmatpush1.msra.mxu0 0.0
        %912 = vmatprep.subr.mxu0 0.0
        %913 = vmatpush1.msra.mxu0 0.0
        %914 = vmatprep.subr.mxu0 0.0
        %915 = vmatpush1.msra.mxu0 0.0
        %916 = vmatprep.subr.mxu0 0.0
        %917 = vmatpush1.msra.mxu0 0.0
        %918 = vmatprep.subr.mxu0 0.0
        %919 = vmatpush1.msra.mxu0 0.0
        %920 = vmatprep.subr.mxu0 0.0
        %921 = vmatpush1.msra.mxu0 0.0
        %922 = vmatprep.subr.mxu0 0.0
        %923 = vmatpush1.msra.mxu0 0.0
        %924 = vmatprep.subr.mxu0 0.0
        %925 = vmatpush1.msra.mxu0 0.0
        %926 = vmatprep.subr.mxu0 0.0
        %927 = vmatpush1.msra.mxu0 0.0
        %928 = vmatprep.subr.mxu0 0.0
        %929 = vmatpush1.msra.mxu0 0.0
        %930 = vmatprep.subr.mxu0 0.0
        %931 = vmatpush1.msra.mxu0 0.0
        %932 = vmatprep.subr.mxu0 0.0
        %933 = vmatpush1.msra.mxu0 0.0
        %934 = vmatprep.subr.mxu0 0.0
        %935 = vmatpush1.msra.mxu0 0.0
        %936 = vmatprep.subr.mxu0 0.0
        %937 = vmatpush1.msra.mxu0 0.0
        %938 = vmatprep.subr.mxu0 0.0
        %939 = vmatpush1.msra.mxu0 0.0
        %940 = vmatprep.subr.mxu0 0.0
        %941 = vmatpush1.msra.mxu0 0.0
        %942 = vmatprep.mubr.f32.mxu0 0.0
        %943 = vmatmul.mubr.f32.gmra.mrb[0].mxu0 %v843
        %v944 = vpop.f32.mrb[0].mxu0
        %v945 = vadd.f32 %v876, %v944
        %v946 = vpop.f32.mrb[0].mxu0
        %947 = vmatprep.mubr.f32.mxu0 0.0
        %948 = vmatmul.mubr.f32.gmra.mrb[0].mxu0 %v844
        %v949 = vpop.f32.mrb[0].mxu0
        %v950 = vadd.f32 %v876, %v949
        %v951 = vpop.f32.mrb[0].mxu0
        %952 = vmatprep.mubr.f32.mxu0 0.0
        %953 = vmatmul.mubr.f32.gmra.mrb[0].mxu0 %v845
        %v954 = vpop.f32.mrb[0].mxu0
        %v955 = vadd.f32 %v876, %v954
        %v956 = vpop.f32.mrb[0].mxu0
        %957 = vmatprep.mubr.f32.mxu0 0.0
        %958 = vmatmul.mubr.f32.gmra.mrb[0].mxu0 %v846
        %v959 = vpop.f32.mrb[0].mxu0
        %v960 = vadd.f32 %v876, %v959
        %v961 = vpop.f32.mrb[0].mxu0
        %962 = vmatprep.mubr.f32.mxu0 0.0
        %963 = vmatmul.mubr.f32.gmra.mrb[0].mxu0 %v847
        %v964 = vpop.f32.mrb[0].mxu0
        %v965 = vadd.f32 %v876, %v964
        %v966 = vpop.f32.mrb[0].mxu0
        %967 = vmatprep.mubr.f32.mxu0 0.0
        %968 = vmatmul.mubr.f32.gmra.mrb[0].mxu0 %v848
        %v969 = vpop.f32.mrb[0].mxu0
        %v970 = vadd.f32 %v876, %v969
        %v971 = vpop.f32.mrb[0].mxu0
        %972 = vmatprep.mubr.f32.mxu0 0.0
        %973 = vmatmul.mubr.f32.gmra.mrb[0].mxu0 %v849
        %v974 = vpop.f32.mrb[0].mxu0
        %v975 = vadd.f32 %v876, %v974
        %v976 = vpop.f32.mrb[0].mxu0
        %977 = vmatprep.mubr.f32.mxu0 0.0
        %978 = vmatmul.mubr.f32.gmra.mrb[0].mxu0 %v850
        %v979 = vpop.f32.mrb[0].mxu0
        %v980 = vadd.f32 %v876, %v979
        %v981 = vpop.f32.mrb[0].mxu0
        %982 = vmatprep.mubr.f32.mxu0 0.0
        %983 = vmatmul.mubr.f32.gmra.mrb[0].mxu0 %v851
        %v984 = vpop.f32.mrb[0].mxu0
        %v985 = vadd.f32 %v876, %v984
        %v986 = vpop.f32.mrb[0].mxu0
        %987 = vmatprep.mubr.f32.mxu0 0.0
        %988 = vmatmul.mubr.f32.gmra.mrb[0].mxu0 %v852
        %v989 = vpop.f32.mrb[0].mxu0
        %v990 = vadd.f32 %v876, %v989
        %v991 = vpop.f32.mrb[0].mxu0
        %992 = vmatprep.mubr.f32.mxu0 0.0
        %993 = vmatmul.mubr.f32.gmra.mrb[0].mxu0 %v853
        %v994 = vpop.f32.mrb[0].mxu0
        %v995 = vadd.f32 %v876, %v994
        %v996 = vpop.f32.mrb[0].mxu0
        %997 = vmatprep.mubr.f32.mxu0 0.0
        %998 = vmatmul.mubr.f32.gmra.mrb[0].mxu0 %v854
        %v999 = vpop.f32.mrb[0].mxu0
        %v1000 = vadd.f32 %v876, %v999
        %v1001 = vpop.f32.mrb[0].mxu0
        %1002 = vdwg.mxu0
        %vm1003 = vcmask 457728
        %v1004 = vsel %vm1003, %v945, 0.0
        %1005 = vadd.xlane.f32.xlu0 %v1004
        %v1006 = vpop.xlane.xlu0 %1005
        %v1007 = vsel %vm1003, %v950, 0.0
        %1008 = vadd.xlane.f32.xlu0 %v1007
        %v1009 = vpop.xlane.xlu0 %1008
        %v1010 = vsel %vm1003, %v955, 0.0
        %1011 = vadd.xlane.f32.xlu0 %v1010
        %v1012 = vpop.xlane.xlu0 %1011
        %v1013 = vsel %vm1003, %v960, 0.0
        %1014 = vadd.xlane.f32.xlu0 %v1013
        %v1015 = vpop.xlane.xlu0 %1014
        %v1016 = vsel %vm1003, %v965, 0.0
        %1017 = vadd.xlane.f32.xlu0 %v1016
        %v1018 = vpop.xlane.xlu0 %1017
        %v1019 = vsel %vm1003, %v970, 0.0
        %1020 = vadd.xlane.f32.xlu0 %v1019
        %v1021 = vpop.xlane.xlu0 %1020
        %v1022 = vsel %vm1003, %v975, 0.0
        %1023 = vadd.xlane.f32.xlu0 %v1022
        %v1024 = vpop.xlane.xlu0 %1023
        %v1025 = vsel %vm1003, %v980, 0.0
        %1026 = vadd.xlane.f32.xlu0 %v1025
        %v1027 = vpop.xlane.xlu0 %1026
        %v1028 = vsel %vm1003, %v985, 0.0
        %1029 = vadd.xlane.f32.xlu0 %v1028
        %v1030 = vpop.xlane.xlu0 %1029
        %v1031 = vsel %vm1003, %v990, 0.0
        %1032 = vadd.xlane.f32.xlu0 %v1031
        %v1033 = vpop.xlane.xlu0 %1032
        %v1034 = vsel %vm1003, %v995, 0.0
        %1035 = vadd.xlane.f32.xlu0 %v1034
        %v1036 = vpop.xlane.xlu0 %1035
        %v1037 = vsel %vm1003, %v1000, 0.0
        %1038 = vadd.xlane.f32.xlu0 %v1037
        %v1039 = vpop.xlane.xlu0 %1038
        %v1040 = vrcp.pop 56.0
        %v1041 = vmul.f32 %v1006, %v1040
        %v1042 = vmul.f32 %v1009, %v1040
        %v1043 = vmul.f32 %v1012, %v1040
        %v1044 = vmul.f32 %v1015, %v1040
        %v1045 = vmul.f32 %v1018, %v1040
        %v1046 = vmul.f32 %v1021, %v1040
        %v1047 = vmul.f32 %v1024, %v1040
        %v1048 = vmul.f32 %v1027, %v1040
        %v1049 = vmul.f32 %v1030, %v1040
        %v1050 = vmul.f32 %v1033, %v1040
        %v1051 = vmul.f32 %v1036, %v1040
        %v1052 = vmul.f32 %v1039, %v1040
        %v1053 = vsub.f32 %v945, %v1041
        %v1054 = vsub.f32 %v950, %v1042
        %v1055 = vsub.f32 %v955, %v1043
        %v1056 = vsub.f32 %v960, %v1044
        %v1057 = vsub.f32 %v965, %v1045
        %v1058 = vsub.f32 %v970, %v1046
        %v1059 = vsub.f32 %v975, %v1047
        %v1060 = vsub.f32 %v980, %v1048
        %v1061 = vsub.f32 %v985, %v1049
        %v1062 = vsub.f32 %v990, %v1050
        %v1063 = vsub.f32 %v995, %v1051
        %v1064 = vsub.f32 %v1000, %v1052
        %v1065 = vmul.f32 %v1053, %v1053
        %v1066 = vmul.f32 %v1054, %v1054
        %v1067 = vmul.f32 %v1055, %v1055
        %v1068 = vmul.f32 %v1056, %v1056
        %v1069 = vmul.f32 %v1057, %v1057
        %v1070 = vmul.f32 %v1058, %v1058
        %v1071 = vmul.f32 %v1059, %v1059
        %v1072 = vmul.f32 %v1060, %v1060
        %v1073 = vmul.f32 %v1061, %v1061
        %v1074 = vmul.f32 %v1062, %v1062
        %v1075 = vmul.f32 %v1063, %v1063
        %v1076 = vmul.f32 %v1064, %v1064
        %v1077 = vsel %vm1003, %v1065, 0.0
        %1078 = vadd.xlane.f32.xlu0 %v1077
        %v1079 = vpop.xlane.xlu0 %1078
        %v1080 = vsel %vm1003, %v1066, 0.0
        %1081 = vadd.xlane.f32.xlu0 %v1080
        %v1082 = vpop.xlane.xlu0 %1081
        %v1083 = vsel %vm1003, %v1067, 0.0
        %1084 = vadd.xlane.f32.xlu0 %v1083
        %v1085 = vpop.xlane.xlu0 %1084
        %v1086 = vsel %vm1003, %v1068, 0.0
        %1087 = vadd.xlane.f32.xlu0 %v1086
        %v1088 = vpop.xlane.xlu0 %1087
        %v1089 = vsel %vm1003, %v1069, 0.0
        %1090 = vadd.xlane.f32.xlu0 %v1089
        %v1091 = vpop.xlane.xlu0 %1090
        %v1092 = vsel %vm1003, %v1070, 0.0
        %1093 = vadd.xlane.f32.xlu0 %v1092
        %v1094 = vpop.xlane.xlu0 %1093
        %v1095 = vsel %vm1003, %v1071, 0.0
        %1096 = vadd.xlane.f32.xlu0 %v1095
        %v1097 = vpop.xlane.xlu0 %1096
        %v1098 = vsel %vm1003, %v1072, 0.0
        %1099 = vadd.xlane.f32.xlu0 %v1098
        %v1100 = vpop.xlane.xlu0 %1099
        %v1101 = vsel %vm1003, %v1073, 0.0
        %1102 = vadd.xlane.f32.xlu0 %v1101
        %v1103 = vpop.xlane.xlu0 %1102
        %v1104 = vsel %vm1003, %v1074, 0.0
        %1105 = vadd.xlane.f32.xlu0 %v1104
        %v1106 = vpop.xlane.xlu0 %1105
        %v1107 = vsel %vm1003, %v1075, 0.0
        %1108 = vadd.xlane.f32.xlu0 %v1107
        %v1109 = vpop.xlane.xlu0 %1108
        %v1110 = vsel %vm1003, %v1076, 0.0
        %1111 = vadd.xlane.f32.xlu0 %v1110
        %v1112 = vpop.xlane.xlu0 %1111
        %v1113 = vmul.f32 %v1079, %v1040
        %v1114 = vmul.f32 %v1082, %v1040
        %v1115 = vmul.f32 %v1085, %v1040
        %v1116 = vmul.f32 %v1088, %v1040
        %v1117 = vmul.f32 %v1091, %v1040
        %v1118 = vmul.f32 %v1094, %v1040
        %v1119 = vmul.f32 %v1097, %v1040
        %v1120 = vmul.f32 %v1100, %v1040
        %v1121 = vmul.f32 %v1103, %v1040
        %v1122 = vmul.f32 %v1106, %v1040
        %v1123 = vmul.f32 %v1109, %v1040
        %v1124 = vmul.f32 %v1112, %v1040
        %v1125 = vadd.f32 %v1113, 1e-05
        %v1126 = vadd.f32 %v1114, 1e-05
        %v1127 = vadd.f32 %v1115, 1e-05
        %v1128 = vadd.f32 %v1116, 1e-05
        %v1129 = vadd.f32 %v1117, 1e-05
        %v1130 = vadd.f32 %v1118, 1e-05
        %v1131 = vadd.f32 %v1119, 1e-05
        %v1132 = vadd.f32 %v1120, 1e-05
        %v1133 = vadd.f32 %v1121, 1e-05
        %v1134 = vadd.f32 %v1122, 1e-05
        %v1135 = vadd.f32 %v1123, 1e-05
        %v1136 = vadd.f32 %v1124, 1e-05
        %v1137 = vrsqrt.pop %v1125
        %v1138 = vrsqrt.pop %v1126
        %v1139 = vrsqrt.pop %v1127
        %v1140 = vrsqrt.pop %v1128
        %v1141 = vrsqrt.pop %v1129
        %v1142 = vrsqrt.pop %v1130
        %v1143 = vrsqrt.pop %v1131
        %v1144 = vrsqrt.pop %v1132
        %v1145 = vrsqrt.pop %v1133
        %v1146 = vrsqrt.pop %v1134
        %v1147 = vrsqrt.pop %v1135
        %v1148 = vrsqrt.pop %v1136
        %v1149 = vmul.f32 %v1053, %v1137
        %v1150 = vmul.f32 %v1054, %v1138
        %v1151 = vmul.f32 %v1055, %v1139
        %v1152 = vmul.f32 %v1056, %v1140
        %v1153 = vmul.f32 %v1057, %v1141
        %v1154 = vmul.f32 %v1058, %v1142
        %v1155 = vmul.f32 %v1059, %v1143
        %v1156 = vmul.f32 %v1060, %v1144
        %v1157 = vmul.f32 %v1061, %v1145
        %v1158 = vmul.f32 %v1062, %v1146
        %v1159 = vmul.f32 %v1063, %v1147
        %v1160 = vmul.f32 %v1064, %v1148
        %v1161 = vld [vmem:[%s3] sm:$0x1]
        %v1163 = vlaneseq
        %v1164 = vshrl.u32 %v1163, 7
        %v1165 = vsub.s32 0, %v1164
        %v1166 = vrot.slane %v1161, %v1165
        %v1168 = vmul.f32 %v1149, %v1166
        %v1169 = vmul.f32 %v1150, %v1166
        %v1170 = vmul.f32 %v1151, %v1166
        %v1171 = vmul.f32 %v1152, %v1166
        %v1172 = vmul.f32 %v1153, %v1166
        %v1173 = vmul.f32 %v1154, %v1166
        %v1174 = vmul.f32 %v1155, %v1166
        %v1175 = vmul.f32 %v1156, %v1166
        %v1176 = vmul.f32 %v1157, %v1166
        %v1177 = vmul.f32 %v1158, %v1166
        %v1178 = vmul.f32 %v1159, %v1166
        %v1179 = vmul.f32 %v1160, %v1166
        %v1180 = vld [vmem:[%s4] sm:$0x1]
        %v1182 = vlaneseq
        %v1183 = vshrl.u32 %v1182, 7
        %v1184 = vsub.s32 0, %v1183
        %v1185 = vrot.slane %v1180, %v1184
        %v1187 = vadd.f32 %v1168, %v1185
        %v1188 = vadd.f32 %v1169, %v1185
        %v1189 = vadd.f32 %v1170, %v1185
        %v1190 = vadd.f32 %v1171, %v1185
        %v1191 = vadd.f32 %v1172, %v1185
        %v1192 = vadd.f32 %v1173, %v1185
        %v1193 = vadd.f32 %v1174, %v1185
        %v1194 = vadd.f32 %v1175, %v1185
        %v1195 = vadd.f32 %v1176, %v1185
        %v1196 = vadd.f32 %v1177, %v1185
        %v1197 = vadd.f32 %v1178, %v1185
        %v1198 = vadd.f32 %v1179, %v1185
        %vm1199 = vcmp.gt.f32.partialorder %v1187, 0.0
        %vm1200 = vcmp.gt.f32.partialorder %v1188, 0.0
        %vm1201 = vcmp.gt.f32.partialorder %v1189, 0.0
        %vm1202 = vcmp.gt.f32.partialorder %v1190, 0.0
        %vm1203 = vcmp.gt.f32.partialorder %v1191, 0.0
        %vm1204 = vcmp.gt.f32.partialorder %v1192, 0.0
        %vm1205 = vcmp.gt.f32.partialorder %v1193, 0.0
        %vm1206 = vcmp.gt.f32.partialorder %v1194, 0.0
        %vm1207 = vcmp.gt.f32.partialorder %v1195, 0.0
        %vm1208 = vcmp.gt.f32.partialorder %v1196, 0.0
        %vm1209 = vcmp.gt.f32.partialorder %v1197, 0.0
        %vm1210 = vcmp.gt.f32.partialorder %v1198, 0.0
        %v1211 = vmul.f32 %v1187, 0.01
        %v1212 = vmul.f32 %v1188, 0.01
        %v1213 = vmul.f32 %v1189, 0.01
        %v1214 = vmul.f32 %v1190, 0.01
        %v1215 = vmul.f32 %v1191, 0.01
        %v1216 = vmul.f32 %v1192, 0.01
        %v1217 = vmul.f32 %v1193, 0.01
        %v1218 = vmul.f32 %v1194, 0.01
        %v1219 = vmul.f32 %v1195, 0.01
        %v1220 = vmul.f32 %v1196, 0.01
        %v1221 = vmul.f32 %v1197, 0.01
        %v1222 = vmul.f32 %v1198, 0.01
        %v1223 = vsel %vm1199, %v1187, %v1211
        %v1224 = vsel %vm1200, %v1188, %v1212
        %v1225 = vsel %vm1201, %v1189, %v1213
        %v1226 = vsel %vm1202, %v1190, %v1214
        %v1227 = vsel %vm1203, %v1191, %v1215
        %v1228 = vsel %vm1204, %v1192, %v1216
        %v1229 = vsel %vm1205, %v1193, %v1217
        %v1230 = vsel %vm1206, %v1194, %v1218
        %v1231 = vsel %vm1207, %v1195, %v1219
        %v1232 = vsel %vm1208, %v1196, %v1220
        %v1233 = vsel %vm1209, %v1197, %v1221
        %v1234 = vsel %vm1210, %v1198, %v1222
        %v1235 = vld [vmem:[%s5] sm:$0x1]
        %v1236 = vld [vmem:[%s6] sm:$0x1]
        %v1237 = vld [vmem:[%s7] sm:$0x1]
        %v1238 = vld [vmem:[%s8] sm:$0x1]
        %v1240 = vlaneseq
        %v1241 = vshrl.u32 %v1240, 7
        %v1242 = vsub.s32 0, %v1241
        %v1243 = vrot.slane %v1236, %v1242
        %v1245 = vmul.f32 %v1243, 0.0
        %v1247 = vlaneseq
        %v1248 = vshrl.u32 %v1247, 7
        %v1249 = vsub.s32 0, %v1248
        %v1250 = vrot.slane %v1237, %v1249
        %v1252 = vmul.f32 %v1250, 0.0
        %v1253 = vadd.f32 %v1245, %v1252
        %v1255 = vlaneseq
        %v1256 = vshrl.u32 %v1255, 7
        %v1257 = vsub.s32 0, %v1256
        %v1258 = vrot.slane %v1238, %v1257
        %v1260 = vmul.f32 %v1258, 0.0
        %v1261 = vadd.f32 %v1253, %v1260
        %v1263 = vlaneseq
        %v1264 = vshrl.u32 %v1263, 7
        %v1265 = vsub.s32 0, %v1264
        %v1266 = vrot.slane %v1235, %v1265
        %v1268 = vmul.f32 %v1266, 0.0
        %v1269 = vsub.f32 1.0, %v1235
        %v1270 = vsub.f32 %v1223, %v1261
        %v1272 = vlaneseq
        %v1273 = vshrl.u32 %v1272, 7
        %v1274 = vsub.s32 0, %v1273
        %v1275 = vrot.slane %v1269, %v1274
        %v1277 = vmul.f32 %v1275, %v1270
        %v1278 = vadd.f32 %v1268, %v1277
        %vm1279 = vcmp.gt.f32.partialorder %v1278, 1.0
        %v1280 = vsel %vm1279, 1, 0
        %v1281 = vcvt.s32.f32 %v1280
        %1282 = vst.msk [vmem:[%s829] sm:$0xff] %vm1003, %v1281
        %v1283 = vmul.f32 %v1243, %v1261
        %v1284 = vmul.f32 %v1250, %v1278
        %v1285 = vadd.f32 %v1283, %v1284
        %v1286 = vmul.f32 %v1258, %v1281
        %v1287 = vadd.f32 %v1285, %v1286
        %v1288 = vsub.f32 %v1278, %v1281
        %v1289 = vmul.f32 %v1266, %v1288
        %v1290 = vsub.f32 %v1224, %v1287
        %v1291 = vmul.f32 %v1275, %v1290
        %v1292 = vadd.f32 %v1289, %v1291
        %vm1293 = vcmp.gt.f32.partialorder %v1292, 1.0
        %v1294 = vsel %vm1293, 1, 0
        %v1295 = vcvt.s32.f32 %v1294
        %1296 = vst.msk [vmem:[%s829 + $0x8] sm:$0xff] %vm1003, %v1295
        %v1297 = vmul.f32 %v1243, %v1287
        %v1298 = vmul.f32 %v1250, %v1292
        %v1299 = vadd.f32 %v1297, %v1298
        %v1300 = vmul.f32 %v1258, %v1295
        %v1301 = vadd.f32 %v1299, %v1300
        %v1302 = vsub.f32 %v1292, %v1295
        %v1303 = vmul.f32 %v1266, %v1302
        %v1304 = vsub.f32 %v1225, %v1301
        %v1305 = vmul.f32 %v1275, %v1304
        %v1306 = vadd.f32 %v1303, %v1305
        %vm1307 = vcmp.gt.f32.partialorder %v1306, 1.0
        %v1308 = vsel %vm1307, 1, 0
        %v1309 = vcvt.s32.f32 %v1308
        %1310 = vst.msk [vmem:[%s829 + $0x10] sm:$0xff] %vm1003, %v1309
        %v1311 = vmul.f32 %v1243, %v1301
        %v1312 = vmul.f32 %v1250, %v1306
        %v1313 = vadd.f32 %v1311, %v1312
        %v1314 = vmul.f32 %v1258, %v1309
        %v1315 = vadd.f32 %v1313, %v1314
        %v1316 = vsub.f32 %v1306, %v1309
        %v1317 = vmul.f32 %v1266, %v1316
        %v1318 = vsub.f32 %v1226, %v1315
        %v1319 = vmul.f32 %v1275, %v1318
        %v1320 = vadd.f32 %v1317, %v1319
        %vm1321 = vcmp.gt.f32.partialorder %v1320, 1.0
        %v1322 = vsel %vm1321, 1, 0
        %v1323 = vcvt.s32.f32 %v1322
        %1324 = vst.msk [vmem:[%s829 + $0x18] sm:$0xff] %vm1003, %v1323
        %v1325 = vmul.f32 %v1243, %v1315
        %v1326 = vmul.f32 %v1250, %v1320
        %v1327 = vadd.f32 %v1325, %v1326
        %v1328 = vmul.f32 %v1258, %v1323
        %v1329 = vadd.f32 %v1327, %v1328
        %v1330 = vsub.f32 %v1320, %v1323
        %v1331 = vmul.f32 %v1266, %v1330
        %v1332 = vsub.f32 %v1227, %v1329
        %v1333 = vmul.f32 %v1275, %v1332
        %v1334 = vadd.f32 %v1331, %v1333
        %vm1335 = vcmp.gt.f32.partialorder %v1334, 1.0
        %v1336 = vsel %vm1335, 1, 0
        %v1337 = vcvt.s32.f32 %v1336
        %1338 = vst.msk [vmem:[%s829 + $0x20] sm:$0xff] %vm1003, %v1337
        %v1339 = vmul.f32 %v1243, %v1329
        %v1340 = vmul.f32 %v1250, %v1334
        %v1341 = vadd.f32 %v1339, %v1340
        %v1342 = vmul.f32 %v1258, %v1337
        %v1343 = vadd.f32 %v1341, %v1342
        %v1344 = vsub.f32 %v1334, %v1337
        %v1345 = vmul.f32 %v1266, %v1344
        %v1346 = vsub.f32 %v1228, %v1343
        %v1347 = vmul.f32 %v1275, %v1346
        %v1348 = vadd.f32 %v1345, %v1347
        %vm1349 = vcmp.gt.f32.partialorder %v1348, 1.0
        %v1350 = vsel %vm1349, 1, 0
        %v1351 = vcvt.s32.f32 %v1350
        %1352 = vst.msk [vmem:[%s829 + $0x28] sm:$0xff] %vm1003, %v1351
        %v1353 = vmul.f32 %v1243, %v1343
        %v1354 = vmul.f32 %v1250, %v1348
        %v1355 = vadd.f32 %v1353, %v1354
        %v1356 = vmul.f32 %v1258, %v1351
        %v1357 = vadd.f32 %v1355, %v1356
        %v1358 = vsub.f32 %v1348, %v1351
        %v1359 = vmul.f32 %v1266, %v1358
        %v1360 = vsub.f32 %v1229, %v1357
        %v1361 = vmul.f32 %v1275, %v1360
        %v1362 = vadd.f32 %v1359, %v1361
        %vm1363 = vcmp.gt.f32.partialorder %v1362, 1.0
        %v1364 = vsel %vm1363, 1, 0
        %v1365 = vcvt.s32.f32 %v1364
        %1366 = vst.msk [vmem:[%s829 + $0x30] sm:$0xff] %vm1003, %v1365
        %v1367 = vmul.f32 %v1243, %v1357
        %v1368 = vmul.f32 %v1250, %v1362
        %v1369 = vadd.f32 %v1367, %v1368
        %v1370 = vmul.f32 %v1258, %v1365
        %v1371 = vadd.f32 %v1369, %v1370
        %v1372 = vsub.f32 %v1362, %v1365
        %v1373 = vmul.f32 %v1266, %v1372
        %v1374 = vsub.f32 %v1230, %v1371
        %v1375 = vmul.f32 %v1275, %v1374
        %v1376 = vadd.f32 %v1373, %v1375
        %vm1377 = vcmp.gt.f32.partialorder %v1376, 1.0
        %v1378 = vsel %vm1377, 1, 0
        %v1379 = vcvt.s32.f32 %v1378
        %1380 = vst.msk [vmem:[%s829 + $0x38] sm:$0xff] %vm1003, %v1379
        %v1381 = vmul.f32 %v1243, %v1371
        %v1382 = vmul.f32 %v1250, %v1376
        %v1383 = vadd.f32 %v1381, %v1382
        %v1384 = vmul.f32 %v1258, %v1379
        %v1385 = vadd.f32 %v1383, %v1384
        %v1386 = vsub.f32 %v1376, %v1379
        %v1387 = vmul.f32 %v1266, %v1386
        %v1388 = vsub.f32 %v1231, %v1385
        %v1389 = vmul.f32 %v1275, %v1388
        %v1390 = vadd.f32 %v1387, %v1389
        %vm1391 = vcmp.gt.f32.partialorder %v1390, 1.0
        %v1392 = vsel %vm1391, 1, 0
        %v1393 = vcvt.s32.f32 %v1392
        %1394 = vst.msk [vmem:[%s829 + $0x40] sm:$0xff] %vm1003, %v1393
        %v1395 = vmul.f32 %v1243, %v1385
        %v1396 = vmul.f32 %v1250, %v1390
        %v1397 = vadd.f32 %v1395, %v1396
        %v1398 = vmul.f32 %v1258, %v1393
        %v1399 = vadd.f32 %v1397, %v1398
        %v1400 = vsub.f32 %v1390, %v1393
        %v1401 = vmul.f32 %v1266, %v1400
        %v1402 = vsub.f32 %v1232, %v1399
        %v1403 = vmul.f32 %v1275, %v1402
        %v1404 = vadd.f32 %v1401, %v1403
        %vm1405 = vcmp.gt.f32.partialorder %v1404, 1.0
        %v1406 = vsel %vm1405, 1, 0
        %v1407 = vcvt.s32.f32 %v1406
        %1408 = vst.msk [vmem:[%s829 + $0x48] sm:$0xff] %vm1003, %v1407
        %v1409 = vmul.f32 %v1243, %v1399
        %v1410 = vmul.f32 %v1250, %v1404
        %v1411 = vadd.f32 %v1409, %v1410
        %v1412 = vmul.f32 %v1258, %v1407
        %v1413 = vadd.f32 %v1411, %v1412
        %v1414 = vsub.f32 %v1404, %v1407
        %v1415 = vmul.f32 %v1266, %v1414
        %v1416 = vsub.f32 %v1233, %v1413
        %v1417 = vmul.f32 %v1275, %v1416
        %v1418 = vadd.f32 %v1415, %v1417
        %vm1419 = vcmp.gt.f32.partialorder %v1418, 1.0
        %v1420 = vsel %vm1419, 1, 0
        %v1421 = vcvt.s32.f32 %v1420
        %1422 = vst.msk [vmem:[%s829 + $0x50] sm:$0xff] %vm1003, %v1421
        %v1423 = vmul.f32 %v1243, %v1413
        %v1424 = vmul.f32 %v1250, %v1418
        %v1425 = vadd.f32 %v1423, %v1424
        %v1426 = vmul.f32 %v1258, %v1421
        %v1427 = vadd.f32 %v1425, %v1426
        %v1428 = vsub.f32 %v1418, %v1421
        %v1429 = vmul.f32 %v1266, %v1428
        %v1430 = vsub.f32 %v1234, %v1427
        %v1431 = vmul.f32 %v1275, %v1430
        %v1432 = vadd.f32 %v1429, %v1431
        %vm1433 = vcmp.gt.f32.partialorder %v1432, 1.0
        %v1434 = vsel %vm1433, 1, 0
        %v1435 = vcvt.s32.f32 %v1434
        %1436 = vst.msk [vmem:[%s829 + $0x58] sm:$0xff] %vm1003, %v1435
        %v1437 = vld [vmem:[%s829] sm:$0xff]
        %v1438 = vld [vmem:[%s829 + $0x8] sm:$0xff]
        %v1439 = vld [vmem:[%s829 + $0x10] sm:$0xff]
        %v1440 = vld [vmem:[%s829 + $0x18] sm:$0xff]
        %v1441 = vld [vmem:[%s829 + $0x20] sm:$0xff]
        %v1442 = vld [vmem:[%s829 + $0x28] sm:$0xff]
        %v1443 = vld [vmem:[%s829 + $0x30] sm:$0xff]
        %v1444 = vld [vmem:[%s829 + $0x38] sm:$0xff]
        %v1445 = vld [vmem:[%s829 + $0x40] sm:$0xff]
        %v1446 = vld [vmem:[%s829 + $0x48] sm:$0xff]
        %v1447 = vld [vmem:[%s829 + $0x50] sm:$0xff]
        %v1448 = vld [vmem:[%s829 + $0x58] sm:$0xff]
        %v1449 = vpack.c.bf16 %v1438, %v1437
        %v1450 = vpack.c.bf16 %v1440, %v1439
        %v1451 = vpack.c.bf16 %v1442, %v1441
        %v1452 = vpack.c.bf16 %v1444, %v1443
        %v1453 = vpack.c.bf16 %v1446, %v1445
        %v1454 = vpack.c.bf16 %v1448, %v1447
        %v1455 = vld [vmem:[%s9] sm:$0xf]
        %v1456 = vld [vmem:[%s9 + $0x4] sm:$0xf]
        %v1457 = vld [vmem:[%s9 + $0x8] sm:$0xf]
        %v1458 = vld [vmem:[%s9 + $0xc] sm:$0xf]
        %v1459 = vld [vmem:[%s9 + $0x10] sm:$0xf]
        %v1460 = vld [vmem:[%s9 + $0x14] sm:$0xf]
        %v1461 = vld [vmem:[%s9 + $0x18] sm:$0xf]
        %v1462 = vld [vmem:[%s10] sm:$0x1]
        %v1464 = vlaneseq
        %v1465 = vshrl.u32 %v1464, 7
        %v1466 = vsub.s32 0, %v1465
        %v1467 = vrot.slane %v1462, %v1466
        %v1476 = vunpack.c.l.b16 %v1455
        %v1477 = vunpack.c.l.b16 %v1456
        %v1478 = vunpack.c.l.b16 %v1457
        %v1479 = vunpack.c.l.b16 %v1458
        %v1480 = vunpack.c.l.b16 %v1459
        %v1481 = vunpack.c.l.b16 %v1460
        %v1482 = vunpack.c.l.b16 %v1461
        %v1483 = vpack.c.b16 %v1477, %v1476
        %v1484 = vpack.c.b16 %v1479, %v1478
        %v1485 = vpack.c.b16 %v1481, %v1480
        %v1486 = vpack.c.b16 %v1482, %v1482
        %v1491 = vsel %vm1003, %v1449, 0
        %v1494 = vsel %vm1003, %v1450, 0
        %v1497 = vsel %vm1003, %v1451, 0
        %v1500 = vsel %vm1003, %v1452, 0
        %v1503 = vsel %vm1003, %v1453, 0
        %v1506 = vsel %vm1003, %v1454, 0
        %vm1508 = vcmask 1043456
        %v1510 = vsel %vm1508, %v1486, 0
        %1512 = vmatprep.subr.bf16.mxu0 0
        %1513 = vmatpush1.bf16.msra.mxu0 %v1483
        %1514 = vmatprep.subr.bf16.mxu0 0
        %1515 = vmatpush1.bf16.msra.mxu0 %v1484
        %1516 = vmatprep.subr.bf16.mxu0 0
        %1517 = vmatpush1.bf16.msra.mxu0 %v1485
        %1518 = vmatprep.subr.bf16.mxu0 0
        %1519 = vmatpush1.bf16.msra.mxu0 %v1510
        %1520 = vmatprep.subr.bf16.mxu0 0
        %1521 = vmatpush1.bf16.msra.mxu0 0
        %1522 = vmatprep.subr.bf16.mxu0 0
        %1523 = vmatpush1.bf16.msra.mxu0 0
        %1524 = vmatprep.subr.bf16.mxu0 0
        %1525 = vmatpush1.bf16.msra.mxu0 0
        %1526 = vmatprep.subr.bf16.mxu0 0
        %1527 = vmatpush1.bf16.msra.mxu0 0
        %1528 = vmatprep.subr.bf16.mxu0 0
        %1529 = vmatpush1.bf16.msra.mxu0 0
        %1530 = vmatprep.subr.bf16.mxu0 0
        %1531 = vmatpush1.bf16.msra.mxu0 0
        %1532 = vmatprep.subr.bf16.mxu0 0
        %1533 = vmatpush1.bf16.msra.mxu0 0
        %1534 = vmatprep.subr.bf16.mxu0 0
        %1535 = vmatpush1.bf16.msra.mxu0 0
        %1536 = vmatprep.subr.bf16.mxu0 0
        %1537 = vmatpush1.bf16.msra.mxu0 0
        %1538 = vmatprep.subr.bf16.mxu0 0
        %1539 = vmatpush1.bf16.msra.mxu0 0
        %1540 = vmatprep.subr.bf16.mxu0 0
        %1541 = vmatpush1.bf16.msra.mxu0 0
        %1542 = vmatprep.subr.bf16.mxu0 0
        %1543 = vmatpush1.bf16.msra.mxu0 0
        %1544 = vmatprep.mubr.bf16.mxu0 0
        %1545 = vmatmul.mubr.bf16.gmra.mrb[0].mxu0 %v1491
        %v1546 = vpop.f32.mrb[0].mxu0
        %v1547 = vadd.f32 %v1467, %v1546
        %v1548 = vpop.f32.mrb[0].mxu0
        %v1549 = vpop.f32.mrb[0].mxu0
        %v1550 = vadd.f32 %v1467, %v1549
        %v1551 = vpop.f32.mrb[0].mxu0
        %1552 = vmatprep.mubr.bf16.mxu0 0
        %1553 = vmatmul.mubr.bf16.gmra.mrb[0].mxu0 %v1494
        %v1554 = vpop.f32.mrb[0].mxu0
        %v1555 = vadd.f32 %v1467, %v1554
        %v1556 = vpop.f32.mrb[0].mxu0
        %v1557 = vpop.f32.mrb[0].mxu0
        %v1558 = vadd.f32 %v1467, %v1557
        %v1559 = vpop.f32.mrb[0].mxu0
        %1560 = vmatprep.mubr.bf16.mxu0 0
        %1561 = vmatmul.mubr.bf16.gmra.mrb[0].mxu0 %v1497
        %v1562 = vpop.f32.mrb[0].mxu0
        %v1563 = vadd.f32 %v1467, %v1562
        %v1564 = vpop.f32.mrb[0].mxu0
        %v1565 = vpop.f32.mrb[0].mxu0
        %v1566 = vadd.f32 %v1467, %v1565
        %v1567 = vpop.f32.mrb[0].mxu0
        %1568 = vmatprep.mubr.bf16.mxu0 0
        %1569 = vmatmul.mubr.bf16.gmra.mrb[0].mxu0 %v1500
        %v1570 = vpop.f32.mrb[0].mxu0
        %v1571 = vadd.f32 %v1467, %v1570
        %v1572 = vpop.f32.mrb[0].mxu0
        %v1573 = vpop.f32.mrb[0].mxu0
        %v1574 = vadd.f32 %v1467, %v1573
        %v1575 = vpop.f32.mrb[0].mxu0
        %1576 = vmatprep.mubr.bf16.mxu0 0
        %1577 = vmatmul.mubr.bf16.gmra.mrb[0].mxu0 %v1503
        %v1578 = vpop.f32.mrb[0].mxu0
        %v1579 = vadd.f32 %v1467, %v1578
        %v1580 = vpop.f32.mrb[0].mxu0
        %v1581 = vpop.f32.mrb[0].mxu0
        %v1582 = vadd.f32 %v1467, %v1581
        %v1583 = vpop.f32.mrb[0].mxu0
        %1584 = vmatprep.mubr.bf16.mxu0 0
        %1585 = vmatmul.mubr.bf16.gmra.mrb[0].mxu0 %v1506
        %v1586 = vpop.f32.mrb[0].mxu0
        %v1587 = vadd.f32 %v1467, %v1586
        %v1588 = vpop.f32.mrb[0].mxu0
        %v1589 = vpop.f32.mrb[0].mxu0
        %v1590 = vadd.f32 %v1467, %v1589
        %v1591 = vpop.f32.mrb[0].mxu0
        %1592 = vdwg.mxu0
        %v1593 = vld [vmem:[%s12] sm:$0x1]
        %v1594 = vld [vmem:[%s13] sm:$0x1]
        %v1595 = vld [vmem:[%s14] sm:$0x1]
        %v1596 = vld [vmem:[%s15] sm:$0x1]
        %v1597 = vld [vmem:[%s11] sm:$0xf]
        %v1598 = vld [vmem:[%s11 + $0x4] sm:$0xf]
        %v1599 = vld [vmem:[%s11 + $0x8] sm:$0xf]
        %v1600 = vld [vmem:[%s11 + $0xc] sm:$0xf]
        %v1605 = vunpack.c.l.b16 %v1597
        %v1606 = vunpack.c.l.b16 %v1598
        %v1607 = vunpack.c.l.b16 %v1599
        %v1608 = vunpack.c.l.b16 %v1600
        %v1609 = vpack.c.b16 %v1606, %v1605
        %v1610 = vpack.c.b16 %v1608, %v1607
        %vm1613 = vcmask 261120
        %v1615 = vsel %vm1613, 0, 0
        %1617 = vmatprep.subr.bf16.mxu0 0
        %1618 = vmatpush1.bf16.msra.mxu0 %v1609
        %1619 = vmatprep.subr.bf16.mxu0 0
        %1620 = vmatpush1.bf16.msra.mxu0 %v1610
        %1621 = vmatprep.subr.bf16.mxu0 0
        %1622 = vmatpush1.bf16.msra.mxu0 0
        %1623 = vmatprep.subr.bf16.mxu0 0
        %1624 = vmatpush1.bf16.msra.mxu0 0
        %1625 = vmatprep.subr.bf16.mxu0 0
        %1626 = vmatpush1.bf16.msra.mxu0 0
        %1627 = vmatprep.subr.bf16.mxu0 0
        %1628 = vmatpush1.bf16.msra.mxu0 0
        %1629 = vmatprep.subr.bf16.mxu0 0
        %1630 = vmatpush1.bf16.msra.mxu0 0
        %1631 = vmatprep.subr.bf16.mxu0 0
        %1632 = vmatpush1.bf16.msra.mxu0 0
        %1633 = vmatprep.subr.bf16.mxu0 0
        %1634 = vmatpush1.bf16.msra.mxu0 0
        %1635 = vmatprep.subr.bf16.mxu0 0
        %1636 = vmatpush1.bf16.msra.mxu0 0
        %1637 = vmatprep.subr.bf16.mxu0 0
        %1638 = vmatpush1.bf16.msra.mxu0 0
        %1639 = vmatprep.subr.bf16.mxu0 0
        %1640 = vmatpush1.bf16.msra.mxu0 0
        %1641 = vmatprep.subr.bf16.mxu0 0
        %1642 = vmatpush1.bf16.msra.mxu0 0
        %1643 = vmatprep.subr.bf16.mxu0 0
        %1644 = vmatpush1.bf16.msra.mxu0 0
        %1645 = vmatprep.subr.bf16.mxu0 0
        %1646 = vmatpush1.bf16.msra.mxu0 0
        %1647 = vmatprep.subr.bf16.mxu0 0
        %1648 = vmatpush1.bf16.msra.mxu0 0
        %1649 = vmatprep.mubr.bf16.mxu0 0
        %1650 = vmatmul.mubr.bf16.gmra.mrb[0].mxu0 %v1615
        %v1651 = vpop.f32.mrb[0].mxu0
        %v1652 = vadd.f32 0.0, %v1651
        %v1653 = vpop.f32.mrb[0].mxu0
        %v1654 = vpop.f32.mrb[0].mxu0
        %v1655 = vpop.f32.mrb[0].mxu0
        %1656 = vdwg.mxu0
        %v1657 = vadd.f32 %v1547, %v1652
        %v1659 = vlaneseq
        %v1660 = vshrl.u32 %v1659, 7
        %v1661 = vsub.s32 0, %v1660
        %v1662 = vrot.slane %v1594, %v1661
        %v1664 = vmul.f32 %v1662, 0.0
        %v1666 = vlaneseq
        %v1667 = vshrl.u32 %v1666, 7
        %v1668 = vsub.s32 0, %v1667
        %v1669 = vrot.slane %v1595, %v1668
        %v1671 = vmul.f32 %v1669, 0.0
        %v1672 = vadd.f32 %v1664, %v1671
        %v1674 = vlaneseq
        %v1675 = vshrl.u32 %v1674, 7
        %v1676 = vsub.s32 0, %v1675
        %v1677 = vrot.slane %v1596, %v1676
        %v1679 = vmul.f32 %v1677, 0.0
        %v1680 = vadd.f32 %v1672, %v1679
        %v1682 = vlaneseq
        %v1683 = vshrl.u32 %v1682, 7
        %v1684 = vsub.s32 0, %v1683
        %v1685 = vrot.slane %v1593, %v1684
        %v1687 = vmul.f32 %v1685, 0.0
        %v1688 = vsub.f32 1.0, %v1593
        %v1689 = vsub.f32 %v1657, %v1680
        %v1691 = vlaneseq
        %v1692 = vshrl.u32 %v1691, 7
        %v1693 = vsub.s32 0, %v1692
        %v1694 = vrot.slane %v1688, %v1693
        %v1696 = vmul.f32 %v1694, %v1689
        %v1697 = vadd.f32 %v1687, %v1696
        %vm1698 = vcmp.gt.f32.partialorder %v1697, 1.0
        %v1699 = vsel %vm1698, 1, 0
        %v1700 = vcvt.s32.f32 %v1699
        %1702 = vrot.lane.b32.xlu0 %v1700, 56
        %v1703 = vpop.permute.xlu0 %1702
        %vm1705 = vcmask 720320
        %1706 = vst.msk [vmem:[%s829] sm:$0xff] %vm1705, %v1703
        %v1707 = vpack.c.bf16 %v1700, %v1700
        %v1709 = vsel %vm1613, %v1707, 0
        %1711 = vmatprep.subr.bf16.mxu0 0
        %1712 = vmatpush1.bf16.msra.mxu0 %v1609
        %1713 = vmatprep.subr.bf16.mxu0 0
        %1714 = vmatpush1.bf16.msra.mxu0 %v1610
        %1715 = vmatprep.subr.bf16.mxu0 0
        %1716 = vmatpush1.bf16.msra.mxu0 0
        %1717 = vmatprep.subr.bf16.mxu0 0
        %1718 = vmatpush1.bf16.msra.mxu0 0
        %1719 = vmatprep.subr.bf16.mxu0 0
        %1720 = vmatpush1.bf16.msra.mxu0 0
        %1721 = vmatprep.subr.bf16.mxu0 0
        %1722 = vmatpush1.bf16.msra.mxu0 0
        %1723 = vmatprep.subr.bf16.mxu0 0
        %1724 = vmatpush1.bf16.msra.mxu0 0
        %1725 = vmatprep.subr.bf16.mxu0 0
        %1726 = vmatpush1.bf16.msra.mxu0 0
        %1727 = vmatprep.subr.bf16.mxu0 0
        %1728 = vmatpush1.bf16.msra.mxu0 0
        %1729 = vmatprep.subr.bf16.mxu0 0
        %1730 = vmatpush1.bf16.msra.mxu0 0
        %1731 = vmatprep.subr.bf16.mxu0 0
        %1732 = vmatpush1.bf16.msra.mxu0 0
        %1733 = vmatprep.subr.bf16.mxu0 0
        %1734 = vmatpush1.bf16.msra.mxu0 0
        %1735 = vmatprep.subr.bf16.mxu0 0
        %1736 = vmatpush1.bf16.msra.mxu0 0
        %1737 = vmatprep.subr.bf16.mxu0 0
        %1738 = vmatpush1.bf16.msra.mxu0 0
        %1739 = vmatprep.subr.bf16.mxu0 0
        %1740 = vmatpush1.bf16.msra.mxu0 0
        %1741 = vmatprep.subr.bf16.mxu0 0
        %1742 = vmatpush1.bf16.msra.mxu0 0
        %1743 = vmatprep.mubr.bf16.mxu0 0
        %1744 = vmatmul.mubr.bf16.gmra.mrb[0].mxu0 %v1709
        %v1745 = vpop.f32.mrb[0].mxu0
        %v1746 = vadd.f32 0.0, %v1745
        %v1747 = vpop.f32.mrb[0].mxu0
        %v1748 = vpop.f32.mrb[0].mxu0
        %v1749 = vpop.f32.mrb[0].mxu0
        %1750 = vdwg.mxu0
        %v1751 = vadd.f32 %v1550, %v1746
        %v1752 = vmul.f32 %v1662, %v1680
        %v1753 = vmul.f32 %v1669, %v1697
        %v1754 = vadd.f32 %v1752, %v1753
        %v1755 = vmul.f32 %v1677, %v1700
        %v1756 = vadd.f32 %v1754, %v1755
        %v1757 = vsub.f32 %v1697, %v1700
        %v1758 = vmul.f32 %v1685, %v1757
        %v1759 = vsub.f32 %v1751, %v1756
        %v1760 = vmul.f32 %v1694, %v1759
        %v1761 = vadd.f32 %v1758, %v1760
        %vm1762 = vcmp.gt.f32.partialorder %v1761, 1.0
        %v1763 = vsel %vm1762, 1, 0
        %v1764 = vcvt.s32.f32 %v1763
        %1766 = vrot.lane.b32.xlu0 %v1764, 56
        %v1767 = vpop.permute.xlu0 %1766
        %1769 = vst.msk [vmem:[%s829 + $0x8] sm:$0xff] %vm1705, %v1767
        %v1770 = vpack.c.bf16 %v1764, %v1764
        %v1772 = vsel %vm1613, %v1770, 0
        %1774 = vmatprep.subr.bf16.mxu0 0
        %1775 = vmatpush1.bf16.msra.mxu0 %v1609
        %1776 = vmatprep.subr.bf16.mxu0 0
        %1777 = vmatpush1.bf16.msra.mxu0 %v1610
        %1778 = vmatprep.subr.bf16.mxu0 0
        %1779 = vmatpush1.bf16.msra.mxu0 0
        %1780 = vmatprep.subr.bf16.mxu0 0
        %1781 = vmatpush1.bf16.msra.mxu0 0
        %1782 = vmatprep.subr.bf16.mxu0 0
        %1783 = vmatpush1.bf16.msra.mxu0 0
        %1784 = vmatprep.subr.bf16.mxu0 0
        %1785 = vmatpush1.bf16.msra.mxu0 0
        %1786 = vmatprep.subr.bf16.mxu0 0
        %1787 = vmatpush1.bf16.msra.mxu0 0
        %1788 = vmatprep.subr.bf16.mxu0 0
        %1789 = vmatpush1.bf16.msra.mxu0 0
        %1790 = vmatprep.subr.bf16.mxu0 0
        %1791 = vmatpush1.bf16.msra.mxu0 0
        %1792 = vmatprep.subr.bf16.mxu0 0
        %1793 = vmatpush1.bf16.msra.mxu0 0
        %1794 = vmatprep.subr.bf16.mxu0 0
        %1795 = vmatpush1.bf16.msra.mxu0 0
        %1796 = vmatprep.subr.bf16.mxu0 0
        %1797 = vmatpush1.bf16.msra.mxu0 0
        %1798 = vmatprep.subr.bf16.mxu0 0
        %1799 = vmatpush1.bf16.msra.mxu0 0
        %1800 = vmatprep.subr.bf16.mxu0 0
        %1801 = vmatpush1.bf16.msra.mxu0 0
        %1802 = vmatprep.subr.bf16.mxu0 0
        %1803 = vmatpush1.bf16.msra.mxu0 0
        %1804 = vmatprep.subr.bf16.mxu0 0
        %1805 = vmatpush1.bf16.msra.mxu0 0
        %1806 = vmatprep.mubr.bf16.mxu0 0
        %1807 = vmatmul.mubr.bf16.gmra.mrb[0].mxu0 %v1772
        %v1808 = vpop.f32.mrb[0].mxu0
        %v1809 = vadd.f32 0.0, %v1808
        %v1810 = vpop.f32.mrb[0].mxu0
        %v1811 = vpop.f32.mrb[0].mxu0
        %v1812 = vpop.f32.mrb[0].mxu0
        %1813 = vdwg.mxu0
        %v1814 = vadd.f32 %v1555, %v1809
        %v1815 = vmul.f32 %v1662, %v1756
        %v1816 = vmul.f32 %v1669, %v1761
        %v1817 = vadd.f32 %v1815, %v1816
        %v1818 = vmul.f32 %v1677, %v1764
        %v1819 = vadd.f32 %v1817, %v1818
        %v1820 = vsub.f32 %v1761, %v1764
        %v1821 = vmul.f32 %v1685, %v1820
        %v1822 = vsub.f32 %v1814, %v1819
        %v1823 = vmul.f32 %v1694, %v1822
        %v1824 = vadd.f32 %v1821, %v1823
        %vm1825 = vcmp.gt.f32.partialorder %v1824, 1.0
        %v1826 = vsel %vm1825, 1, 0
        %v1827 = vcvt.s32.f32 %v1826
        %1829 = vrot.lane.b32.xlu0 %v1827, 56
        %v1830 = vpop.permute.xlu0 %1829
        %1832 = vst.msk [vmem:[%s829 + $0x10] sm:$0xff] %vm1705, %v1830
        %v1833 = vpack.c.bf16 %v1827, %v1827
        %v1835 = vsel %vm1613, %v1833, 0
        %1837 = vmatprep.subr.bf16.mxu0 0
        %1838 = vmatpush1.bf16.msra.mxu0 %v1609
        %1839 = vmatprep.subr.bf16.mxu0 0
        %1840 = vmatpush1.bf16.msra.mxu0 %v1610
        %1841 = vmatprep.subr.bf16.mxu0 0
        %1842 = vmatpush1.bf16.msra.mxu0 0
        %1843 = vmatprep.subr.bf16.mxu0 0
        %1844 = vmatpush1.bf16.msra.mxu0 0
        %1845 = vmatprep.subr.bf16.mxu0 0
        %1846 = vmatpush1.bf16.msra.mxu0 0
        %1847 = vmatprep.subr.bf16.mxu0 0
        %1848 = vmatpush1.bf16.msra.mxu0 0
        %1849 = vmatprep.subr.bf16.mxu0 0
        %1850 = vmatpush1.bf16.msra.mxu0 0
        %1851 = vmatprep.subr.bf16.mxu0 0
        %1852 = vmatpush1.bf16.msra.mxu0 0
        %1853 = vmatprep.subr.bf16.mxu0 0
        %1854 = vmatpush1.bf16.msra.mxu0 0
        %1855 = vmatprep.subr.bf16.mxu0 0
        %1856 = vmatpush1.bf16.msra.mxu0 0
        %1857 = vmatprep.subr.bf16.mxu0 0
        %1858 = vmatpush1.bf16.msra.mxu0 0
        %1859 = vmatprep.subr.bf16.mxu0 0
        %1860 = vmatpush1.bf16.msra.mxu0 0
        %1861 = vmatprep.subr.bf16.mxu0 0
        %1862 = vmatpush1.bf16.msra.mxu0 0
        %1863 = vmatprep.subr.bf16.mxu0 0
        %1864 = vmatpush1.bf16.msra.mxu0 0
        %1865 = vmatprep.subr.bf16.mxu0 0
        %1866 = vmatpush1.bf16.msra.mxu0 0
        %1867 = vmatprep.subr.bf16.mxu0 0
        %1868 = vmatpush1.bf16.msra.mxu0 0
        %1869 = vmatprep.mubr.bf16.mxu0 0
        %1870 = vmatmul.mubr.bf16.gmra.mrb[0].mxu0 %v1835
        %v1871 = vpop.f32.mrb[0].mxu0
        %v1872 = vadd.f32 0.0, %v1871
        %v1873 = vpop.f32.mrb[0].mxu0
        %v1874 = vpop.f32.mrb[0].mxu0
        %v1875 = vpop.f32.mrb[0].mxu0
        %1876 = vdwg.mxu0
        %v1877 = vadd.f32 %v1558, %v1872
        %v1878 = vmul.f32 %v1662, %v1819
        %v1879 = vmul.f32 %v1669, %v1824
        %v1880 = vadd.f32 %v1878, %v1879
        %v1881 = vmul.f32 %v1677, %v1827
        %v1882 = vadd.f32 %v1880, %v1881
        %v1883 = vsub.f32 %v1824, %v1827
        %v1884 = vmul.f32 %v1685, %v1883
        %v1885 = vsub.f32 %v1877, %v1882
        %v1886 = vmul.f32 %v1694, %v1885
        %v1887 = vadd.f32 %v1884, %v1886
        %vm1888 = vcmp.gt.f32.partialorder %v1887, 1.0
        %v1889 = vsel %vm1888, 1, 0
        %v1890 = vcvt.s32.f32 %v1889
        %1892 = vrot.lane.b32.xlu0 %v1890, 56
        %v1893 = vpop.permute.xlu0 %1892
        %1895 = vst.msk [vmem:[%s829 + $0x18] sm:$0xff] %vm1705, %v1893
        %v1896 = vpack.c.bf16 %v1890, %v1890
        %v1898 = vsel %vm1613, %v1896, 0
        %1900 = vmatprep.subr.bf16.mxu0 0
        %1901 = vmatpush1.bf16.msra.mxu0 %v1609
        %1902 = vmatprep.subr.bf16.mxu0 0
        %1903 = vmatpush1.bf16.msra.mxu0 %v1610
        %1904 = vmatprep.subr.bf16.mxu0 0
        %1905 = vmatpush1.bf16.msra.mxu0 0
        %1906 = vmatprep.subr.bf16.mxu0 0
        %1907 = vmatpush1.bf16.msra.mxu0 0
        %1908 = vmatprep.subr.bf16.mxu0 0
        %1909 = vmatpush1.bf16.msra.mxu0 0
        %1910 = vmatprep.subr.bf16.mxu0 0
        %1911 = vmatpush1.bf16.msra.mxu0 0
        %1912 = vmatprep.subr.bf16.mxu0 0
        %1913 = vmatpush1.bf16.msra.mxu0 0
        %1914 = vmatprep.subr.bf16.mxu0 0
        %1915 = vmatpush1.bf16.msra.mxu0 0
        %1916 = vmatprep.subr.bf16.mxu0 0
        %1917 = vmatpush1.bf16.msra.mxu0 0
        %1918 = vmatprep.subr.bf16.mxu0 0
        %1919 = vmatpush1.bf16.msra.mxu0 0
        %1920 = vmatprep.subr.bf16.mxu0 0
        %1921 = vmatpush1.bf16.msra.mxu0 0
        %1922 = vmatprep.subr.bf16.mxu0 0
        %1923 = vmatpush1.bf16.msra.mxu0 0
        %1924 = vmatprep.subr.bf16.mxu0 0
        %1925 = vmatpush1.bf16.msra.mxu0 0
        %1926 = vmatprep.subr.bf16.mxu0 0
        %1927 = vmatpush1.bf16.msra.mxu0 0
        %1928 = vmatprep.subr.bf16.mxu0 0
        %1929 = vmatpush1.bf16.msra.mxu0 0
        %1930 = vmatprep.subr.bf16.mxu0 0
        %1931 = vmatpush1.bf16.msra.mxu0 0
        %1932 = vmatprep.mubr.bf16.mxu0 0
        %1933 = vmatmul.mubr.bf16.gmra.mrb[0].mxu0 %v1898
        %v1934 = vpop.f32.mrb[0].mxu0
        %v1935 = vadd.f32 0.0, %v1934
        %v1936 = vpop.f32.mrb[0].mxu0
        %v1937 = vpop.f32.mrb[0].mxu0
        %v1938 = vpop.f32.mrb[0].mxu0
        %1939 = vdwg.mxu0
        %v1940 = vadd.f32 %v1563, %v1935
        %v1941 = vmul.f32 %v1662, %v1882
        %v1942 = vmul.f32 %v1669, %v1887
        %v1943 = vadd.f32 %v1941, %v1942
        %v1944 = vmul.f32 %v1677, %v1890
        %v1945 = vadd.f32 %v1943, %v1944
        %v1946 = vsub.f32 %v1887, %v1890
        %v1947 = vmul.f32 %v1685, %v1946
        %v1948 = vsub.f32 %v1940, %v1945
        %v1949 = vmul.f32 %v1694, %v1948
        %v1950 = vadd.f32 %v1947, %v1949
        %vm1951 = vcmp.gt.f32.partialorder %v1950, 1.0
        %v1952 = vsel %vm1951, 1, 0
        %v1953 = vcvt.s32.f32 %v1952
        %1955 = vrot.lane.b32.xlu0 %v1953, 56
        %v1956 = vpop.permute.xlu0 %1955
        %1958 = vst.msk [vmem:[%s829 + $0x20] sm:$0xff] %vm1705, %v1956
        %v1959 = vpack.c.bf16 %v1953, %v1953
        %v1961 = vsel %vm1613, %v1959, 0
        %1963 = vmatprep.subr.bf16.mxu0 0
        %1964 = vmatpush1.bf16.msra.mxu0 %v1609
        %1965 = vmatprep.subr.bf16.mxu0 0
        %1966 = vmatpush1.bf16.msra.mxu0 %v1610
        %1967 = vmatprep.subr.bf16.mxu0 0
        %1968 = vmatpush1.bf16.msra.mxu0 0
        %1969 = vmatprep.subr.bf16.mxu0 0
        %1970 = vmatpush1.bf16.msra.mxu0 0
        %1971 = vmatprep.subr.bf16.mxu0 0
        %1972 = vmatpush1.bf16.msra.mxu0 0
        %1973 = vmatprep.subr.bf16.mxu0 0
        %1974 = vmatpush1.bf16.msra.mxu0 0
        %1975 = vmatprep.subr.bf16.mxu0 0
        %1976 = vmatpush1.bf16.msra.mxu0 0
        %1977 = vmatprep.subr.bf16.mxu0 0
        %1978 = vmatpush1.bf16.msra.mxu0 0
        %1979 = vmatprep.subr.bf16.mxu0 0
        %1980 = vmatpush1.bf16.msra.mxu0 0
        %1981 = vmatprep.subr.bf16.mxu0 0
        %1982 = vmatpush1.bf16.msra.mxu0 0
        %1983 = vmatprep.subr.bf16.mxu0 0
        %1984 = vmatpush1.bf16.msra.mxu0 0
        %1985 = vmatprep.subr.bf16.mxu0 0
        %1986 = vmatpush1.bf16.msra.mxu0 0
        %1987 = vmatprep.subr.bf16.mxu0 0
        %1988 = vmatpush1.bf16.msra.mxu0 0
        %1989 = vmatprep.subr.bf16.mxu0 0
        %1990 = vmatpush1.bf16.msra.mxu0 0
        %1991 = vmatprep.subr.bf16.mxu0 0
        %1992 = vmatpush1.bf16.msra.mxu0 0
        %1993 = vmatprep.subr.bf16.mxu0 0
        %1994 = vmatpush1.bf16.msra.mxu0 0
        %1995 = vmatprep.mubr.bf16.mxu0 0
        %1996 = vmatmul.mubr.bf16.gmra.mrb[0].mxu0 %v1961
        %v1997 = vpop.f32.mrb[0].mxu0
        %v1998 = vadd.f32 0.0, %v1997
        %v1999 = vpop.f32.mrb[0].mxu0
        %v2000 = vpop.f32.mrb[0].mxu0
        %v2001 = vpop.f32.mrb[0].mxu0
        %2002 = vdwg.mxu0
        %v2003 = vadd.f32 %v1566, %v1998
        %v2004 = vmul.f32 %v1662, %v1945
        %v2005 = vmul.f32 %v1669, %v1950
        %v2006 = vadd.f32 %v2004, %v2005
        %v2007 = vmul.f32 %v1677, %v1953
        %v2008 = vadd.f32 %v2006, %v2007
        %v2009 = vsub.f32 %v1950, %v1953
        %v2010 = vmul.f32 %v1685, %v2009
        %v2011 = vsub.f32 %v2003, %v2008
        %v2012 = vmul.f32 %v1694, %v2011
        %v2013 = vadd.f32 %v2010, %v2012
        %vm2014 = vcmp.gt.f32.partialorder %v2013, 1.0
        %v2015 = vsel %vm2014, 1, 0
        %v2016 = vcvt.s32.f32 %v2015
        %2018 = vrot.lane.b32.xlu0 %v2016, 56
        %v2019 = vpop.permute.xlu0 %2018
        %2021 = vst.msk [vmem:[%s829 + $0x28] sm:$0xff] %vm1705, %v2019
        %v2022 = vpack.c.bf16 %v2016, %v2016
        %v2024 = vsel %vm1613, %v2022, 0
        %2026 = vmatprep.subr.bf16.mxu0 0
        %2027 = vmatpush1.bf16.msra.mxu0 %v1609
        %2028 = vmatprep.subr.bf16.mxu0 0
        %2029 = vmatpush1.bf16.msra.mxu0 %v1610
        %2030 = vmatprep.subr.bf16.mxu0 0
        %2031 = vmatpush1.bf16.msra.mxu0 0
        %2032 = vmatprep.subr.bf16.mxu0 0
        %2033 = vmatpush1.bf16.msra.mxu0 0
        %2034 = vmatprep.subr.bf16.mxu0 0
        %2035 = vmatpush1.bf16.msra.mxu0 0
        %2036 = vmatprep.subr.bf16.mxu0 0
        %2037 = vmatpush1.bf16.msra.mxu0 0
        %2038 = vmatprep.subr.bf16.mxu0 0
        %2039 = vmatpush1.bf16.msra.mxu0 0
        %2040 = vmatprep.subr.bf16.mxu0 0
        %2041 = vmatpush1.bf16.msra.mxu0 0
        %2042 = vmatprep.subr.bf16.mxu0 0
        %2043 = vmatpush1.bf16.msra.mxu0 0
        %2044 = vmatprep.subr.bf16.mxu0 0
        %2045 = vmatpush1.bf16.msra.mxu0 0
        %2046 = vmatprep.subr.bf16.mxu0 0
        %2047 = vmatpush1.bf16.msra.mxu0 0
        %2048 = vmatprep.subr.bf16.mxu0 0
        %2049 = vmatpush1.bf16.msra.mxu0 0
        %2050 = vmatprep.subr.bf16.mxu0 0
        %2051 = vmatpush1.bf16.msra.mxu0 0
        %2052 = vmatprep.subr.bf16.mxu0 0
        %2053 = vmatpush1.bf16.msra.mxu0 0
        %2054 = vmatprep.subr.bf16.mxu0 0
        %2055 = vmatpush1.bf16.msra.mxu0 0
        %2056 = vmatprep.subr.bf16.mxu0 0
        %2057 = vmatpush1.bf16.msra.mxu0 0
        %2058 = vmatprep.mubr.bf16.mxu0 0
        %2059 = vmatmul.mubr.bf16.gmra.mrb[0].mxu0 %v2024
        %v2060 = vpop.f32.mrb[0].mxu0
        %v2061 = vadd.f32 0.0, %v2060
        %v2062 = vpop.f32.mrb[0].mxu0
        %v2063 = vpop.f32.mrb[0].mxu0
        %v2064 = vpop.f32.mrb[0].mxu0
        %2065 = vdwg.mxu0
        %v2066 = vadd.f32 %v1571, %v2061
        %v2067 = vmul.f32 %v1662, %v2008
        %v2068 = vmul.f32 %v1669, %v2013
        %v2069 = vadd.f32 %v2067, %v2068
        %v2070 = vmul.f32 %v1677, %v2016
        %v2071 = vadd.f32 %v2069, %v2070
        %v2072 = vsub.f32 %v2013, %v2016
        %v2073 = vmul.f32 %v1685, %v2072
        %v2074 = vsub.f32 %v2066, %v2071
        %v2075 = vmul.f32 %v1694, %v2074
        %v2076 = vadd.f32 %v2073, %v2075
        %vm2077 = vcmp.gt.f32.partialorder %v2076, 1.0
        %v2078 = vsel %vm2077, 1, 0
        %v2079 = vcvt.s32.f32 %v2078
        %2081 = vrot.lane.b32.xlu0 %v2079, 56
        %v2082 = vpop.permute.xlu0 %2081
        %2084 = vst.msk [vmem:[%s829 + $0x30] sm:$0xff] %vm1705, %v2082
        %v2085 = vpack.c.bf16 %v2079, %v2079
        %v2087 = vsel %vm1613, %v2085, 0
        %2089 = vmatprep.subr.bf16.mxu0 0
        %2090 = vmatpush1.bf16.msra.mxu0 %v1609
        %2091 = vmatprep.subr.bf16.mxu0 0
        %2092 = vmatpush1.bf16.msra.mxu0 %v1610
        %2093 = vmatprep.subr.bf16.mxu0 0
        %2094 = vmatpush1.bf16.msra.mxu0 0
        %2095 = vmatprep.subr.bf16.mxu0 0
        %2096 = vmatpush1.bf16.msra.mxu0 0
        %2097 = vmatprep.subr.bf16.mxu0 0
        %2098 = vmatpush1.bf16.msra.mxu0 0
        %2099 = vmatprep.subr.bf16.mxu0 0
        %2100 = vmatpush1.bf16.msra.mxu0 0
        %2101 = vmatprep.subr.bf16.mxu0 0
        %2102 = vmatpush1.bf16.msra.mxu0 0
        %2103 = vmatprep.subr.bf16.mxu0 0
        %2104 = vmatpush1.bf16.msra.mxu0 0
        %2105 = vmatprep.subr.bf16.mxu0 0
        %2106 = vmatpush1.bf16.msra.mxu0 0
        %2107 = vmatprep.subr.bf16.mxu0 0
        %2108 = vmatpush1.bf16.msra.mxu0 0
        %2109 = vmatprep.subr.bf16.mxu0 0
        %2110 = vmatpush1.bf16.msra.mxu0 0
        %2111 = vmatprep.subr.bf16.mxu0 0
        %2112 = vmatpush1.bf16.msra.mxu0 0
        %2113 = vmatprep.subr.bf16.mxu0 0
        %2114 = vmatpush1.bf16.msra.mxu0 0
        %2115 = vmatprep.subr.bf16.mxu0 0
        %2116 = vmatpush1.bf16.msra.mxu0 0
        %2117 = vmatprep.subr.bf16.mxu0 0
        %2118 = vmatpush1.bf16.msra.mxu0 0
        %2119 = vmatprep.subr.bf16.mxu0 0
        %2120 = vmatpush1.bf16.msra.mxu0 0
        %2121 = vmatprep.mubr.bf16.mxu0 0
        %2122 = vmatmul.mubr.bf16.gmra.mrb[0].mxu0 %v2087
        %v2123 = vpop.f32.mrb[0].mxu0
        %v2124 = vadd.f32 0.0, %v2123
        %v2125 = vpop.f32.mrb[0].mxu0
        %v2126 = vpop.f32.mrb[0].mxu0
        %v2127 = vpop.f32.mrb[0].mxu0
        %2128 = vdwg.mxu0
        %v2129 = vadd.f32 %v1574, %v2124
        %v2130 = vmul.f32 %v1662, %v2071
        %v2131 = vmul.f32 %v1669, %v2076
        %v2132 = vadd.f32 %v2130, %v2131
        %v2133 = vmul.f32 %v1677, %v2079
        %v2134 = vadd.f32 %v2132, %v2133
        %v2135 = vsub.f32 %v2076, %v2079
        %v2136 = vmul.f32 %v1685, %v2135
        %v2137 = vsub.f32 %v2129, %v2134
        %v2138 = vmul.f32 %v1694, %v2137
        %v2139 = vadd.f32 %v2136, %v2138
        %vm2140 = vcmp.gt.f32.partialorder %v2139, 1.0
        %v2141 = vsel %vm2140, 1, 0
        %v2142 = vcvt.s32.f32 %v2141
        %2144 = vrot.lane.b32.xlu0 %v2142, 56
        %v2145 = vpop.permute.xlu0 %2144
        %2147 = vst.msk [vmem:[%s829 + $0x38] sm:$0xff] %vm1705, %v2145
        %v2148 = vpack.c.bf16 %v2142, %v2142
        %v2150 = vsel %vm1613, %v2148, 0
        %2152 = vmatprep.subr.bf16.mxu0 0
        %2153 = vmatpush1.bf16.msra.mxu0 %v1609
        %2154 = vmatprep.subr.bf16.mxu0 0
        %2155 = vmatpush1.bf16.msra.mxu0 %v1610
        %2156 = vmatprep.subr.bf16.mxu0 0
        %2157 = vmatpush1.bf16.msra.mxu0 0
        %2158 = vmatprep.subr.bf16.mxu0 0
        %2159 = vmatpush1.bf16.msra.mxu0 0
        %2160 = vmatprep.subr.bf16.mxu0 0
        %2161 = vmatpush1.bf16.msra.mxu0 0
        %2162 = vmatprep.subr.bf16.mxu0 0
        %2163 = vmatpush1.bf16.msra.mxu0 0
        %2164 = vmatprep.subr.bf16.mxu0 0
        %2165 = vmatpush1.bf16.msra.mxu0 0
        %2166 = vmatprep.subr.bf16.mxu0 0
        %2167 = vmatpush1.bf16.msra.mxu0 0
        %2168 = vmatprep.subr.bf16.mxu0 0
        %2169 = vmatpush1.bf16.msra.mxu0 0
        %2170 = vmatprep.subr.bf16.mxu0 0
        %2171 = vmatpush1.bf16.msra.mxu0 0
        %2172 = vmatprep.subr.bf16.mxu0 0
        %2173 = vmatpush1.bf16.msra.mxu0 0
        %2174 = vmatprep.subr.bf16.mxu0 0
        %2175 = vmatpush1.bf16.msra.mxu0 0
        %2176 = vmatprep.subr.bf16.mxu0 0
        %2177 = vmatpush1.bf16.msra.mxu0 0
        %2178 = vmatprep.subr.bf16.mxu0 0
        %2179 = vmatpush1.bf16.msra.mxu0 0
        %2180 = vmatprep.subr.bf16.mxu0 0
        %2181 = vmatpush1.bf16.msra.mxu0 0
        %2182 = vmatprep.subr.bf16.mxu0 0
        %2183 = vmatpush1.bf16.msra.mxu0 0
        %2184 = vmatprep.mubr.bf16.mxu0 0
        %2185 = vmatmul.mubr.bf16.gmra.mrb[0].mxu0 %v2150
        %v2186 = vpop.f32.mrb[0].mxu0
        %v2187 = vadd.f32 0.0, %v2186
        %v2188 = vpop.f32.mrb[0].mxu0
        %v2189 = vpop.f32.mrb[0].mxu0
        %v2190 = vpop.f32.mrb[0].mxu0
        %2191 = vdwg.mxu0
        %v2192 = vadd.f32 %v1579, %v2187
        %v2193 = vmul.f32 %v1662, %v2134
        %v2194 = vmul.f32 %v1669, %v2139
        %v2195 = vadd.f32 %v2193, %v2194
        %v2196 = vmul.f32 %v1677, %v2142
        %v2197 = vadd.f32 %v2195, %v2196
        %v2198 = vsub.f32 %v2139, %v2142
        %v2199 = vmul.f32 %v1685, %v2198
        %v2200 = vsub.f32 %v2192, %v2197
        %v2201 = vmul.f32 %v1694, %v2200
        %v2202 = vadd.f32 %v2199, %v2201
        %vm2203 = vcmp.gt.f32.partialorder %v2202, 1.0
        %v2204 = vsel %vm2203, 1, 0
        %v2205 = vcvt.s32.f32 %v2204
        %2207 = vrot.lane.b32.xlu0 %v2205, 56
        %v2208 = vpop.permute.xlu0 %2207
        %2210 = vst.msk [vmem:[%s829 + $0x40] sm:$0xff] %vm1705, %v2208
        %v2211 = vpack.c.bf16 %v2205, %v2205
        %v2213 = vsel %vm1613, %v2211, 0
        %2215 = vmatprep.subr.bf16.mxu0 0
        %2216 = vmatpush1.bf16.msra.mxu0 %v1609
        %2217 = vmatprep.subr.bf16.mxu0 0
        %2218 = vmatpush1.bf16.msra.mxu0 %v1610
        %2219 = vmatprep.subr.bf16.mxu0 0
        %2220 = vmatpush1.bf16.msra.mxu0 0
        %2221 = vmatprep.subr.bf16.mxu0 0
        %2222 = vmatpush1.bf16.msra.mxu0 0
        %2223 = vmatprep.subr.bf16.mxu0 0
        %2224 = vmatpush1.bf16.msra.mxu0 0
        %2225 = vmatprep.subr.bf16.mxu0 0
        %2226 = vmatpush1.bf16.msra.mxu0 0
        %2227 = vmatprep.subr.bf16.mxu0 0
        %2228 = vmatpush1.bf16.msra.mxu0 0
        %2229 = vmatprep.subr.bf16.mxu0 0
        %2230 = vmatpush1.bf16.msra.mxu0 0
        %2231 = vmatprep.subr.bf16.mxu0 0
        %2232 = vmatpush1.bf16.msra.mxu0 0
        %2233 = vmatprep.subr.bf16.mxu0 0
        %2234 = vmatpush1.bf16.msra.mxu0 0
        %2235 = vmatprep.subr.bf16.mxu0 0
        %2236 = vmatpush1.bf16.msra.mxu0 0
        %2237 = vmatprep.subr.bf16.mxu0 0
        %2238 = vmatpush1.bf16.msra.mxu0 0
        %2239 = vmatprep.subr.bf16.mxu0 0
        %2240 = vmatpush1.bf16.msra.mxu0 0
        %2241 = vmatprep.subr.bf16.mxu0 0
        %2242 = vmatpush1.bf16.msra.mxu0 0
        %2243 = vmatprep.subr.bf16.mxu0 0
        %2244 = vmatpush1.bf16.msra.mxu0 0
        %2245 = vmatprep.subr.bf16.mxu0 0
        %2246 = vmatpush1.bf16.msra.mxu0 0
        %2247 = vmatprep.mubr.bf16.mxu0 0
        %2248 = vmatmul.mubr.bf16.gmra.mrb[0].mxu0 %v2213
        %v2249 = vpop.f32.mrb[0].mxu0
        %v2250 = vadd.f32 0.0, %v2249
        %v2251 = vpop.f32.mrb[0].mxu0
        %v2252 = vpop.f32.mrb[0].mxu0
        %v2253 = vpop.f32.mrb[0].mxu0
        %2254 = vdwg.mxu0
        %v2255 = vadd.f32 %v1582, %v2250
        %v2256 = vmul.f32 %v1662, %v2197
        %v2257 = vmul.f32 %v1669, %v2202
        %v2258 = vadd.f32 %v2256, %v2257
        %v2259 = vmul.f32 %v1677, %v2205
        %v2260 = vadd.f32 %v2258, %v2259
        %v2261 = vsub.f32 %v2202, %v2205
        %v2262 = vmul.f32 %v1685, %v2261
        %v2263 = vsub.f32 %v2255, %v2260
        %v2264 = vmul.f32 %v1694, %v2263
        %v2265 = vadd.f32 %v2262, %v2264
        %vm2266 = vcmp.gt.f32.partialorder %v2265, 1.0
        %v2267 = vsel %vm2266, 1, 0
        %v2268 = vcvt.s32.f32 %v2267
        %2270 = vrot.lane.b32.xlu0 %v2268, 56
        %v2271 = vpop.permute.xlu0 %2270
        %2273 = vst.msk [vmem:[%s829 + $0x48] sm:$0xff] %vm1705, %v2271
        %v2274 = vpack.c.bf16 %v2268, %v2268
        %v2276 = vsel %vm1613, %v2274, 0
        %2278 = vmatprep.subr.bf16.mxu0 0
        %2279 = vmatpush1.bf16.msra.mxu0 %v1609
        %2280 = vmatprep.subr.bf16.mxu0 0
        %2281 = vmatpush1.bf16.msra.mxu0 %v1610
        %2282 = vmatprep.subr.bf16.mxu0 0
        %2283 = vmatpush1.bf16.msra.mxu0 0
        %2284 = vmatprep.subr.bf16.mxu0 0
        %2285 = vmatpush1.bf16.msra.mxu0 0
        %2286 = vmatprep.subr.bf16.mxu0 0
        %2287 = vmatpush1.bf16.msra.mxu0 0
        %2288 = vmatprep.subr.bf16.mxu0 0
        %2289 = vmatpush1.bf16.msra.mxu0 0
        %2290 = vmatprep.subr.bf16.mxu0 0
        %2291 = vmatpush1.bf16.msra.mxu0 0
        %2292 = vmatprep.subr.bf16.mxu0 0
        %2293 = vmatpush1.bf16.msra.mxu0 0
        %2294 = vmatprep.subr.bf16.mxu0 0
        %2295 = vmatpush1.bf16.msra.mxu0 0
        %2296 = vmatprep.subr.bf16.mxu0 0
        %2297 = vmatpush1.bf16.msra.mxu0 0
        %2298 = vmatprep.subr.bf16.mxu0 0
        %2299 = vmatpush1.bf16.msra.mxu0 0
        %2300 = vmatprep.subr.bf16.mxu0 0
        %2301 = vmatpush1.bf16.msra.mxu0 0
        %2302 = vmatprep.subr.bf16.mxu0 0
        %2303 = vmatpush1.bf16.msra.mxu0 0
        %2304 = vmatprep.subr.bf16.mxu0 0
        %2305 = vmatpush1.bf16.msra.mxu0 0
        %2306 = vmatprep.subr.bf16.mxu0 0
        %2307 = vmatpush1.bf16.msra.mxu0 0
        %2308 = vmatprep.subr.bf16.mxu0 0
        %2309 = vmatpush1.bf16.msra.mxu0 0
        %2310 = vmatprep.mubr.bf16.mxu0 0
        %2311 = vmatmul.mubr.bf16.gmra.mrb[0].mxu0 %v2276
        %v2312 = vpop.f32.mrb[0].mxu0
        %v2313 = vadd.f32 0.0, %v2312
        %v2314 = vpop.f32.mrb[0].mxu0
        %v2315 = vpop.f32.mrb[0].mxu0
        %v2316 = vpop.f32.mrb[0].mxu0
        %2317 = vdwg.mxu0
        %v2318 = vadd.f32 %v1587, %v2313
        %v2319 = vmul.f32 %v1662, %v2260
        %v2320 = vmul.f32 %v1669, %v2265
        %v2321 = vadd.f32 %v2319, %v2320
        %v2322 = vmul.f32 %v1677, %v2268
        %v2323 = vadd.f32 %v2321, %v2322
        %v2324 = vsub.f32 %v2265, %v2268
        %v2325 = vmul.f32 %v1685, %v2324
        %v2326 = vsub.f32 %v2318, %v2323
        %v2327 = vmul.f32 %v1694, %v2326
        %v2328 = vadd.f32 %v2325, %v2327
        %vm2329 = vcmp.gt.f32.partialorder %v2328, 1.0
        %v2330 = vsel %vm2329, 1, 0
        %v2331 = vcvt.s32.f32 %v2330
        %2333 = vrot.lane.b32.xlu0 %v2331, 56
        %v2334 = vpop.permute.xlu0 %2333
        %2336 = vst.msk [vmem:[%s829 + $0x50] sm:$0xff] %vm1705, %v2334
        %v2337 = vpack.c.bf16 %v2331, %v2331
        %v2339 = vsel %vm1613, %v2337, 0
        %2341 = vmatprep.subr.bf16.mxu0 0
        %2342 = vmatpush1.bf16.msra.mxu0 %v1609
        %2343 = vmatprep.subr.bf16.mxu0 0
        %2344 = vmatpush1.bf16.msra.mxu0 %v1610
        %2345 = vmatprep.subr.bf16.mxu0 0
        %2346 = vmatpush1.bf16.msra.mxu0 0
        %2347 = vmatprep.subr.bf16.mxu0 0
        %2348 = vmatpush1.bf16.msra.mxu0 0
        %2349 = vmatprep.subr.bf16.mxu0 0
        %2350 = vmatpush1.bf16.msra.mxu0 0
        %2351 = vmatprep.subr.bf16.mxu0 0
        %2352 = vmatpush1.bf16.msra.mxu0 0
        %2353 = vmatprep.subr.bf16.mxu0 0
        %2354 = vmatpush1.bf16.msra.mxu0 0
        %2355 = vmatprep.subr.bf16.mxu0 0
        %2356 = vmatpush1.bf16.msra.mxu0 0
        %2357 = vmatprep.subr.bf16.mxu0 0
        %2358 = vmatpush1.bf16.msra.mxu0 0
        %2359 = vmatprep.subr.bf16.mxu0 0
        %2360 = vmatpush1.bf16.msra.mxu0 0
        %2361 = vmatprep.subr.bf16.mxu0 0
        %2362 = vmatpush1.bf16.msra.mxu0 0
        %2363 = vmatprep.subr.bf16.mxu0 0
        %2364 = vmatpush1.bf16.msra.mxu0 0
        %2365 = vmatprep.subr.bf16.mxu0 0
        %2366 = vmatpush1.bf16.msra.mxu0 0
        %2367 = vmatprep.subr.bf16.mxu0 0
        %2368 = vmatpush1.bf16.msra.mxu0 0
        %2369 = vmatprep.subr.bf16.mxu0 0
        %2370 = vmatpush1.bf16.msra.mxu0 0
        %2371 = vmatprep.subr.bf16.mxu0 0
        %2372 = vmatpush1.bf16.msra.mxu0 0
        %2373 = vmatprep.mubr.bf16.mxu0 0
        %2374 = vmatmul.mubr.bf16.gmra.mrb[0].mxu0 %v2339
        %v2375 = vpop.f32.mrb[0].mxu0
        %v2376 = vadd.f32 0.0, %v2375
        %v2377 = vpop.f32.mrb[0].mxu0
        %v2378 = vpop.f32.mrb[0].mxu0
        %v2379 = vpop.f32.mrb[0].mxu0
        %2380 = vdwg.mxu0
        %v2381 = vadd.f32 %v1590, %v2376
        %v2382 = vmul.f32 %v1662, %v2323
        %v2383 = vmul.f32 %v1669, %v2328
        %v2384 = vadd.f32 %v2382, %v2383
        %v2385 = vmul.f32 %v1677, %v2331
        %v2386 = vadd.f32 %v2384, %v2385
        %v2387 = vsub.f32 %v2328, %v2331
        %v2388 = vmul.f32 %v1685, %v2387
        %v2389 = vsub.f32 %v2381, %v2386
        %v2390 = vmul.f32 %v1694, %v2389
        %v2391 = vadd.f32 %v2388, %v2390
        %vm2392 = vcmp.gt.f32.partialorder %v2391, 1.0
        %v2393 = vsel %vm2392, 1, 0
        %v2394 = vcvt.s32.f32 %v2393
        %2396 = vrot.lane.b32.xlu0 %v2394, 56
        %v2397 = vpop.permute.xlu0 %2396
        %2399 = vst.msk [vmem:[%s829 + $0x58] sm:$0xff] %vm1705, %v2397
        %v2400 = vld [vmem:[%s829] sm:$0xff]
        %v2401 = vld [vmem:[%s829 + $0x8] sm:$0xff]
        %v2402 = vld [vmem:[%s829 + $0x10] sm:$0xff]
        %v2403 = vld [vmem:[%s829 + $0x18] sm:$0xff]
        %v2404 = vld [vmem:[%s829 + $0x20] sm:$0xff]
        %v2405 = vld [vmem:[%s829 + $0x28] sm:$0xff]
        %v2406 = vld [vmem:[%s829 + $0x30] sm:$0xff]
        %v2407 = vld [vmem:[%s829 + $0x38] sm:$0xff]
        %v2408 = vld [vmem:[%s829 + $0x40] sm:$0xff]
        %v2409 = vld [vmem:[%s829 + $0x48] sm:$0xff]
        %v2410 = vld [vmem:[%s829 + $0x50] sm:$0xff]
        %v2411 = vld [vmem:[%s829 + $0x58] sm:$0xff]
        %v2412 = vpack.c.bf16 %v2401, %v2400
        %v2413 = vpack.c.bf16 %v2403, %v2402
        %v2414 = vpack.c.bf16 %v2405, %v2404
        %v2415 = vpack.c.bf16 %v2407, %v2406
        %v2416 = vpack.c.bf16 %v2409, %v2408
        %v2417 = vpack.c.bf16 %v2411, %v2410
        %v2418 = vld [vmem:[%s16] sm:$0xf]
        %v2419 = vld [vmem:[%s16 + $0x4] sm:$0xf]
        %v2420 = vld [vmem:[%s16 + $0x8] sm:$0xf]
        %v2421 = vld [vmem:[%s16 + $0xc] sm:$0xf]
        %v2422 = vld [vmem:[%s17] sm:$0x1]
        %v2424 = vlaneseq
        %v2425 = vshrl.u32 %v2424, 7
        %v2426 = vsub.s32 0, %v2425
        %v2427 = vrot.slane %v2422, %v2426
        %2435 = vrot.lane.b32.xlu0 %v2412, 72
        %v2436 = vpop.permute.xlu0 %2435
        %2437 = vrot.lane.b32.xlu0 %v2413, 72
        %v2438 = vpop.permute.xlu0 %2437
        %2439 = vrot.lane.b32.xlu0 %v2414, 72
        %v2440 = vpop.permute.xlu0 %2439
        %2441 = vrot.lane.b32.xlu0 %v2415, 72
        %v2442 = vpop.permute.xlu0 %2441
        %2443 = vrot.lane.b32.xlu0 %v2416, 72
        %v2444 = vpop.permute.xlu0 %2443
        %2445 = vrot.lane.b32.xlu0 %v2417, 72
        %v2446 = vpop.permute.xlu0 %2445
        %v2451 = vunpack.c.l.b16 %v2418
        %v2452 = vunpack.c.l.b16 %v2419
        %v2453 = vunpack.c.l.b16 %v2420
        %v2454 = vunpack.c.l.b16 %v2421
        %v2455 = vpack.c.b16 %v2452, %v2451
        %v2456 = vpack.c.b16 %v2454, %v2453
        %v2460 = vsel %vm1613, %v2436, 0
        %v2463 = vsel %vm1613, %v2438, 0
        %v2466 = vsel %vm1613, %v2440, 0
        %v2469 = vsel %vm1613, %v2442, 0
        %v2472 = vsel %vm1613, %v2444, 0
        %v2475 = vsel %vm1613, %v2446, 0
        %2477 = vmatprep.subr.bf16.mxu0 0
        %2478 = vmatpush1.bf16.msra.mxu0 %v2455
        %2479 = vmatprep.subr.bf16.mxu0 0
        %2480 = vmatpush1.bf16.msra.mxu0 %v2456
        %2481 = vmatprep.subr.bf16.mxu0 0
        %2482 = vmatpush1.bf16.msra.mxu0 0
        %2483 = vmatprep.subr.bf16.mxu0 0
        %2484 = vmatpush1.bf16.msra.mxu0 0
        %2485 = vmatprep.subr.bf16.mxu0 0
        %2486 = vmatpush1.bf16.msra.mxu0 0
        %2487 = vmatprep.subr.bf16.mxu0 0
        %2488 = vmatpush1.bf16.msra.mxu0 0
        %2489 = vmatprep.subr.bf16.mxu0 0
        %2490 = vmatpush1.bf16.msra.mxu0 0
        %2491 = vmatprep.subr.bf16.mxu0 0
        %2492 = vmatpush1.bf16.msra.mxu0 0
        %2493 = vmatprep.subr.bf16.mxu0 0
        %2494 = vmatpush1.bf16.msra.mxu0 0
        %2495 = vmatprep.subr.bf16.mxu0 0
        %2496 = vmatpush1.bf16.msra.mxu0 0
        %2497 = vmatprep.subr.bf16.mxu0 0
        %2498 = vmatpush1.bf16.msra.mxu0 0
        %2499 = vmatprep.subr.bf16.mxu0 0
        %2500 = vmatpush1.bf16.msra.mxu0 0
        %2501 = vmatprep.subr.bf16.mxu0 0
        %2502 = vmatpush1.bf16.msra.mxu0 0
        %2503 = vmatprep.subr.bf16.mxu0 0
        %2504 = vmatpush1.bf16.msra.mxu0 0
        %2505 = vmatprep.subr.bf16.mxu0 0
        %2506 = vmatpush1.bf16.msra.mxu0 0
        %2507 = vmatprep.subr.bf16.mxu0 0
        %2508 = vmatpush1.bf16.msra.mxu0 0
        %2509 = vmatprep.mubr.bf16.mxu0 0
        %2510 = vmatmul.mubr.bf16.gmra.mrb[0].mxu0 %v2460
        %v2511 = vpop.f32.mrb[0].mxu0
        %v2512 = vadd.f32 %v2427, %v2511
        %v2513 = vpop.f32.mrb[0].mxu0
        %v2514 = vpop.f32.mrb[0].mxu0
        %v2515 = vadd.f32 %v2427, %v2514
        %v2516 = vpop.f32.mrb[0].mxu0
        %2517 = vmatprep.mubr.bf16.mxu0 0
        %2518 = vmatmul.mubr.bf16.gmra.mrb[0].mxu0 %v2463
        %v2519 = vpop.f32.mrb[0].mxu0
        %v2520 = vadd.f32 %v2427, %v2519
        %v2521 = vpop.f32.mrb[0].mxu0
        %v2522 = vpop.f32.mrb[0].mxu0
        %v2523 = vadd.f32 %v2427, %v2522
        %v2524 = vpop.f32.mrb[0].mxu0
        %2525 = vmatprep.mubr.bf16.mxu0 0
        %2526 = vmatmul.mubr.bf16.gmra.mrb[0].mxu0 %v2466
        %v2527 = vpop.f32.mrb[0].mxu0
        %v2528 = vadd.f32 %v2427, %v2527
        %v2529 = vpop.f32.mrb[0].mxu0
        %v2530 = vpop.f32.mrb[0].mxu0
        %v2531 = vadd.f32 %v2427, %v2530
        %v2532 = vpop.f32.mrb[0].mxu0
        %2533 = vmatprep.mubr.bf16.mxu0 0
        %2534 = vmatmul.mubr.bf16.gmra.mrb[0].mxu0 %v2469
        %v2535 = vpop.f32.mrb[0].mxu0
        %v2536 = vadd.f32 %v2427, %v2535
        %v2537 = vpop.f32.mrb[0].mxu0
        %v2538 = vpop.f32.mrb[0].mxu0
        %v2539 = vadd.f32 %v2427, %v2538
        %v2540 = vpop.f32.mrb[0].mxu0
        %2541 = vmatprep.mubr.bf16.mxu0 0
        %2542 = vmatmul.mubr.bf16.gmra.mrb[0].mxu0 %v2472
        %v2543 = vpop.f32.mrb[0].mxu0
        %v2544 = vadd.f32 %v2427, %v2543
        %v2545 = vpop.f32.mrb[0].mxu0
        %v2546 = vpop.f32.mrb[0].mxu0
        %v2547 = vadd.f32 %v2427, %v2546
        %v2548 = vpop.f32.mrb[0].mxu0
        %2549 = vmatprep.mubr.bf16.mxu0 0
        %2550 = vmatmul.mubr.bf16.gmra.mrb[0].mxu0 %v2475
        %v2551 = vpop.f32.mrb[0].mxu0
        %v2552 = vadd.f32 %v2427, %v2551
        %v2553 = vpop.f32.mrb[0].mxu0
        %v2554 = vpop.f32.mrb[0].mxu0
        %v2555 = vadd.f32 %v2427, %v2554
        %v2556 = vpop.f32.mrb[0].mxu0
        %2557 = vdwg.mxu0
        %v2558 = vld [vmem:[%s19] sm:$0x1]
        %v2559 = vld [vmem:[%s20] sm:$0x1]
        %v2560 = vld [vmem:[%s21] sm:$0x1]
        %v2561 = vld [vmem:[%s22] sm:$0x1]
        %v2562 = vld [vmem:[%s18] sm:$0xf]
        %v2563 = vld [vmem:[%s18 + $0x4] sm:$0xf]
        %v2564 = vld [vmem:[%s18 + $0x8] sm:$0xf]
        %v2565 = vld [vmem:[%s18 + $0xc] sm:$0xf]
        %v2570 = vunpack.c.l.b16 %v2562
        %v2571 = vunpack.c.l.b16 %v2563
        %v2572 = vunpack.c.l.b16 %v2564
        %v2573 = vunpack.c.l.b16 %v2565
        %v2574 = vpack.c.b16 %v2571, %v2570
        %v2575 = vpack.c.b16 %v2573, %v2572
        %2578 = vmatprep.subr.bf16.mxu0 0
        %2579 = vmatpush1.bf16.msra.mxu0 %v2574
        %2580 = vmatprep.subr.bf16.mxu0 0
        %2581 = vmatpush1.bf16.msra.mxu0 %v2575
        %2582 = vmatprep.subr.bf16.mxu0 0
        %2583 = vmatpush1.bf16.msra.mxu0 0
        %2584 = vmatprep.subr.bf16.mxu0 0
        %2585 = vmatpush1.bf16.msra.mxu0 0
        %2586 = vmatprep.subr.bf16.mxu0 0
        %2587 = vmatpush1.bf16.msra.mxu0 0
        %2588 = vmatprep.subr.bf16.mxu0 0
        %2589 = vmatpush1.bf16.msra.mxu0 0
        %2590 = vmatprep.subr.bf16.mxu0 0
        %2591 = vmatpush1.bf16.msra.mxu0 0
        %2592 = vmatprep.subr.bf16.mxu0 0
        %2593 = vmatpush1.bf16.msra.mxu0 0
        %2594 = vmatprep.subr.bf16.mxu0 0
        %2595 = vmatpush1.bf16.msra.mxu0 0
        %2596 = vmatprep.subr.bf16.mxu0 0
        %2597 = vmatpush1.bf16.msra.mxu0 0
        %2598 = vmatprep.subr.bf16.mxu0 0
        %2599 = vmatpush1.bf16.msra.mxu0 0
        %2600 = vmatprep.subr.bf16.mxu0 0
        %2601 = vmatpush1.bf16.msra.mxu0 0
        %2602 = vmatprep.subr.bf16.mxu0 0
        %2603 = vmatpush1.bf16.msra.mxu0 0
        %2604 = vmatprep.subr.bf16.mxu0 0
        %2605 = vmatpush1.bf16.msra.mxu0 0
        %2606 = vmatprep.subr.bf16.mxu0 0
        %2607 = vmatpush1.bf16.msra.mxu0 0
        %2608 = vmatprep.subr.bf16.mxu0 0
        %2609 = vmatpush1.bf16.msra.mxu0 0
        %2610 = vmatprep.mubr.bf16.mxu0 0
        %2611 = vmatmul.mubr.bf16.gmra.mrb[0].mxu0 %v1615
        %v2612 = vpop.f32.mrb[0].mxu0
        %v2613 = vadd.f32 0.0, %v2612
        %v2614 = vpop.f32.mrb[0].mxu0
        %v2615 = vpop.f32.mrb[0].mxu0
        %v2616 = vpop.f32.mrb[0].mxu0
        %2617 = vdwg.mxu0
        %v2618 = vadd.f32 %v2512, %v2613
        %v2620 = vlaneseq
        %v2621 = vshrl.u32 %v2620, 7
        %v2622 = vsub.s32 0, %v2621
        %v2623 = vrot.slane %v2559, %v2622
        %v2625 = vmul.f32 %v2623, 0.0
        %v2627 = vlaneseq
        %v2628 = vshrl.u32 %v2627, 7
        %v2629 = vsub.s32 0, %v2628
        %v2630 = vrot.slane %v2560, %v2629
        %v2632 = vmul.f32 %v2630, 0.0
        %v2633 = vadd.f32 %v2625, %v2632
        %v2635 = vlaneseq
        %v2636 = vshrl.u32 %v2635, 7
        %v2637 = vsub.s32 0, %v2636
        %v2638 = vrot.slane %v2561, %v2637
        %v2640 = vmul.f32 %v2638, 0.0
        %v2641 = vadd.f32 %v2633, %v2640
        %v2643 = vlaneseq
        %v2644 = vshrl.u32 %v2643, 7
        %v2645 = vsub.s32 0, %v2644
        %v2646 = vrot.slane %v2558, %v2645
        %v2648 = vmul.f32 %v2646, 0.0
        %v2649 = vsub.f32 1.0, %v2558
        %v2650 = vsub.f32 %v2618, %v2641
        %v2652 = vlaneseq
        %v2653 = vshrl.u32 %v2652, 7
        %v2654 = vsub.s32 0, %v2653
        %v2655 = vrot.slane %v2649, %v2654
        %v2657 = vmul.f32 %v2655, %v2650
        %v2658 = vadd.f32 %v2648, %v2657
        %vm2659 = vcmp.gt.f32.partialorder %v2658, 1.0
        %v2660 = vsel %vm2659, 1, 0
        %v2661 = vcvt.s32.f32 %v2660
        %2663 = vrot.lane.b32.xlu0 %v2661, 88
        %v2664 = vpop.permute.xlu0 %2663
        %vm2666 = vcmask 982720
        %2667 = vst.msk [vmem:[%s829] sm:$0xff] %vm2666, %v2664
        %v2668 = vpack.c.bf16 %v2661, %v2661
        %v2670 = vsel %vm1613, %v2668, 0
        %2672 = vmatprep.subr.bf16.mxu0 0
        %2673 = vmatpush1.bf16.msra.mxu0 %v2574
        %2674 = vmatprep.subr.bf16.mxu0 0
        %2675 = vmatpush1.bf16.msra.mxu0 %v2575
        %2676 = vmatprep.subr.bf16.mxu0 0
        %2677 = vmatpush1.bf16.msra.mxu0 0
        %2678 = vmatprep.subr.bf16.mxu0 0
        %2679 = vmatpush1.bf16.msra.mxu0 0
        %2680 = vmatprep.subr.bf16.mxu0 0
        %2681 = vmatpush1.bf16.msra.mxu0 0
        %2682 = vmatprep.subr.bf16.mxu0 0
        %2683 = vmatpush1.bf16.msra.mxu0 0
        %2684 = vmatprep.subr.bf16.mxu0 0
        %2685 = vmatpush1.bf16.msra.mxu0 0
        %2686 = vmatprep.subr.bf16.mxu0 0
        %2687 = vmatpush1.bf16.msra.mxu0 0
        %2688 = vmatprep.subr.bf16.mxu0 0
        %2689 = vmatpush1.bf16.msra.mxu0 0
        %2690 = vmatprep.subr.bf16.mxu0 0
        %2691 = vmatpush1.bf16.msra.mxu0 0
        %2692 = vmatprep.subr.bf16.mxu0 0
        %2693 = vmatpush1.bf16.msra.mxu0 0
        %2694 = vmatprep.subr.bf16.mxu0 0
        %2695 = vmatpush1.bf16.msra.mxu0 0
        %2696 = vmatprep.subr.bf16.mxu0 0
        %2697 = vmatpush1.bf16.msra.mxu0 0
        %2698 = vmatprep.subr.bf16.mxu0 0
        %2699 = vmatpush1.bf16.msra.mxu0 0
        %2700 = vmatprep.subr.bf16.mxu0 0
        %2701 = vmatpush1.bf16.msra.mxu0 0
        %2702 = vmatprep.subr.bf16.mxu0 0
        %2703 = vmatpush1.bf16.msra.mxu0 0
        %2704 = vmatprep.mubr.bf16.mxu0 0
        %2705 = vmatmul.mubr.bf16.gmra.mrb[0].mxu0 %v2670
        %v2706 = vpop.f32.mrb[0].mxu0
        %v2707 = vadd.f32 0.0, %v2706
        %v2708 = vpop.f32.mrb[0].mxu0
        %v2709 = vpop.f32.mrb[0].mxu0
        %v2710 = vpop.f32.mrb[0].mxu0
        %2711 = vdwg.mxu0
        %v2712 = vadd.f32 %v2515, %v2707
        %v2713 = vmul.f32 %v2623, %v2641
        %v2714 = vmul.f32 %v2630, %v2658
        %v2715 = vadd.f32 %v2713, %v2714
        %v2716 = vmul.f32 %v2638, %v2661
        %v2717 = vadd.f32 %v2715, %v2716
        %v2718 = vsub.f32 %v2658, %v2661
        %v2719 = vmul.f32 %v2646, %v2718
        %v2720 = vsub.f32 %v2712, %v2717
        %v2721 = vmul.f32 %v2655, %v2720
        %v2722 = vadd.f32 %v2719, %v2721
        %vm2723 = vcmp.gt.f32.partialorder %v2722, 1.0
        %v2724 = vsel %vm2723, 1, 0
        %v2725 = vcvt.s32.f32 %v2724
        %2727 = vrot.lane.b32.xlu0 %v2725, 88
        %v2728 = vpop.permute.xlu0 %2727
        %2730 = vst.msk [vmem:[%s829 + $0x8] sm:$0xff] %vm2666, %v2728
        %v2731 = vpack.c.bf16 %v2725, %v2725
        %v2733 = vsel %vm1613, %v2731, 0
        %2735 = vmatprep.subr.bf16.mxu0 0
        %2736 = vmatpush1.bf16.msra.mxu0 %v2574
        %2737 = vmatprep.subr.bf16.mxu0 0
        %2738 = vmatpush1.bf16.msra.mxu0 %v2575
        %2739 = vmatprep.subr.bf16.mxu0 0
        %2740 = vmatpush1.bf16.msra.mxu0 0
        %2741 = vmatprep.subr.bf16.mxu0 0
        %2742 = vmatpush1.bf16.msra.mxu0 0
        %2743 = vmatprep.subr.bf16.mxu0 0
        %2744 = vmatpush1.bf16.msra.mxu0 0
        %2745 = vmatprep.subr.bf16.mxu0 0
        %2746 = vmatpush1.bf16.msra.mxu0 0
        %2747 = vmatprep.subr.bf16.mxu0 0
        %2748 = vmatpush1.bf16.msra.mxu0 0
        %2749 = vmatprep.subr.bf16.mxu0 0
        %2750 = vmatpush1.bf16.msra.mxu0 0
        %2751 = vmatprep.subr.bf16.mxu0 0
        %2752 = vmatpush1.bf16.msra.mxu0 0
        %2753 = vmatprep.subr.bf16.mxu0 0
        %2754 = vmatpush1.bf16.msra.mxu0 0
        %2755 = vmatprep.subr.bf16.mxu0 0
        %2756 = vmatpush1.bf16.msra.mxu0 0
        %2757 = vmatprep.subr.bf16.mxu0 0
        %2758 = vmatpush1.bf16.msra.mxu0 0
        %2759 = vmatprep.subr.bf16.mxu0 0
        %2760 = vmatpush1.bf16.msra.mxu0 0
        %2761 = vmatprep.subr.bf16.mxu0 0
        %2762 = vmatpush1.bf16.msra.mxu0 0
        %2763 = vmatprep.subr.bf16.mxu0 0
        %2764 = vmatpush1.bf16.msra.mxu0 0
        %2765 = vmatprep.subr.bf16.mxu0 0
        %2766 = vmatpush1.bf16.msra.mxu0 0
        %2767 = vmatprep.mubr.bf16.mxu0 0
        %2768 = vmatmul.mubr.bf16.gmra.mrb[0].mxu0 %v2733
        %v2769 = vpop.f32.mrb[0].mxu0
        %v2770 = vadd.f32 0.0, %v2769
        %v2771 = vpop.f32.mrb[0].mxu0
        %v2772 = vpop.f32.mrb[0].mxu0
        %v2773 = vpop.f32.mrb[0].mxu0
        %2774 = vdwg.mxu0
        %v2775 = vadd.f32 %v2520, %v2770
        %v2776 = vmul.f32 %v2623, %v2717
        %v2777 = vmul.f32 %v2630, %v2722
        %v2778 = vadd.f32 %v2776, %v2777
        %v2779 = vmul.f32 %v2638, %v2725
        %v2780 = vadd.f32 %v2778, %v2779
        %v2781 = vsub.f32 %v2722, %v2725
        %v2782 = vmul.f32 %v2646, %v2781
        %v2783 = vsub.f32 %v2775, %v2780
        %v2784 = vmul.f32 %v2655, %v2783
        %v2785 = vadd.f32 %v2782, %v2784
        %vm2786 = vcmp.gt.f32.partialorder %v2785, 1.0
        %v2787 = vsel %vm2786, 1, 0
        %v2788 = vcvt.s32.f32 %v2787
        %2790 = vrot.lane.b32.xlu0 %v2788, 88
        %v2791 = vpop.permute.xlu0 %2790
        %2793 = vst.msk [vmem:[%s829 + $0x10] sm:$0xff] %vm2666, %v2791
        %v2794 = vpack.c.bf16 %v2788, %v2788
        %v2796 = vsel %vm1613, %v2794, 0
        %2798 = vmatprep.subr.bf16.mxu0 0
        %2799 = vmatpush1.bf16.msra.mxu0 %v2574
        %2800 = vmatprep.subr.bf16.mxu0 0
        %2801 = vmatpush1.bf16.msra.mxu0 %v2575
        %2802 = vmatprep.subr.bf16.mxu0 0
        %2803 = vmatpush1.bf16.msra.mxu0 0
        %2804 = vmatprep.subr.bf16.mxu0 0
        %2805 = vmatpush1.bf16.msra.mxu0 0
        %2806 = vmatprep.subr.bf16.mxu0 0
        %2807 = vmatpush1.bf16.msra.mxu0 0
        %2808 = vmatprep.subr.bf16.mxu0 0
        %2809 = vmatpush1.bf16.msra.mxu0 0
        %2810 = vmatprep.subr.bf16.mxu0 0
        %2811 = vmatpush1.bf16.msra.mxu0 0
        %2812 = vmatprep.subr.bf16.mxu0 0
        %2813 = vmatpush1.bf16.msra.mxu0 0
        %2814 = vmatprep.subr.bf16.mxu0 0
        %2815 = vmatpush1.bf16.msra.mxu0 0
        %2816 = vmatprep.subr.bf16.mxu0 0
        %2817 = vmatpush1.bf16.msra.mxu0 0
        %2818 = vmatprep.subr.bf16.mxu0 0
        %2819 = vmatpush1.bf16.msra.mxu0 0
        %2820 = vmatprep.subr.bf16.mxu0 0
        %2821 = vmatpush1.bf16.msra.mxu0 0
        %2822 = vmatprep.subr.bf16.mxu0 0
        %2823 = vmatpush1.bf16.msra.mxu0 0
        %2824 = vmatprep.subr.bf16.mxu0 0
        %2825 = vmatpush1.bf16.msra.mxu0 0
        %2826 = vmatprep.subr.bf16.mxu0 0
        %2827 = vmatpush1.bf16.msra.mxu0 0
        %2828 = vmatprep.subr.bf16.mxu0 0
        %2829 = vmatpush1.bf16.msra.mxu0 0
        %2830 = vmatprep.mubr.bf16.mxu0 0
        %2831 = vmatmul.mubr.bf16.gmra.mrb[0].mxu0 %v2796
        %v2832 = vpop.f32.mrb[0].mxu0
        %v2833 = vadd.f32 0.0, %v2832
        %v2834 = vpop.f32.mrb[0].mxu0
        %v2835 = vpop.f32.mrb[0].mxu0
        %v2836 = vpop.f32.mrb[0].mxu0
        %2837 = vdwg.mxu0
        %v2838 = vadd.f32 %v2523, %v2833
        %v2839 = vmul.f32 %v2623, %v2780
        %v2840 = vmul.f32 %v2630, %v2785
        %v2841 = vadd.f32 %v2839, %v2840
        %v2842 = vmul.f32 %v2638, %v2788
        %v2843 = vadd.f32 %v2841, %v2842
        %v2844 = vsub.f32 %v2785, %v2788
        %v2845 = vmul.f32 %v2646, %v2844
        %v2846 = vsub.f32 %v2838, %v2843
        %v2847 = vmul.f32 %v2655, %v2846
        %v2848 = vadd.f32 %v2845, %v2847
        %vm2849 = vcmp.gt.f32.partialorder %v2848, 1.0
        %v2850 = vsel %vm2849, 1, 0
        %v2851 = vcvt.s32.f32 %v2850
        %2853 = vrot.lane.b32.xlu0 %v2851, 88
        %v2854 = vpop.permute.xlu0 %2853
        %2856 = vst.msk [vmem:[%s829 + $0x18] sm:$0xff] %vm2666, %v2854
        %v2857 = vpack.c.bf16 %v2851, %v2851
        %v2859 = vsel %vm1613, %v2857, 0
        %2861 = vmatprep.subr.bf16.mxu0 0
        %2862 = vmatpush1.bf16.msra.mxu0 %v2574
        %2863 = vmatprep.subr.bf16.mxu0 0
        %2864 = vmatpush1.bf16.msra.mxu0 %v2575
        %2865 = vmatprep.subr.bf16.mxu0 0
        %2866 = vmatpush1.bf16.msra.mxu0 0
        %2867 = vmatprep.subr.bf16.mxu0 0
        %2868 = vmatpush1.bf16.msra.mxu0 0
        %2869 = vmatprep.subr.bf16.mxu0 0
        %2870 = vmatpush1.bf16.msra.mxu0 0
        %2871 = vmatprep.subr.bf16.mxu0 0
        %2872 = vmatpush1.bf16.msra.mxu0 0
        %2873 = vmatprep.subr.bf16.mxu0 0
        %2874 = vmatpush1.bf16.msra.mxu0 0
        %2875 = vmatprep.subr.bf16.mxu0 0
        %2876 = vmatpush1.bf16.msra.mxu0 0
        %2877 = vmatprep.subr.bf16.mxu0 0
        %2878 = vmatpush1.bf16.msra.mxu0 0
        %2879 = vmatprep.subr.bf16.mxu0 0
        %2880 = vmatpush1.bf16.msra.mxu0 0
        %2881 = vmatprep.subr.bf16.mxu0 0
        %2882 = vmatpush1.bf16.msra.mxu0 0
        %2883 = vmatprep.subr.bf16.mxu0 0
        %2884 = vmatpush1.bf16.msra.mxu0 0
        %2885 = vmatprep.subr.bf16.mxu0 0
        %2886 = vmatpush1.bf16.msra.mxu0 0
        %2887 = vmatprep.subr.bf16.mxu0 0
        %2888 = vmatpush1.bf16.msra.mxu0 0
        %2889 = vmatprep.subr.bf16.mxu0 0
        %2890 = vmatpush1.bf16.msra.mxu0 0
        %2891 = vmatprep.subr.bf16.mxu0 0
        %2892 = vmatpush1.bf16.msra.mxu0 0
        %2893 = vmatprep.mubr.bf16.mxu0 0
        %2894 = vmatmul.mubr.bf16.gmra.mrb[0].mxu0 %v2859
        %v2895 = vpop.f32.mrb[0].mxu0
        %v2896 = vadd.f32 0.0, %v2895
        %v2897 = vpop.f32.mrb[0].mxu0
        %v2898 = vpop.f32.mrb[0].mxu0
        %v2899 = vpop.f32.mrb[0].mxu0
        %2900 = vdwg.mxu0
        %v2901 = vadd.f32 %v2528, %v2896
        %v2902 = vmul.f32 %v2623, %v2843
        %v2903 = vmul.f32 %v2630, %v2848
        %v2904 = vadd.f32 %v2902, %v2903
        %v2905 = vmul.f32 %v2638, %v2851
        %v2906 = vadd.f32 %v2904, %v2905
        %v2907 = vsub.f32 %v2848, %v2851
        %v2908 = vmul.f32 %v2646, %v2907
        %v2909 = vsub.f32 %v2901, %v2906
        %v2910 = vmul.f32 %v2655, %v2909
        %v2911 = vadd.f32 %v2908, %v2910
        %vm2912 = vcmp.gt.f32.partialorder %v2911, 1.0
        %v2913 = vsel %vm2912, 1, 0
        %v2914 = vcvt.s32.f32 %v2913
        %2916 = vrot.lane.b32.xlu0 %v2914, 88
        %v2917 = vpop.permute.xlu0 %2916
        %2919 = vst.msk [vmem:[%s829 + $0x20] sm:$0xff] %vm2666, %v2917
        %v2920 = vpack.c.bf16 %v2914, %v2914
        %v2922 = vsel %vm1613, %v2920, 0
        %2924 = vmatprep.subr.bf16.mxu0 0
        %2925 = vmatpush1.bf16.msra.mxu0 %v2574
        %2926 = vmatprep.subr.bf16.mxu0 0
        %2927 = vmatpush1.bf16.msra.mxu0 %v2575
        %2928 = vmatprep.subr.bf16.mxu0 0
        %2929 = vmatpush1.bf16.msra.mxu0 0
        %2930 = vmatprep.subr.bf16.mxu0 0
        %2931 = vmatpush1.bf16.msra.mxu0 0
        %2932 = vmatprep.subr.bf16.mxu0 0
        %2933 = vmatpush1.bf16.msra.mxu0 0
        %2934 = vmatprep.subr.bf16.mxu0 0
        %2935 = vmatpush1.bf16.msra.mxu0 0
        %2936 = vmatprep.subr.bf16.mxu0 0
        %2937 = vmatpush1.bf16.msra.mxu0 0
        %2938 = vmatprep.subr.bf16.mxu0 0
        %2939 = vmatpush1.bf16.msra.mxu0 0
        %2940 = vmatprep.subr.bf16.mxu0 0
        %2941 = vmatpush1.bf16.msra.mxu0 0
        %2942 = vmatprep.subr.bf16.mxu0 0
        %2943 = vmatpush1.bf16.msra.mxu0 0
        %2944 = vmatprep.subr.bf16.mxu0 0
        %2945 = vmatpush1.bf16.msra.mxu0 0
        %2946 = vmatprep.subr.bf16.mxu0 0
        %2947 = vmatpush1.bf16.msra.mxu0 0
        %2948 = vmatprep.subr.bf16.mxu0 0
        %2949 = vmatpush1.bf16.msra.mxu0 0
        %2950 = vmatprep.subr.bf16.mxu0 0
        %2951 = vmatpush1.bf16.msra.mxu0 0
        %2952 = vmatprep.subr.bf16.mxu0 0
        %2953 = vmatpush1.bf16.msra.mxu0 0
        %2954 = vmatprep.subr.bf16.mxu0 0
        %2955 = vmatpush1.bf16.msra.mxu0 0
        %2956 = vmatprep.mubr.bf16.mxu0 0
        %2957 = vmatmul.mubr.bf16.gmra.mrb[0].mxu0 %v2922
        %v2958 = vpop.f32.mrb[0].mxu0
        %v2959 = vadd.f32 0.0, %v2958
        %v2960 = vpop.f32.mrb[0].mxu0
        %v2961 = vpop.f32.mrb[0].mxu0
        %v2962 = vpop.f32.mrb[0].mxu0
        %2963 = vdwg.mxu0
        %v2964 = vadd.f32 %v2531, %v2959
        %v2965 = vmul.f32 %v2623, %v2906
        %v2966 = vmul.f32 %v2630, %v2911
        %v2967 = vadd.f32 %v2965, %v2966
        %v2968 = vmul.f32 %v2638, %v2914
        %v2969 = vadd.f32 %v2967, %v2968
        %v2970 = vsub.f32 %v2911, %v2914
        %v2971 = vmul.f32 %v2646, %v2970
        %v2972 = vsub.f32 %v2964, %v2969
        %v2973 = vmul.f32 %v2655, %v2972
        %v2974 = vadd.f32 %v2971, %v2973
        %vm2975 = vcmp.gt.f32.partialorder %v2974, 1.0
        %v2976 = vsel %vm2975, 1, 0
        %v2977 = vcvt.s32.f32 %v2976
        %2979 = vrot.lane.b32.xlu0 %v2977, 88
        %v2980 = vpop.permute.xlu0 %2979
        %2982 = vst.msk [vmem:[%s829 + $0x28] sm:$0xff] %vm2666, %v2980
        %v2983 = vpack.c.bf16 %v2977, %v2977
        %v2985 = vsel %vm1613, %v2983, 0
        %2987 = vmatprep.subr.bf16.mxu0 0
        %2988 = vmatpush1.bf16.msra.mxu0 %v2574
        %2989 = vmatprep.subr.bf16.mxu0 0
        %2990 = vmatpush1.bf16.msra.mxu0 %v2575
        %2991 = vmatprep.subr.bf16.mxu0 0
        %2992 = vmatpush1.bf16.msra.mxu0 0
        %2993 = vmatprep.subr.bf16.mxu0 0
        %2994 = vmatpush1.bf16.msra.mxu0 0
        %2995 = vmatprep.subr.bf16.mxu0 0
        %2996 = vmatpush1.bf16.msra.mxu0 0
        %2997 = vmatprep.subr.bf16.mxu0 0
        %2998 = vmatpush1.bf16.msra.mxu0 0
        %2999 = vmatprep.subr.bf16.mxu0 0
        %3000 = vmatpush1.bf16.msra.mxu0 0
        %3001 = vmatprep.subr.bf16.mxu0 0
        %3002 = vmatpush1.bf16.msra.mxu0 0
        %3003 = vmatprep.subr.bf16.mxu0 0
        %3004 = vmatpush1.bf16.msra.mxu0 0
        %3005 = vmatprep.subr.bf16.mxu0 0
        %3006 = vmatpush1.bf16.msra.mxu0 0
        %3007 = vmatprep.subr.bf16.mxu0 0
        %3008 = vmatpush1.bf16.msra.mxu0 0
        %3009 = vmatprep.subr.bf16.mxu0 0
        %3010 = vmatpush1.bf16.msra.mxu0 0
        %3011 = vmatprep.subr.bf16.mxu0 0
        %3012 = vmatpush1.bf16.msra.mxu0 0
        %3013 = vmatprep.subr.bf16.mxu0 0
        %3014 = vmatpush1.bf16.msra.mxu0 0
        %3015 = vmatprep.subr.bf16.mxu0 0
        %3016 = vmatpush1.bf16.msra.mxu0 0
        %3017 = vmatprep.subr.bf16.mxu0 0
        %3018 = vmatpush1.bf16.msra.mxu0 0
        %3019 = vmatprep.mubr.bf16.mxu0 0
        %3020 = vmatmul.mubr.bf16.gmra.mrb[0].mxu0 %v2985
        %v3021 = vpop.f32.mrb[0].mxu0
        %v3022 = vadd.f32 0.0, %v3021
        %v3023 = vpop.f32.mrb[0].mxu0
        %v3024 = vpop.f32.mrb[0].mxu0
        %v3025 = vpop.f32.mrb[0].mxu0
        %3026 = vdwg.mxu0
        %v3027 = vadd.f32 %v2536, %v3022
        %v3028 = vmul.f32 %v2623, %v2969
        %v3029 = vmul.f32 %v2630, %v2974
        %v3030 = vadd.f32 %v3028, %v3029
        %v3031 = vmul.f32 %v2638, %v2977
        %v3032 = vadd.f32 %v3030, %v3031
        %v3033 = vsub.f32 %v2974, %v2977
        %v3034 = vmul.f32 %v2646, %v3033
        %v3035 = vsub.f32 %v3027, %v3032
        %v3036 = vmul.f32 %v2655, %v3035
        %v3037 = vadd.f32 %v3034, %v3036
        %vm3038 = vcmp.gt.f32.partialorder %v3037, 1.0
        %v3039 = vsel %vm3038, 1, 0
        %v3040 = vcvt.s32.f32 %v3039
        %3042 = vrot.lane.b32.xlu0 %v3040, 88
        %v3043 = vpop.permute.xlu0 %3042
        %3045 = vst.msk [vmem:[%s829 + $0x30] sm:$0xff] %vm2666, %v3043
        %v3046 = vpack.c.bf16 %v3040, %v3040
        %v3048 = vsel %vm1613, %v3046, 0
        %3050 = vmatprep.subr.bf16.mxu0 0
        %3051 = vmatpush1.bf16.msra.mxu0 %v2574
        %3052 = vmatprep.subr.bf16.mxu0 0
        %3053 = vmatpush1.bf16.msra.mxu0 %v2575
        %3054 = vmatprep.subr.bf16.mxu0 0
        %3055 = vmatpush1.bf16.msra.mxu0 0
        %3056 = vmatprep.subr.bf16.mxu0 0
        %3057 = vmatpush1.bf16.msra.mxu0 0
        %3058 = vmatprep.subr.bf16.mxu0 0
        %3059 = vmatpush1.bf16.msra.mxu0 0
        %3060 = vmatprep.subr.bf16.mxu0 0
        %3061 = vmatpush1.bf16.msra.mxu0 0
        %3062 = vmatprep.subr.bf16.mxu0 0
        %3063 = vmatpush1.bf16.msra.mxu0 0
        %3064 = vmatprep.subr.bf16.mxu0 0
        %3065 = vmatpush1.bf16.msra.mxu0 0
        %3066 = vmatprep.subr.bf16.mxu0 0
        %3067 = vmatpush1.bf16.msra.mxu0 0
        %3068 = vmatprep.subr.bf16.mxu0 0
        %3069 = vmatpush1.bf16.msra.mxu0 0
        %3070 = vmatprep.subr.bf16.mxu0 0
        %3071 = vmatpush1.bf16.msra.mxu0 0
        %3072 = vmatprep.subr.bf16.mxu0 0
        %3073 = vmatpush1.bf16.msra.mxu0 0
        %3074 = vmatprep.subr.bf16.mxu0 0
        %3075 = vmatpush1.bf16.msra.mxu0 0
        %3076 = vmatprep.subr.bf16.mxu0 0
        %3077 = vmatpush1.bf16.msra.mxu0 0
        %3078 = vmatprep.subr.bf16.mxu0 0
        %3079 = vmatpush1.bf16.msra.mxu0 0
        %3080 = vmatprep.subr.bf16.mxu0 0
        %3081 = vmatpush1.bf16.msra.mxu0 0
        %3082 = vmatprep.mubr.bf16.mxu0 0
        %3083 = vmatmul.mubr.bf16.gmra.mrb[0].mxu0 %v3048
        %v3084 = vpop.f32.mrb[0].mxu0
        %v3085 = vadd.f32 0.0, %v3084
        %v3086 = vpop.f32.mrb[0].mxu0
        %v3087 = vpop.f32.mrb[0].mxu0
        %v3088 = vpop.f32.mrb[0].mxu0
        %3089 = vdwg.mxu0
        %v3090 = vadd.f32 %v2539, %v3085
        %v3091 = vmul.f32 %v2623, %v3032
        %v3092 = vmul.f32 %v2630, %v3037
        %v3093 = vadd.f32 %v3091, %v3092
        %v3094 = vmul.f32 %v2638, %v3040
        %v3095 = vadd.f32 %v3093, %v3094
        %v3096 = vsub.f32 %v3037, %v3040
        %v3097 = vmul.f32 %v2646, %v3096
        %v3098 = vsub.f32 %v3090, %v3095
        %v3099 = vmul.f32 %v2655, %v3098
        %v3100 = vadd.f32 %v3097, %v3099
        %vm3101 = vcmp.gt.f32.partialorder %v3100, 1.0
        %v3102 = vsel %vm3101, 1, 0
        %v3103 = vcvt.s32.f32 %v3102
        %3105 = vrot.lane.b32.xlu0 %v3103, 88
        %v3106 = vpop.permute.xlu0 %3105
        %3108 = vst.msk [vmem:[%s829 + $0x38] sm:$0xff] %vm2666, %v3106
        %v3109 = vpack.c.bf16 %v3103, %v3103
        %v3111 = vsel %vm1613, %v3109, 0
        %3113 = vmatprep.subr.bf16.mxu0 0
        %3114 = vmatpush1.bf16.msra.mxu0 %v2574
        %3115 = vmatprep.subr.bf16.mxu0 0
        %3116 = vmatpush1.bf16.msra.mxu0 %v2575
        %3117 = vmatprep.subr.bf16.mxu0 0
        %3118 = vmatpush1.bf16.msra.mxu0 0
        %3119 = vmatprep.subr.bf16.mxu0 0
        %3120 = vmatpush1.bf16.msra.mxu0 0
        %3121 = vmatprep.subr.bf16.mxu0 0
        %3122 = vmatpush1.bf16.msra.mxu0 0
        %3123 = vmatprep.subr.bf16.mxu0 0
        %3124 = vmatpush1.bf16.msra.mxu0 0
        %3125 = vmatprep.subr.bf16.mxu0 0
        %3126 = vmatpush1.bf16.msra.mxu0 0
        %3127 = vmatprep.subr.bf16.mxu0 0
        %3128 = vmatpush1.bf16.msra.mxu0 0
        %3129 = vmatprep.subr.bf16.mxu0 0
        %3130 = vmatpush1.bf16.msra.mxu0 0
        %3131 = vmatprep.subr.bf16.mxu0 0
        %3132 = vmatpush1.bf16.msra.mxu0 0
        %3133 = vmatprep.subr.bf16.mxu0 0
        %3134 = vmatpush1.bf16.msra.mxu0 0
        %3135 = vmatprep.subr.bf16.mxu0 0
        %3136 = vmatpush1.bf16.msra.mxu0 0
        %3137 = vmatprep.subr.bf16.mxu0 0
        %3138 = vmatpush1.bf16.msra.mxu0 0
        %3139 = vmatprep.subr.bf16.mxu0 0
        %3140 = vmatpush1.bf16.msra.mxu0 0
        %3141 = vmatprep.subr.bf16.mxu0 0
        %3142 = vmatpush1.bf16.msra.mxu0 0
        %3143 = vmatprep.subr.bf16.mxu0 0
        %3144 = vmatpush1.bf16.msra.mxu0 0
        %3145 = vmatprep.mubr.bf16.mxu0 0
        %3146 = vmatmul.mubr.bf16.gmra.mrb[0].mxu0 %v3111
        %v3147 = vpop.f32.mrb[0].mxu0
        %v3148 = vadd.f32 0.0, %v3147
        %v3149 = vpop.f32.mrb[0].mxu0
        %v3150 = vpop.f32.mrb[0].mxu0
        %v3151 = vpop.f32.mrb[0].mxu0
        %3152 = vdwg.mxu0
        %v3153 = vadd.f32 %v2544, %v3148
        %v3154 = vmul.f32 %v2623, %v3095
        %v3155 = vmul.f32 %v2630, %v3100
        %v3156 = vadd.f32 %v3154, %v3155
        %v3157 = vmul.f32 %v2638, %v3103
        %v3158 = vadd.f32 %v3156, %v3157
        %v3159 = vsub.f32 %v3100, %v3103
        %v3160 = vmul.f32 %v2646, %v3159
        %v3161 = vsub.f32 %v3153, %v3158
        %v3162 = vmul.f32 %v2655, %v3161
        %v3163 = vadd.f32 %v3160, %v3162
        %vm3164 = vcmp.gt.f32.partialorder %v3163, 1.0
        %v3165 = vsel %vm3164, 1, 0
        %v3166 = vcvt.s32.f32 %v3165
        %3168 = vrot.lane.b32.xlu0 %v3166, 88
        %v3169 = vpop.permute.xlu0 %3168
        %3171 = vst.msk [vmem:[%s829 + $0x40] sm:$0xff] %vm2666, %v3169
        %v3172 = vpack.c.bf16 %v3166, %v3166
        %v3174 = vsel %vm1613, %v3172, 0
        %3176 = vmatprep.subr.bf16.mxu0 0
        %3177 = vmatpush1.bf16.msra.mxu0 %v2574
        %3178 = vmatprep.subr.bf16.mxu0 0
        %3179 = vmatpush1.bf16.msra.mxu0 %v2575
        %3180 = vmatprep.subr.bf16.mxu0 0
        %3181 = vmatpush1.bf16.msra.mxu0 0
        %3182 = vmatprep.subr.bf16.mxu0 0
        %3183 = vmatpush1.bf16.msra.mxu0 0
        %3184 = vmatprep.subr.bf16.mxu0 0
        %3185 = vmatpush1.bf16.msra.mxu0 0
        %3186 = vmatprep.subr.bf16.mxu0 0
        %3187 = vmatpush1.bf16.msra.mxu0 0
        %3188 = vmatprep.subr.bf16.mxu0 0
        %3189 = vmatpush1.bf16.msra.mxu0 0
        %3190 = vmatprep.subr.bf16.mxu0 0
        %3191 = vmatpush1.bf16.msra.mxu0 0
        %3192 = vmatprep.subr.bf16.mxu0 0
        %3193 = vmatpush1.bf16.msra.mxu0 0
        %3194 = vmatprep.subr.bf16.mxu0 0
        %3195 = vmatpush1.bf16.msra.mxu0 0
        %3196 = vmatprep.subr.bf16.mxu0 0
        %3197 = vmatpush1.bf16.msra.mxu0 0
        %3198 = vmatprep.subr.bf16.mxu0 0
        %3199 = vmatpush1.bf16.msra.mxu0 0
        %3200 = vmatprep.subr.bf16.mxu0 0
        %3201 = vmatpush1.bf16.msra.mxu0 0
        %3202 = vmatprep.subr.bf16.mxu0 0
        %3203 = vmatpush1.bf16.msra.mxu0 0
        %3204 = vmatprep.subr.bf16.mxu0 0
        %3205 = vmatpush1.bf16.msra.mxu0 0
        %3206 = vmatprep.subr.bf16.mxu0 0
        %3207 = vmatpush1.bf16.msra.mxu0 0
        %3208 = vmatprep.mubr.bf16.mxu0 0
        %3209 = vmatmul.mubr.bf16.gmra.mrb[0].mxu0 %v3174
        %v3210 = vpop.f32.mrb[0].mxu0
        %v3211 = vadd.f32 0.0, %v3210
        %v3212 = vpop.f32.mrb[0].mxu0
        %v3213 = vpop.f32.mrb[0].mxu0
        %v3214 = vpop.f32.mrb[0].mxu0
        %3215 = vdwg.mxu0
        %v3216 = vadd.f32 %v2547, %v3211
        %v3217 = vmul.f32 %v2623, %v3158
        %v3218 = vmul.f32 %v2630, %v3163
        %v3219 = vadd.f32 %v3217, %v3218
        %v3220 = vmul.f32 %v2638, %v3166
        %v3221 = vadd.f32 %v3219, %v3220
        %v3222 = vsub.f32 %v3163, %v3166
        %v3223 = vmul.f32 %v2646, %v3222
        %v3224 = vsub.f32 %v3216, %v3221
        %v3225 = vmul.f32 %v2655, %v3224
        %v3226 = vadd.f32 %v3223, %v3225
        %vm3227 = vcmp.gt.f32.partialorder %v3226, 1.0
        %v3228 = vsel %vm3227, 1, 0
        %v3229 = vcvt.s32.f32 %v3228
        %3231 = vrot.lane.b32.xlu0 %v3229, 88
        %v3232 = vpop.permute.xlu0 %3231
        %3234 = vst.msk [vmem:[%s829 + $0x48] sm:$0xff] %vm2666, %v3232
        %v3235 = vpack.c.bf16 %v3229, %v3229
        %v3237 = vsel %vm1613, %v3235, 0
        %3239 = vmatprep.subr.bf16.mxu0 0
        %3240 = vmatpush1.bf16.msra.mxu0 %v2574
        %3241 = vmatprep.subr.bf16.mxu0 0
        %3242 = vmatpush1.bf16.msra.mxu0 %v2575
        %3243 = vmatprep.subr.bf16.mxu0 0
        %3244 = vmatpush1.bf16.msra.mxu0 0
        %3245 = vmatprep.subr.bf16.mxu0 0
        %3246 = vmatpush1.bf16.msra.mxu0 0
        %3247 = vmatprep.subr.bf16.mxu0 0
        %3248 = vmatpush1.bf16.msra.mxu0 0
        %3249 = vmatprep.subr.bf16.mxu0 0
        %3250 = vmatpush1.bf16.msra.mxu0 0
        %3251 = vmatprep.subr.bf16.mxu0 0
        %3252 = vmatpush1.bf16.msra.mxu0 0
        %3253 = vmatprep.subr.bf16.mxu0 0
        %3254 = vmatpush1.bf16.msra.mxu0 0
        %3255 = vmatprep.subr.bf16.mxu0 0
        %3256 = vmatpush1.bf16.msra.mxu0 0
        %3257 = vmatprep.subr.bf16.mxu0 0
        %3258 = vmatpush1.bf16.msra.mxu0 0
        %3259 = vmatprep.subr.bf16.mxu0 0
        %3260 = vmatpush1.bf16.msra.mxu0 0
        %3261 = vmatprep.subr.bf16.mxu0 0
        %3262 = vmatpush1.bf16.msra.mxu0 0
        %3263 = vmatprep.subr.bf16.mxu0 0
        %3264 = vmatpush1.bf16.msra.mxu0 0
        %3265 = vmatprep.subr.bf16.mxu0 0
        %3266 = vmatpush1.bf16.msra.mxu0 0
        %3267 = vmatprep.subr.bf16.mxu0 0
        %3268 = vmatpush1.bf16.msra.mxu0 0
        %3269 = vmatprep.subr.bf16.mxu0 0
        %3270 = vmatpush1.bf16.msra.mxu0 0
        %3271 = vmatprep.mubr.bf16.mxu0 0
        %3272 = vmatmul.mubr.bf16.gmra.mrb[0].mxu0 %v3237
        %v3273 = vpop.f32.mrb[0].mxu0
        %v3274 = vadd.f32 0.0, %v3273
        %v3275 = vpop.f32.mrb[0].mxu0
        %v3276 = vpop.f32.mrb[0].mxu0
        %v3277 = vpop.f32.mrb[0].mxu0
        %3278 = vdwg.mxu0
        %v3279 = vadd.f32 %v2552, %v3274
        %v3280 = vmul.f32 %v2623, %v3221
        %v3281 = vmul.f32 %v2630, %v3226
        %v3282 = vadd.f32 %v3280, %v3281
        %v3283 = vmul.f32 %v2638, %v3229
        %v3284 = vadd.f32 %v3282, %v3283
        %v3285 = vsub.f32 %v3226, %v3229
        %v3286 = vmul.f32 %v2646, %v3285
        %v3287 = vsub.f32 %v3279, %v3284
        %v3288 = vmul.f32 %v2655, %v3287
        %v3289 = vadd.f32 %v3286, %v3288
        %vm3290 = vcmp.gt.f32.partialorder %v3289, 1.0
        %v3291 = vsel %vm3290, 1, 0
        %v3292 = vcvt.s32.f32 %v3291
        %3294 = vrot.lane.b32.xlu0 %v3292, 88
        %v3295 = vpop.permute.xlu0 %3294
        %3297 = vst.msk [vmem:[%s829 + $0x50] sm:$0xff] %vm2666, %v3295
        %v3298 = vpack.c.bf16 %v3292, %v3292
        %v3300 = vsel %vm1613, %v3298, 0
        %3302 = vmatprep.subr.bf16.mxu0 0
        %3303 = vmatpush1.bf16.msra.mxu0 %v2574
        %3304 = vmatprep.subr.bf16.mxu0 0
        %3305 = vmatpush1.bf16.msra.mxu0 %v2575
        %3306 = vmatprep.subr.bf16.mxu0 0
        %3307 = vmatpush1.bf16.msra.mxu0 0
        %3308 = vmatprep.subr.bf16.mxu0 0
        %3309 = vmatpush1.bf16.msra.mxu0 0
        %3310 = vmatprep.subr.bf16.mxu0 0
        %3311 = vmatpush1.bf16.msra.mxu0 0
        %3312 = vmatprep.subr.bf16.mxu0 0
        %3313 = vmatpush1.bf16.msra.mxu0 0
        %3314 = vmatprep.subr.bf16.mxu0 0
        %3315 = vmatpush1.bf16.msra.mxu0 0
        %3316 = vmatprep.subr.bf16.mxu0 0
        %3317 = vmatpush1.bf16.msra.mxu0 0
        %3318 = vmatprep.subr.bf16.mxu0 0
        %3319 = vmatpush1.bf16.msra.mxu0 0
        %3320 = vmatprep.subr.bf16.mxu0 0
        %3321 = vmatpush1.bf16.msra.mxu0 0
        %3322 = vmatprep.subr.bf16.mxu0 0
        %3323 = vmatpush1.bf16.msra.mxu0 0
        %3324 = vmatprep.subr.bf16.mxu0 0
        %3325 = vmatpush1.bf16.msra.mxu0 0
        %3326 = vmatprep.subr.bf16.mxu0 0
        %3327 = vmatpush1.bf16.msra.mxu0 0
        %3328 = vmatprep.subr.bf16.mxu0 0
        %3329 = vmatpush1.bf16.msra.mxu0 0
        %3330 = vmatprep.subr.bf16.mxu0 0
        %3331 = vmatpush1.bf16.msra.mxu0 0
        %3332 = vmatprep.subr.bf16.mxu0 0
        %3333 = vmatpush1.bf16.msra.mxu0 0
        %3334 = vmatprep.mubr.bf16.mxu0 0
        %3335 = vmatmul.mubr.bf16.gmra.mrb[0].mxu0 %v3300
        %v3336 = vpop.f32.mrb[0].mxu0
        %v3337 = vadd.f32 0.0, %v3336
        %v3338 = vpop.f32.mrb[0].mxu0
        %v3339 = vpop.f32.mrb[0].mxu0
        %v3340 = vpop.f32.mrb[0].mxu0
        %3341 = vdwg.mxu0
        %v3342 = vadd.f32 %v2555, %v3337
        %v3343 = vmul.f32 %v2623, %v3284
        %v3344 = vmul.f32 %v2630, %v3289
        %v3345 = vadd.f32 %v3343, %v3344
        %v3346 = vmul.f32 %v2638, %v3292
        %v3347 = vadd.f32 %v3345, %v3346
        %v3348 = vsub.f32 %v3289, %v3292
        %v3349 = vmul.f32 %v2646, %v3348
        %v3350 = vsub.f32 %v3342, %v3347
        %v3351 = vmul.f32 %v2655, %v3350
        %v3352 = vadd.f32 %v3349, %v3351
        %vm3353 = vcmp.gt.f32.partialorder %v3352, 1.0
        %v3354 = vsel %vm3353, 1, 0
        %v3355 = vcvt.s32.f32 %v3354
        %3357 = vrot.lane.b32.xlu0 %v3355, 88
        %v3358 = vpop.permute.xlu0 %3357
        %3360 = vst.msk [vmem:[%s829 + $0x58] sm:$0xff] %vm2666, %v3358
        %v3361 = vld [vmem:[%s829] sm:$0xff]
        %v3362 = vld [vmem:[%s829 + $0x8] sm:$0xff]
        %v3363 = vld [vmem:[%s829 + $0x10] sm:$0xff]
        %v3364 = vld [vmem:[%s829 + $0x18] sm:$0xff]
        %v3365 = vld [vmem:[%s829 + $0x20] sm:$0xff]
        %v3366 = vld [vmem:[%s829 + $0x28] sm:$0xff]
        %v3367 = vld [vmem:[%s829 + $0x30] sm:$0xff]
        %v3368 = vld [vmem:[%s829 + $0x38] sm:$0xff]
        %v3369 = vld [vmem:[%s829 + $0x40] sm:$0xff]
        %v3370 = vld [vmem:[%s829 + $0x48] sm:$0xff]
        %v3371 = vld [vmem:[%s829 + $0x50] sm:$0xff]
        %v3372 = vld [vmem:[%s829 + $0x58] sm:$0xff]
        %v3373 = vpack.c.bf16 %v3362, %v3361
        %v3374 = vpack.c.bf16 %v3364, %v3363
        %v3375 = vpack.c.bf16 %v3366, %v3365
        %v3376 = vpack.c.bf16 %v3368, %v3367
        %v3377 = vpack.c.bf16 %v3370, %v3369
        %v3378 = vpack.c.bf16 %v3372, %v3371
        %v3379 = vld [vmem:[%s23] sm:$0xf]
        %v3380 = vld [vmem:[%s23 + $0x4] sm:$0xf]
        %v3381 = vld [vmem:[%s23 + $0x8] sm:$0xf]
        %v3382 = vld [vmem:[%s23 + $0xc] sm:$0xf]
        %v3383 = vld [vmem:[%s24] sm:$0x1]
        %v3385 = vlaneseq
        %v3386 = vshrl.u32 %v3385, 7
        %v3387 = vsub.s32 0, %v3386
        %v3388 = vrot.slane %v3383, %v3387
        %3396 = vrot.lane.b32.xlu0 %v3373, 40
        %v3397 = vpop.permute.xlu0 %3396
        %3398 = vrot.lane.b32.xlu0 %v3374, 40
        %v3399 = vpop.permute.xlu0 %3398
        %3400 = vrot.lane.b32.xlu0 %v3375, 40
        %v3401 = vpop.permute.xlu0 %3400
        %3402 = vrot.lane.b32.xlu0 %v3376, 40
        %v3403 = vpop.permute.xlu0 %3402
        %3404 = vrot.lane.b32.xlu0 %v3377, 40
        %v3405 = vpop.permute.xlu0 %3404
        %3406 = vrot.lane.b32.xlu0 %v3378, 40
        %v3407 = vpop.permute.xlu0 %3406
        %v3412 = vunpack.c.l.b16 %v3379
        %v3413 = vunpack.c.l.b16 %v3380
        %v3414 = vunpack.c.l.b16 %v3381
        %v3415 = vunpack.c.l.b16 %v3382
        %v3416 = vpack.c.b16 %v3413, %v3412
        %v3417 = vpack.c.b16 %v3415, %v3414
        %v3421 = vsel %vm1613, %v3397, 0
        %v3424 = vsel %vm1613, %v3399, 0
        %v3427 = vsel %vm1613, %v3401, 0
        %v3430 = vsel %vm1613, %v3403, 0
        %v3433 = vsel %vm1613, %v3405, 0
        %v3436 = vsel %vm1613, %v3407, 0
        %3438 = vmatprep.subr.bf16.mxu0 0
        %3439 = vmatpush1.bf16.msra.mxu0 %v3416
        %3440 = vmatprep.subr.bf16.mxu0 0
        %3441 = vmatpush1.bf16.msra.mxu0 %v3417
        %3442 = vmatprep.subr.bf16.mxu0 0
        %3443 = vmatpush1.bf16.msra.mxu0 0
        %3444 = vmatprep.subr.bf16.mxu0 0
        %3445 = vmatpush1.bf16.msra.mxu0 0
        %3446 = vmatprep.subr.bf16.mxu0 0
        %3447 = vmatpush1.bf16.msra.mxu0 0
        %3448 = vmatprep.subr.bf16.mxu0 0
        %3449 = vmatpush1.bf16.msra.mxu0 0
        %3450 = vmatprep.subr.bf16.mxu0 0
        %3451 = vmatpush1.bf16.msra.mxu0 0
        %3452 = vmatprep.subr.bf16.mxu0 0
        %3453 = vmatpush1.bf16.msra.mxu0 0
        %3454 = vmatprep.subr.bf16.mxu0 0
        %3455 = vmatpush1.bf16.msra.mxu0 0
        %3456 = vmatprep.subr.bf16.mxu0 0
        %3457 = vmatpush1.bf16.msra.mxu0 0
        %3458 = vmatprep.subr.bf16.mxu0 0
        %3459 = vmatpush1.bf16.msra.mxu0 0
        %3460 = vmatprep.subr.bf16.mxu0 0
        %3461 = vmatpush1.bf16.msra.mxu0 0
        %3462 = vmatprep.subr.bf16.mxu0 0
        %3463 = vmatpush1.bf16.msra.mxu0 0
        %3464 = vmatprep.subr.bf16.mxu0 0
        %3465 = vmatpush1.bf16.msra.mxu0 0
        %3466 = vmatprep.subr.bf16.mxu0 0
        %3467 = vmatpush1.bf16.msra.mxu0 0
        %3468 = vmatprep.subr.bf16.mxu0 0
        %3469 = vmatpush1.bf16.msra.mxu0 0
        %3470 = vmatprep.mubr.bf16.mxu0 0
        %3471 = vmatmul.mubr.bf16.gmra.mrb[0].mxu0 %v3421
        %v3472 = vpop.f32.mrb[0].mxu0
        %v3473 = vadd.f32 %v3388, %v3472
        %v3474 = vpop.f32.mrb[0].mxu0
        %v3475 = vpop.f32.mrb[0].mxu0
        %v3476 = vadd.f32 %v3388, %v3475
        %v3477 = vpop.f32.mrb[0].mxu0
        %3478 = vmatprep.mubr.bf16.mxu0 0
        %3479 = vmatmul.mubr.bf16.gmra.mrb[0].mxu0 %v3424
        %v3480 = vpop.f32.mrb[0].mxu0
        %v3481 = vadd.f32 %v3388, %v3480
        %v3482 = vpop.f32.mrb[0].mxu0
        %v3483 = vpop.f32.mrb[0].mxu0
        %v3484 = vadd.f32 %v3388, %v3483
        %v3485 = vpop.f32.mrb[0].mxu0
        %3486 = vmatprep.mubr.bf16.mxu0 0
        %3487 = vmatmul.mubr.bf16.gmra.mrb[0].mxu0 %v3427
        %v3488 = vpop.f32.mrb[0].mxu0
        %v3489 = vadd.f32 %v3388, %v3488
        %v3490 = vpop.f32.mrb[0].mxu0
        %v3491 = vpop.f32.mrb[0].mxu0
        %v3492 = vadd.f32 %v3388, %v3491
        %v3493 = vpop.f32.mrb[0].mxu0
        %3494 = vmatprep.mubr.bf16.mxu0 0
        %3495 = vmatmul.mubr.bf16.gmra.mrb[0].mxu0 %v3430
        %v3496 = vpop.f32.mrb[0].mxu0
        %v3497 = vadd.f32 %v3388, %v3496
        %v3498 = vpop.f32.mrb[0].mxu0
        %v3499 = vpop.f32.mrb[0].mxu0
        %v3500 = vadd.f32 %v3388, %v3499
        %v3501 = vpop.f32.mrb[0].mxu0
        %3502 = vmatprep.mubr.bf16.mxu0 0
        %3503 = vmatmul.mubr.bf16.gmra.mrb[0].mxu0 %v3433
        %v3504 = vpop.f32.mrb[0].mxu0
        %v3505 = vadd.f32 %v3388, %v3504
        %v3506 = vpop.f32.mrb[0].mxu0
        %v3507 = vpop.f32.mrb[0].mxu0
        %v3508 = vadd.f32 %v3388, %v3507
        %v3509 = vpop.f32.mrb[0].mxu0
        %3510 = vmatprep.mubr.bf16.mxu0 0
        %3511 = vmatmul.mubr.bf16.gmra.mrb[0].mxu0 %v3436
        %v3512 = vpop.f32.mrb[0].mxu0
        %v3513 = vadd.f32 %v3388, %v3512
        %v3514 = vpop.f32.mrb[0].mxu0
        %v3515 = vpop.f32.mrb[0].mxu0
        %v3516 = vadd.f32 %v3388, %v3515
        %v3517 = vpop.f32.mrb[0].mxu0
        %3518 = vdwg.mxu0
        %v3519 = vld [vmem:[%s25] sm:$0xff]
        %v3520 = vld [vmem:[%s25 + $0x8] sm:$0xf]
        %v3521 = vlaneseq
        %v3522 = vshrl.u32 %v3521, 7
        %v3523 = vsub.s32 0, %v3522
        %v3524 = vrot.slane %v3519, %v3523
        %v3525 = vmul.f32 %v3524, %v3473
        %v3526 = vadd.f32 %v3525, 0.0
        %v3527 = vlaneseq
        %v3528 = vshrl.u32 %v3527, 7
        %v3529 = vsub.s32 1, %v3528
        %v3530 = vrot.slane %v3519, %v3529
        %v3531 = vmul.f32 %v3530, %v3476
        %v3532 = vadd.f32 %v3526, %v3531
        %v3533 = vlaneseq
        %v3534 = vshrl.u32 %v3533, 7
        %v3535 = vsub.s32 2, %v3534
        %v3536 = vrot.slane %v3519, %v3535
        %v3537 = vmul.f32 %v3536, %v3481
        %v3538 = vadd.f32 %v3532, %v3537
        %v3539 = vlaneseq
        %v3540 = vshrl.u32 %v3539, 7
        %v3541 = vsub.s32 3, %v3540
        %v3542 = vrot.slane %v3519, %v3541
        %v3543 = vmul.f32 %v3542, %v3484
        %v3544 = vadd.f32 %v3538, %v3543
        %v3545 = vlaneseq
        %v3546 = vshrl.u32 %v3545, 7
        %v3547 = vsub.s32 4, %v3546
        %v3548 = vrot.slane %v3519, %v3547
        %v3549 = vmul.f32 %v3548, %v3489
        %v3550 = vadd.f32 %v3544, %v3549
        %v3551 = vlaneseq
        %v3552 = vshrl.u32 %v3551, 7
        %v3553 = vsub.s32 5, %v3552
        %v3554 = vrot.slane %v3519, %v3553
        %v3555 = vmul.f32 %v3554, %v3492
        %v3556 = vadd.f32 %v3550, %v3555
        %v3557 = vlaneseq
        %v3558 = vshrl.u32 %v3557, 7
        %v3559 = vsub.s32 6, %v3558
        %v3560 = vrot.slane %v3519, %v3559
        %v3561 = vmul.f32 %v3560, %v3497
        %v3562 = vadd.f32 %v3556, %v3561
        %v3563 = vlaneseq
        %v3564 = vshrl.u32 %v3563, 7
        %v3565 = vsub.s32 7, %v3564
        %v3566 = vrot.slane %v3519, %v3565
        %v3567 = vmul.f32 %v3566, %v3500
        %v3568 = vadd.f32 %v3562, %v3567
        %v3569 = vlaneseq
        %v3570 = vshrl.u32 %v3569, 7
        %v3571 = vsub.s32 0, %v3570
        %v3572 = vrot.slane %v3520, %v3571
        %v3573 = vmul.f32 %v3572, %v3505
        %v3574 = vadd.f32 %v3568, %v3573
        %v3575 = vlaneseq
        %v3576 = vshrl.u32 %v3575, 7
        %v3577 = vsub.s32 1, %v3576
        %v3578 = vrot.slane %v3520, %v3577
        %v3579 = vmul.f32 %v3578, %v3508
        %v3580 = vadd.f32 %v3574, %v3579
        %v3581 = vlaneseq
        %v3582 = vshrl.u32 %v3581, 7
        %v3583 = vsub.s32 2, %v3582
        %v3584 = vrot.slane %v3520, %v3583
        %v3585 = vmul.f32 %v3584, %v3513
        %v3586 = vadd.f32 %v3580, %v3585
        %v3587 = vlaneseq
        %v3588 = vshrl.u32 %v3587, 7
        %v3589 = vsub.s32 3, %v3588
        %v3590 = vrot.slane %v3520, %v3589
        %v3591 = vmul.f32 %v3590, %v3516
        %v3592 = vadd.f32 %v3586, %v3591
        %v3593 = vmul.f32 %v3592, 0.083333336
        %3594 = vst [vmem:[%s812] sm:$0xff] %v3593
        %s3595 = sand.u32 %s601, 1
        %s3596 = scalar_lea.sflag [#allocation3], %s3595
        %s3597 = sand.u32 %s601, 1
        %s3598 = smul.addr %s3597, 8
        %s3599 = scalar_lea.vmem [#allocation2], %s3598
        %p3600 = scmp.lt.s32.totalorder %s42, 1
        %s3601 = scalar_select %p3600, %s42, 1
        %s3602 = smul.addr %s3601, 12
        %s3603 = smul.addr %s3602, 8
        %s3604 = scalar_lea.vmem %s27, %s3603
        // Predicated region
        $region125: #{_lambda_.1} parent=123 // pred_check
          %p3605 = pneg %p611
        $region126: #{_lambda_.1} parent=123 // pred_check_branch
          %3607 = sbr.rel (%p3605) target = $region128
        $region127: #{_lambda_.1} parent=123 // pred_region
          %s3609 = ssub.s32 128, 128
          %3610 = vsyncadd %s3596, %s3609
          %s3611 = smul.addr %s42, 128
          %s3612 = scalar_lea.hbm %s26, %s3611
          %s3614 = sshll.u32 %s3599, 4
          %s3615 = int_to_ptr.vmem [resolvable:$true] %s3614
          %3617 = dma.vmem_to_hbm [thread:$0]  %s3615, 128, %s3612, %s3596
        $region128: #{_lambda_.1} parent=123 // pred_fallthru
          _
        // Predicated region
        $region129: #{_lambda_.1} parent=123 // pred_check
          %p3618 = pneg %p637
        $region130: #{_lambda_.1} parent=123 // pred_check_branch
          %3620 = sbr.rel (%p3618) target = $region132
        $region131: #{_lambda_.1} parent=123 // pred_region
          _
        $region132: #{_lambda_.1} parent=123 // pred_fallthru
          _
      $region124: #{_lambda_.1} parent=5 // pred_fallthru
        _
      %p3621 = scmp.le.s32.totalorder 2, %s37
      // Predicated region
      $region133: #{_lambda_.1} parent=5 // pred_check
        %p3622 = pneg %p3621
      $region134: #{_lambda_.1} parent=5 // pred_check_branch
        %3624 = sbr.rel (%p3622) target = $region136
      $region135: #{_lambda_.1} parent=5 // pred_region
        %s3625 = ssub.s32 %s37, 2
        // Predicated region
        $region137: #{_lambda_.1} parent=135 // pred_check
          %p3626 = pneg %p617
        $region138: #{_lambda_.1} parent=135 // pred_check_branch
          %3628 = sbr.rel (%p3626) target = $region140
        $region139: #{_lambda_.1} parent=135 // pred_region
          %s3629 = sand.u32 %s602, 1
          %s3630 = scalar_lea.sflag [#allocation3], %s3629
          %s3631 = sand.u32 %s602, 1
          %s3632 = smul.addr %s3631, 8
          %s3633 = scalar_lea.vmem [#allocation2], %s3632
          %3634 = dma.done %s3630, 128
        $region140: #{_lambda_.1} parent=135 // pred_fallthru
          _
        // Predicated region
        $region141: #{_lambda_.1} parent=135 // pred_check
          %p3635 = pneg %p643
        $region142: #{_lambda_.1} parent=135 // pred_check_branch
          %3637 = sbr.rel (%p3635) target = $region144
        $region143: #{_lambda_.1} parent=135 // pred_region
          %p3638 = scmp.lt.s32.totalorder %s43, 1
          %s3639 = scalar_select %p3638, %s43, 1
          %s3640 = smul.addr %s3639, 12
          %s3641 = smul.addr %s3640, 8
          %s3642 = scalar_lea.vmem %s27, %s3641
        $region144: #{_lambda_.1} parent=135 // pred_fallthru
          _
      $region136: #{_lambda_.1} parent=5 // pred_fallthru
        _
    $region6: #{_lambda_.1} parent=1 // loop_footer
      %s41 = sadd.s32 1, %s37
    $region7: #{_lambda_.1} parent=1 // loop_footer_branch
      %36 = sbr.rel target = $region3
    $region8: #{_lambda_.1} parent=1 // loop_exit
      _
    %3643 = vsyncpa [#allocation3], 1
    %s3644 = scalar_lea.sflag [#allocation3], 1
    %3645 = vsyncpa %s3644, 1

</llo_original>
